<compile_context>
chip_gen: v7x
topology: tpu7x:2x2x1
jax: 0.10.0
libtpu: 0.0.40
codegen_flags: <defaults>
</compile_context>

<pallas_src>
import numpy as np
import jax
import jax.numpy as jnp
from jax.experimental import pallas as pl
from jax.experimental.pallas import tpu as pltpu

# ----------------------------- configuration -------------------------------
BATCH = 2
N_STATIONS = 16
IN_CHANNELS = 4
HISTORY_LEN = 8
HORIZON = 1
LAYERS = 3
CHANNELS = 16
EMB_DIM = 16
NODE_EMB_DIM = 20
KERNELS = (1, 3, 5, 7)
DIL = (1, 2, 4, 8)

NT = N_STATIONS * HISTORY_LEN          # 128 lanes per batch element
COLS = BATCH * NT                      # 256 total columns
N_SCALES = len(KERNELS)
IN_DIM = IN_CHANNELS + NODE_EMB_DIM    # 24
GATE_K = 128                           # zero-padded K of the fused gate matmul


def _scale_offsets(k, d):
    pad = (k - 1) * d // 2
    return [j * d - pad for j in range(k)]


# Union of temporal offsets reachable inside the T-long window; taps with
# |offset| >= T read only zero padding and contribute exactly zero.
EFFECTIVE_OFFSETS = sorted(
    {o for k, d in zip(KERNELS, DIL) for o in _scale_offsets(k, d)
     if abs(o) < HISTORY_LEN})
N_OFF = len(EFFECTIVE_OFFSETS)
assert N_OFF * CHANNELS <= GATE_K
assert 2 * N_SCALES * CHANNELS == 128


# ------------------------------ fused kernel --------------------------------
def fused_forward_kernel(
        x_ref, g_ref,
        inw_ref, inb_ref,
        gw_ref, gb_ref,
        cw_ref, cb_ref,
        spw_ref, spb_ref, e1w_ref, e1b_ref, pcw_ref, pcb_ref,
        hw_ref, hb_ref,
        o_ref):
    C, S, T, H = CHANNELS, N_SCALES, HISTORY_LEN, HORIZON
    ncols = x_ref.shape[1]               # 128 = one batch element (lane-dense)

    def mm(w, v):                        # bf16 MXU, f32 accumulate
        return jnp.dot(w, v, preferred_element_type=jnp.float32)

    # lane -> within-window time index (hoisted; reused by every tap mask)
    lane_t = jax.lax.broadcasted_iota(jnp.int32, (C, ncols), 1) & (T - 1)

    # 1x1 input projection
    x_b = x_ref[...].astype(jnp.bfloat16)
    h = mm(inw_ref[...], x_b) + inb_ref[...]                 # f32 (C, ncols)

    g_op = g_ref[...]                                        # bf16 (ncols, 2*ncols)
    pad_rows = jnp.zeros((GATE_K - N_OFF * C, ncols), jnp.bfloat16)

    skips = []
    for l in range(LAYERS):                                  # static unroll
        h_in = h
        # ---- multi-scale gated temporal conv: lane rolls + boundary masks.
        # tap_off[c, (n,t)] = h[c, (n, t+off)]  (0 where t+off leaves [0,T)).
        taps = []
        for off in EFFECTIVE_OFFSETS:
            if off == 0:
                taps.append(h)
            else:
                rolled = pltpu.roll(h, shift=(-off) % ncols, axis=1)
                valid = jnp.logical_and(lane_t + off >= 0, lane_t + off < T)
                taps.append(jnp.where(valid, rolled, 0.0))
        tap_mat = jnp.concatenate(taps, axis=0).astype(jnp.bfloat16)
        tap_mat = jnp.concatenate([tap_mat, pad_rows], axis=0)   # (GATE_K, ncols)
        # one (128,128)@(128,ncols) matmul covers all 4 scales x 2 gates
        pre = mm(gw_ref[l], tap_mat) + gb_ref[l]                 # f32 (2SC, ncols)
        gated = jnp.tanh(pre[:S * C, :]) * jax.nn.sigmoid(pre[S * C:, :])
        h_mid = (gated[0 * C:1 * C] + gated[1 * C:2 * C]
                 + gated[2 * C:3 * C] + gated[3 * C:4 * C]) * (1.0 / S)
        # ---- graph conv over [h, A h, A^2 h] with the skip 1x1 conv fused in
        h_mid_b = h_mid.astype(jnp.bfloat16)
        mixed = mm(h_mid_b, g_op)                                # f32 (C, 2*ncols)
        hg = jnp.concatenate(
            [h_mid_b,
             mixed[:, :ncols].astype(jnp.bfloat16),
             mixed[:, ncols:].astype(jnp.bfloat16)], axis=0)     # bf16 (3C, ncols)
        so = mm(cw_ref[l], hg) + cb_ref[l]                       # f32 (2C, ncols)
        skips.append(so[:C].astype(jnp.bfloat16))                # skip conv output
        h = so[C:] + h_in                                        # residual
        # TODO(synk): STBlock's internal feature dropout is identity at inference.

    skip_cat = jnp.concatenate(skips, axis=0)                    # bf16 (L*C, ncols)
    sp = jnp.maximum(mm(spw_ref[...], skip_cat) + spb_ref[...], 0.0)
    e1 = jnp.maximum(mm(e1w_ref[...], sp.astype(jnp.bfloat16)) + e1b_ref[...], 0.0)
    pc = mm(pcw_ref[...], e1.astype(jnp.bfloat16)) + pcb_ref[...]
    head = mm(hw_ref[...], pc.astype(jnp.bfloat16)) + hb_ref[...]   # (2H, ncols)
    # Fused LogNormal head: rows [0,H) are mu; rows [H,2H) get softplus -> sigma.
    o_ref[...] = jnp.concatenate([head[:H], jax.nn.softplus(head[H:])], axis=0)


def run_fused(x_flat, g_op, pk):
    operands = (
        x_flat, g_op,
        pk["in_w"], pk["in_b"],
        pk["gate_w"], pk["gate_b"],
        pk["comb_w"], pk["comb_b"],
        pk["sp_w"], pk["sp_b"],
        pk["e1_w"], pk["e1_b"],
        pk["pc_w"], pk["pc_b"],
        pk["head_w"], pk["head_b"],
    )

    def bcast_spec(shape):
        nd = len(shape)
        return pl.BlockSpec(shape, lambda b, _nd=nd: (0,) * _nd)

    in_specs = [
        pl.BlockSpec((IN_DIM, NT), lambda b: (0, b)),   # per-batch column block
        bcast_spec(g_op.shape),                         # per-batch graph operator
    ] + [bcast_spec(o.shape) for o in operands[2:]]

    return pl.pallas_call(
        fused_forward_kernel,
        out_shape=jax.ShapeDtypeStruct((2 * HORIZON, COLS), jnp.float32),
        grid=(BATCH,),
        in_specs=in_specs,
        out_specs=pl.BlockSpec((2 * HORIZON, NT), lambda b: (0, b)),
        compiler_params=pltpu.CompilerParams(
            dimension_semantics=("parallel",)),
    )(*operands)


# ------------------------------ parameters ----------------------------------
def init_params(key):
    keys = iter(jax.random.split(key, 64))

    def xavier(shape):
        fan_out = shape[0]
        fan_in = int(np.prod(shape[1:]))
        lim = float(np.sqrt(6.0 / (fan_in + fan_out)))
        return jax.random.uniform(next(keys), shape, jnp.float32, -lim, lim)

    p = {"node_emb": xavier((N_STATIONS, NODE_EMB_DIM)),
         "adj_e1": xavier((N_STATIONS, EMB_DIM)),
         "adj_e2": xavier((N_STATIONS, EMB_DIM)),
         "in_proj_w": xavier((CHANNELS, IN_DIM)),
         "in_proj_b": jnp.zeros((CHANNELS,), jnp.float32)}
    blocks = []
    for _ in range(LAYERS):
        blk = {"wf": [], "bf": [], "wg": [], "bg": []}
        for k in KERNELS:
            # torch Conv2d(C, C, (1, k)) weight layout: (C_out, C_in, k)
            blk["wf"].append(xavier((CHANNELS, CHANNELS, k)))
            blk["bf"].append(jnp.zeros((CHANNELS,), jnp.float32))
            blk["wg"].append(xavier((CHANNELS, CHANNELS, k)))
            blk["bg"].append(jnp.zeros((CHANNELS,), jnp.float32))
        blk["skip_w"] = xavier((CHANNELS, CHANNELS))
        blk["skip_b"] = jnp.zeros((CHANNELS,), jnp.float32)
        blk["gcn_w"] = xavier((CHANNELS, 3 * CHANNELS))   # mixes [h, A h, A^2 h]
        blk["gcn_b"] = jnp.zeros((CHANNELS,), jnp.float32)
        blocks.append(blk)
    p["blocks"] = blocks
    p["skip_proj_w"] = xavier((CHANNELS, LAYERS * CHANNELS))
    p["skip_proj_b"] = jnp.zeros((CHANNELS,), jnp.float32)
    p["end1_w"] = xavier((CHANNELS, CHANNELS))
    p["end1_b"] = jnp.zeros((CHANNELS,), jnp.float32)
    p["param_conv_w"] = xavier((CHANNELS, CHANNELS))
    p["param_conv_b"] = jnp.zeros((CHANNELS,), jnp.float32)
    p["mu_w"] = xavier((HORIZON, CHANNELS))
    p["mu_b"] = jnp.zeros((HORIZON,), jnp.float32)
    p["sigma_w"] = xavier((HORIZON, CHANNELS))
    p["sigma_b"] = jnp.zeros((HORIZON,), jnp.float32)
    return p


def pack_params(p):
    """One-time repack of torch-layout conv weights into kernel operands.

    Per block:
      * gate_w (128, 128): row blocks [tanh scale 0..3 | sigmoid scale 0..3],
        column blocks correspond to the union of effective temporal offsets
        (taps with |offset| >= T only read zero padding and are dropped);
        columns N_OFF*C..128 are zero padding for a perfectly tiled MXU K.
      * comb_w (2C, 3C): rows 0:C = [skip_w | 0 | 0], rows C:2C = gcn_w, so
        one matmul yields both the skip output and the graph-conv output.
    Weights are cast to bf16 (MXU inputs); biases stay f32 (accumulator adds).
    """
    C = CHANNELS
    bf = lambda a: jnp.asarray(a, jnp.bfloat16)
    col = lambda b: jnp.asarray(b, jnp.float32).reshape(-1, 1)
    oidx = {o: i for i, o in enumerate(EFFECTIVE_OFFSETS)}
    gate_w, gate_b, comb_w, comb_b = [], [], [], []
    for blk in p["blocks"]:
        wmat = jnp.zeros((2 * N_SCALES * C, GATE_K), jnp.float32)
        bvec = jnp.zeros((2 * N_SCALES * C, 1), jnp.float32)
        for s, (k, d) in enumerate(zip(KERNELS, DIL)):
            offs = _scale_offsets(k, d)
            for g, (wk, bk) in enumerate((("wf", "bf"), ("wg", "bg"))):
                r0 = (g * N_SCALES + s) * C
                bvec = bvec.at[r0:r0 + C, 0].set(blk[bk][s])
                for j, off in enumerate(offs):
                    if abs(off) >= HISTORY_LEN:
                        continue        # tap only ever reads zero padding
                    c0 = oidx[off] * C
                    wmat = wmat.at[r0:r0 + C, c0:c0 + C].set(blk[wk][s][:, :, j])
        gate_w.append(wmat)
        gate_b.append(bvec)
        cw = jnp.zeros((2 * C, 3 * C), jnp.float32)
        cw = cw.at[:C, :C].set(blk["skip_w"])
        cw = cw.at[C:, :].set(blk["gcn_w"])
        comb_w.append(cw)
        comb_b.append(jnp.concatenate([blk["skip_b"], blk["gcn_b"]]).reshape(2 * C, 1))
    return {
        "node_emb": p["node_emb"],
        "adj_e1": p["adj_e1"], "adj_e2": p["adj_e2"],
        "in_w": bf(p["in_proj_w"]), "in_b": col(p["in_proj_b"]),
        "gate_w": bf(jnp.stack(gate_w)), "gate_b": jnp.stack(gate_b),
        "comb_w": bf(jnp.stack(comb_w)), "comb_b": jnp.stack(comb_b),
        "sp_w": bf(p["skip_proj_w"]), "sp_b": col(p["skip_proj_b"]),
        "e1_w": bf(p["end1_w"]), "e1_b": col(p["end1_b"]),
        "pc_w": bf(p["param_conv_w"]), "pc_b": col(p["param_conv_b"]),
        "head_w": bf(jnp.concatenate([p["mu_w"], p["sigma_w"]], axis=0)),
        "head_b": jnp.concatenate([p["mu_b"], p["sigma_b"]]).reshape(-1, 1),
    }


# ------------------------------- forward ------------------------------------
def forward(packed, x):
    B, _, N, T = x.shape
    x = x.astype(jnp.float32)

    # --- entry layout transform (done once): NCHW -> flat (Cin+E, B*N*T) -----
    emb = jnp.broadcast_to(packed["node_emb"].T[None, :, :, None],
                           (B, NODE_EMB_DIM, N, T))
    # TODO(synk): HistoryDropout is a train-time regularizer -> identity here.
    x_aug = jnp.concatenate([x, emb], axis=1)
    x_flat = jnp.transpose(x_aug, (1, 0, 2, 3)).reshape(IN_DIM, B * N * T)

    # --- LearnableAdjacency: A = softmax(relu(E1 E2^T), dim=1), in f32 -------
    logits = jnp.maximum(packed["adj_e1"] @ packed["adj_e2"].T, 0.0)
    A = jax.nn.softmax(logits, axis=1)
    # TODO(synk): edge dropout on A is train-time-only -> skipped.
    # Per-batch graph operator [kron(A^T, I_T) | kron((A@A)^T, I_T)]; the full
    # operator is kron(I_B, .) so only the (N*T, 2*N*T) block is needed.
    eye_t = jnp.eye(HISTORY_LEN, dtype=jnp.float32)
    g_op = jnp.concatenate(
        [jnp.kron(A.T, eye_t), jnp.kron((A @ A).T, eye_t)],
        axis=1).astype(jnp.bfloat16)

    out = run_fused(x_flat, g_op, packed)            # (2H, B*N*T) f32

    # --- exit layout transform: (2H, B*N*T) -> (B, N, T, H) mu / sigma -------
    out4 = out.reshape(2 * HORIZON, B, N, T)
    mu = jnp.transpose(out4[:HORIZON], (1, 2, 3, 0))
    sigma = jnp.transpose(out4[HORIZON:], (1, 2, 3, 0))
    # TODO(synk): torch.distributions.LogNormal has no JAX analogue here; the
    # distribution parameters (mu, sigma) are returned instead.
    return mu, sigma


# --------------------------------- main --------------------------------------
if __name__ == "__main__":
    key = jax.random.PRNGKey(0)
    pkey, xkey = jax.random.split(key)
    params = init_params(pkey)
    packed = pack_params(params)          # one-time repack, outside the hot path
    x = jax.random.normal(xkey, (BATCH, IN_CHANNELS, N_STATIONS, HISTORY_LEN),
                          jnp.float32)
    fwd = jax.jit(forward)
    mu, sigma = fwd(packed, x)
    jax.block_until_ready((mu, sigma))
    assert mu.shape == (BATCH, N_STATIONS, HISTORY_LEN, HORIZON)
    assert sigma.shape == (BATCH, N_STATIONS, HISTORY_LEN, HORIZON)
    assert bool(jnp.all(jnp.isfinite(mu))) and bool(jnp.all(sigma > 0))
    print("KERNEL_OK")
</pallas_src>

<mosaic_0001>
module attributes {stable_mosaic.version = 11 : i64} {
  func.func @fused_forward_kernel(%arg0: i32, %arg1: memref<24x128xf32, #tpu.memory_space<vmem>>, %arg2: memref<128x256xbf16, #tpu.memory_space<vmem>>, %arg3: memref<16x24xbf16, #tpu.memory_space<vmem>>, %arg4: memref<16x1xf32, #tpu.memory_space<vmem>>, %arg5: memref<3x128x128xbf16, #tpu.memory_space<vmem>>, %arg6: memref<3x128x1xf32, #tpu.memory_space<vmem>>, %arg7: memref<3x32x48xbf16, #tpu.memory_space<vmem>>, %arg8: memref<3x32x1xf32, #tpu.memory_space<vmem>>, %arg9: memref<16x48xbf16, #tpu.memory_space<vmem>>, %arg10: memref<16x1xf32, #tpu.memory_space<vmem>>, %arg11: memref<16x16xbf16, #tpu.memory_space<vmem>>, %arg12: memref<16x1xf32, #tpu.memory_space<vmem>>, %arg13: memref<16x16xbf16, #tpu.memory_space<vmem>>, %arg14: memref<16x1xf32, #tpu.memory_space<vmem>>, %arg15: memref<2x16xbf16, #tpu.memory_space<vmem>>, %arg16: memref<2x1xf32, #tpu.memory_space<vmem>>, %arg17: memref<2x128xf32, #tpu.memory_space<vmem>>) attributes {dimension_semantics = [#tpu.dimension_semantics<parallel>], iteration_bounds = array<i64: 2>, scalar_prefetch = 0 : i64, scratch_operands = 0 : i64, tpu.core_type = #tpu.core_type<tc>, window_params = [{transform_indices = @transform_0, window_bounds = array<i64: 24, 128>}, {pipeline_mode = #tpu.pipeline_mode<synchronous>, transform_indices = @transform_1, window_bounds = array<i64: 128, 256>}, {pipeline_mode = #tpu.pipeline_mode<synchronous>, transform_indices = @transform_2, window_bounds = array<i64: 16, 24>}, {pipeline_mode = #tpu.pipeline_mode<synchronous>, transform_indices = @transform_3, window_bounds = array<i64: 16, 1>}, {pipeline_mode = #tpu.pipeline_mode<synchronous>, transform_indices = @transform_4, window_bounds = array<i64: 3, 128, 128>}, {pipeline_mode = #tpu.pipeline_mode<synchronous>, transform_indices = @transform_5, window_bounds = array<i64: 3, 128, 1>}, {pipeline_mode = #tpu.pipeline_mode<synchronous>, transform_indices = @transform_6, window_bounds = array<i64: 3, 32, 48>}, {pipeline_mode = #tpu.pipeline_mode<synchronous>, transform_indices = @transform_7, window_bounds = array<i64: 3, 32, 1>}, {pipeline_mode = #tpu.pipeline_mode<synchronous>, transform_indices = @transform_8, window_bounds = array<i64: 16, 48>}, {pipeline_mode = #tpu.pipeline_mode<synchronous>, transform_indices = @transform_9, window_bounds = array<i64: 16, 1>}, {pipeline_mode = #tpu.pipeline_mode<synchronous>, transform_indices = @transform_10, window_bounds = array<i64: 16, 16>}, {pipeline_mode = #tpu.pipeline_mode<synchronous>, transform_indices = @transform_11, window_bounds = array<i64: 16, 1>}, {pipeline_mode = #tpu.pipeline_mode<synchronous>, transform_indices = @transform_12, window_bounds = array<i64: 16, 16>}, {pipeline_mode = #tpu.pipeline_mode<synchronous>, transform_indices = @transform_13, window_bounds = array<i64: 16, 1>}, {pipeline_mode = #tpu.pipeline_mode<synchronous>, transform_indices = @transform_14, window_bounds = array<i64: 2, 16>}, {pipeline_mode = #tpu.pipeline_mode<synchronous>, transform_indices = @transform_15, window_bounds = array<i64: 2, 1>}, {transform_indices = @transform_16, window_bounds = array<i64: 2, 128>}]} {
    %0 = tpu.iota {dimensions = array<i32: 1>} : vector<16x128xi32>
    %c7_i32 = arith.constant 7 : i32
    %1 = vector.broadcast %c7_i32 : i32 to vector<16x128xi32>
    %2 = arith.andi %0, %1 : vector<16x128xi32>
    %c0 = arith.constant 0 : index
    %c0_0 = arith.constant 0 : index
    %3 = vector.load %arg1[%c0, %c0_0] : memref<24x128xf32, #tpu.memory_space<vmem>>, vector<24x128xf32>
    %4 = arith.truncf %3 : vector<24x128xf32> to vector<24x128xbf16>
    %c0_1 = arith.constant 0 : index
    %c0_2 = arith.constant 0 : index
    %5 = vector.load %arg3[%c0_1, %c0_2] : memref<16x24xbf16, #tpu.memory_space<vmem>>, vector<16x24xbf16>
    %cst = arith.constant dense<0.000000e+00> : vector<16x128xf32>
    %6 = tpu.matmul %5, %4, %cst {dimension_numbers = #tpu.dot_dimension_numbers<[1], [0], [0], [1], [0, 0, 1, 1], [], []>} : vector<16x24xbf16>, vector<24x128xbf16>, vector<16x128xf32> -> vector<16x128xf32>
    %c0_3 = arith.constant 0 : index
    %c0_4 = arith.constant 0 : index
    %7 = vector.load %arg4[%c0_3, %c0_4] : memref<16x1xf32, #tpu.memory_space<vmem>>, vector<16x1xf32>
    %8 = vector.broadcast %7 : vector<16x1xf32> to vector<16x128xf32>
    %9 = arith.addf %6, %8 : vector<16x128xf32>
    %c0_5 = arith.constant 0 : index
    %c0_6 = arith.constant 0 : index
    %10 = vector.load %arg2[%c0_5, %c0_6] : memref<128x256xbf16, #tpu.memory_space<vmem>>, vector<128x256xbf16>
    %cst_7 = arith.constant 0.000000e+00 : bf16
    %11 = vector.broadcast %cst_7 : bf16 to vector<48x128xbf16>
    %c4_i32 = arith.constant 4 : i32
    %12 = tpu.dynamic_rotate %9 by %c4_i32 dim 1 : vector<16x128xf32>, i32 -> vector<16x128xf32>
    %c-4_i32 = arith.constant -4 : i32
    %13 = vector.broadcast %c-4_i32 : i32 to vector<16x128xi32>
    %14 = arith.addi %2, %13 : vector<16x128xi32>
    %c0_i32 = arith.constant 0 : i32
    %15 = vector.broadcast %c0_i32 : i32 to vector<16x128xi32>
    %16 = arith.cmpi sge, %14, %15 : vector<16x128xi32>
    %c-4_i32_8 = arith.constant -4 : i32
    %17 = vector.broadcast %c-4_i32_8 : i32 to vector<16x128xi32>
    %18 = arith.addi %2, %17 : vector<16x128xi32>
    %c8_i32 = arith.constant 8 : i32
    %19 = vector.broadcast %c8_i32 : i32 to vector<16x128xi32>
    %20 = arith.cmpi slt, %18, %19 : vector<16x128xi32>
    %21 = arith.andi %16, %20 : vector<16x128xi1>
    %cst_9 = arith.constant 0.000000e+00 : f32
    %22 = vector.broadcast %cst_9 : f32 to vector<16x128xf32>
    %23 = arith.select %21, %12, %22 : vector<16x128xi1>, vector<16x128xf32>
    %c2_i32 = arith.constant 2 : i32
    %24 = tpu.dynamic_rotate %9 by %c2_i32 dim 1 : vector<16x128xf32>, i32 -> vector<16x128xf32>
    %c-2_i32 = arith.constant -2 : i32
    %25 = vector.broadcast %c-2_i32 : i32 to vector<16x128xi32>
    %26 = arith.addi %2, %25 : vector<16x128xi32>
    %c0_i32_10 = arith.constant 0 : i32
    %27 = vector.broadcast %c0_i32_10 : i32 to vector<16x128xi32>
    %28 = arith.cmpi sge, %26, %27 : vector<16x128xi32>
    %c-2_i32_11 = arith.constant -2 : i32
    %29 = vector.broadcast %c-2_i32_11 : i32 to vector<16x128xi32>
    %30 = arith.addi %2, %29 : vector<16x128xi32>
    %c8_i32_12 = arith.constant 8 : i32
    %31 = vector.broadcast %c8_i32_12 : i32 to vector<16x128xi32>
    %32 = arith.cmpi slt, %30, %31 : vector<16x128xi32>
    %33 = arith.andi %28, %32 : vector<16x128xi1>
    %cst_13 = arith.constant 0.000000e+00 : f32
    %34 = vector.broadcast %cst_13 : f32 to vector<16x128xf32>
    %35 = arith.select %33, %24, %34 : vector<16x128xi1>, vector<16x128xf32>
    %c126_i32 = arith.constant 126 : i32
    %36 = tpu.dynamic_rotate %9 by %c126_i32 dim 1 : vector<16x128xf32>, i32 -> vector<16x128xf32>
    %c2_i32_14 = arith.constant 2 : i32
    %37 = vector.broadcast %c2_i32_14 : i32 to vector<16x128xi32>
    %38 = arith.addi %2, %37 : vector<16x128xi32>
    %c0_i32_15 = arith.constant 0 : i32
    %39 = vector.broadcast %c0_i32_15 : i32 to vector<16x128xi32>
    %40 = arith.cmpi sge, %38, %39 : vector<16x128xi32>
    %c2_i32_16 = arith.constant 2 : i32
    %41 = vector.broadcast %c2_i32_16 : i32 to vector<16x128xi32>
    %42 = arith.addi %2, %41 : vector<16x128xi32>
    %c8_i32_17 = arith.constant 8 : i32
    %43 = vector.broadcast %c8_i32_17 : i32 to vector<16x128xi32>
    %44 = arith.cmpi slt, %42, %43 : vector<16x128xi32>
    %45 = arith.andi %40, %44 : vector<16x128xi1>
    %cst_18 = arith.constant 0.000000e+00 : f32
    %46 = vector.broadcast %cst_18 : f32 to vector<16x128xf32>
    %47 = arith.select %45, %36, %46 : vector<16x128xi1>, vector<16x128xf32>
    %c124_i32 = arith.constant 124 : i32
    %48 = tpu.dynamic_rotate %9 by %c124_i32 dim 1 : vector<16x128xf32>, i32 -> vector<16x128xf32>
    %c4_i32_19 = arith.constant 4 : i32
    %49 = vector.broadcast %c4_i32_19 : i32 to vector<16x128xi32>
    %50 = arith.addi %2, %49 : vector<16x128xi32>
    %c0_i32_20 = arith.constant 0 : i32
    %51 = vector.broadcast %c0_i32_20 : i32 to vector<16x128xi32>
    %52 = arith.cmpi sge, %50, %51 : vector<16x128xi32>
    %c4_i32_21 = arith.constant 4 : i32
    %53 = vector.broadcast %c4_i32_21 : i32 to vector<16x128xi32>
    %54 = arith.addi %2, %53 : vector<16x128xi32>
    %c8_i32_22 = arith.constant 8 : i32
    %55 = vector.broadcast %c8_i32_22 : i32 to vector<16x128xi32>
    %56 = arith.cmpi slt, %54, %55 : vector<16x128xi32>
    %57 = arith.andi %52, %56 : vector<16x128xi1>
    %cst_23 = arith.constant 0.000000e+00 : f32
    %58 = vector.broadcast %cst_23 : f32 to vector<16x128xf32>
    %59 = arith.select %57, %48, %58 : vector<16x128xi1>, vector<16x128xf32>
    %60 = tpu.concatenate %23, %35, %9, %47, %59 in 0 : vector<16x128xf32>, vector<16x128xf32>, vector<16x128xf32>, vector<16x128xf32>, vector<16x128xf32> -> vector<80x128xf32>
    %61 = arith.truncf %60 : vector<80x128xf32> to vector<80x128xbf16>
    %62 = tpu.concatenate %61, %11 in 0 : vector<80x128xbf16>, vector<48x128xbf16> -> vector<128x128xbf16>
    %c0_24 = arith.constant 0 : index
    %c0_25 = arith.constant 0 : index
    %c0_26 = arith.constant 0 : index
    %63 = vector.load %arg5[%c0_24, %c0_25, %c0_26] : memref<3x128x128xbf16, #tpu.memory_space<vmem>>, vector<1x128x128xbf16>
    %64 = vector.shape_cast %63 : vector<1x128x128xbf16> to vector<128x128xbf16>
    %cst_27 = arith.constant dense<0.000000e+00> : vector<128x128xf32>
    %65 = tpu.matmul %64, %62, %cst_27 {dimension_numbers = #tpu.dot_dimension_numbers<[1], [0], [0], [1], [0, 0, 1, 1], [], []>} : vector<128x128xbf16>, vector<128x128xbf16>, vector<128x128xf32> -> vector<128x128xf32>
    %c0_28 = arith.constant 0 : index
    %c0_29 = arith.constant 0 : index
    %c0_30 = arith.constant 0 : index
    %66 = vector.load %arg6[%c0_28, %c0_29, %c0_30] : memref<3x128x1xf32, #tpu.memory_space<vmem>>, vector<1x128x1xf32>
    %67 = vector.shape_cast %66 : vector<1x128x1xf32> to vector<128x1xf32>
    %68 = vector.broadcast %67 : vector<128x1xf32> to vector<128x128xf32>
    %69 = arith.addf %65, %68 : vector<128x128xf32>
    %70 = vector.extract_strided_slice %69 {offsets = [0, 0], sizes = [64, 128], strides = [1, 1]} : vector<128x128xf32> to vector<64x128xf32>
    %71 = math.tanh %70 : vector<64x128xf32>
    %72 = vector.extract_strided_slice %69 {offsets = [64, 0], sizes = [64, 128], strides = [1, 1]} : vector<128x128xf32> to vector<64x128xf32>
    %73 = arith.negf %72 : vector<64x128xf32>
    %74 = math.exp %73 : vector<64x128xf32>
    %cst_31 = arith.constant 1.000000e+00 : f32
    %75 = vector.broadcast %cst_31 : f32 to vector<64x128xf32>
    %76 = arith.addf %75, %74 : vector<64x128xf32>
    %77 = arith.divf %75, %76 : vector<64x128xf32>
    %78 = arith.mulf %71, %77 : vector<64x128xf32>
    %79 = vector.extract_strided_slice %78 {offsets = [0, 0], sizes = [16, 128], strides = [1, 1]} : vector<64x128xf32> to vector<16x128xf32>
    %80 = vector.extract_strided_slice %78 {offsets = [16, 0], sizes = [16, 128], strides = [1, 1]} : vector<64x128xf32> to vector<16x128xf32>
    %81 = arith.addf %79, %80 : vector<16x128xf32>
    %82 = vector.extract_strided_slice %78 {offsets = [32, 0], sizes = [16, 128], strides = [1, 1]} : vector<64x128xf32> to vector<16x128xf32>
    %83 = arith.addf %81, %82 : vector<16x128xf32>
    %84 = vector.extract_strided_slice %78 {offsets = [48, 0], sizes = [16, 128], strides = [1, 1]} : vector<64x128xf32> to vector<16x128xf32>
    %85 = arith.addf %83, %84 : vector<16x128xf32>
    %cst_32 = arith.constant 2.500000e-01 : f32
    %86 = vector.broadcast %cst_32 : f32 to vector<16x128xf32>
    %87 = arith.mulf %85, %86 : vector<16x128xf32>
    %88 = arith.truncf %87 : vector<16x128xf32> to vector<16x128xbf16>
    %cst_33 = arith.constant dense<0.000000e+00> : vector<16x256xf32>
    %89 = tpu.matmul %88, %10, %cst_33 {dimension_numbers = #tpu.dot_dimension_numbers<[1], [0], [0], [1], [0, 0, 1, 1], [], []>} : vector<16x128xbf16>, vector<128x256xbf16>, vector<16x256xf32> -> vector<16x256xf32>
    %90 = vector.extract_strided_slice %89 {offsets = [0, 0], sizes = [16, 128], strides = [1, 1]} : vector<16x256xf32> to vector<16x128xf32>
    %91 = arith.truncf %90 : vector<16x128xf32> to vector<16x128xbf16>
    %92 = vector.extract_strided_slice %89 {offsets = [0, 128], sizes = [16, 128], strides = [1, 1]} : vector<16x256xf32> to vector<16x128xf32>
    %93 = arith.truncf %92 : vector<16x128xf32> to vector<16x128xbf16>
    %94 = tpu.concatenate %88, %91, %93 in 0 : vector<16x128xbf16>, vector<16x128xbf16>, vector<16x128xbf16> -> vector<48x128xbf16>
    %c0_34 = arith.constant 0 : index
    %c0_35 = arith.constant 0 : index
    %c0_36 = arith.constant 0 : index
    %95 = vector.load %arg7[%c0_34, %c0_35, %c0_36] : memref<3x32x48xbf16, #tpu.memory_space<vmem>>, vector<1x32x48xbf16>
    %96 = vector.shape_cast %95 : vector<1x32x48xbf16> to vector<32x48xbf16>
    %cst_37 = arith.constant dense<0.000000e+00> : vector<32x128xf32>
    %97 = tpu.matmul %96, %94, %cst_37 {dimension_numbers = #tpu.dot_dimension_numbers<[1], [0], [0], [1], [0, 0, 1, 1], [], []>} : vector<32x48xbf16>, vector<48x128xbf16>, vector<32x128xf32> -> vector<32x128xf32>
    %c0_38 = arith.constant 0 : index
    %c0_39 = arith.constant 0 : index
    %c0_40 = arith.constant 0 : index
    %98 = vector.load %arg8[%c0_38, %c0_39, %c0_40] : memref<3x32x1xf32, #tpu.memory_space<vmem>>, vector<1x32x1xf32>
    %99 = vector.shape_cast %98 : vector<1x32x1xf32> to vector<32x1xf32>
    %100 = vector.broadcast %99 : vector<32x1xf32> to vector<32x128xf32>
    %101 = arith.addf %97, %100 : vector<32x128xf32>
    %102 = vector.extract_strided_slice %101 {offsets = [0, 0], sizes = [16, 128], strides = [1, 1]} : vector<32x128xf32> to vector<16x128xf32>
    %103 = arith.truncf %102 : vector<16x128xf32> to vector<16x128xbf16>
    %104 = vector.extract_strided_slice %101 {offsets = [16, 0], sizes = [16, 128], strides = [1, 1]} : vector<32x128xf32> to vector<16x128xf32>
    %105 = arith.addf %104, %9 : vector<16x128xf32>
    %c4_i32_41 = arith.constant 4 : i32
    %106 = tpu.dynamic_rotate %105 by %c4_i32_41 dim 1 : vector<16x128xf32>, i32 -> vector<16x128xf32>
    %c-4_i32_42 = arith.constant -4 : i32
    %107 = vector.broadcast %c-4_i32_42 : i32 to vector<16x128xi32>
    %108 = arith.addi %2, %107 : vector<16x128xi32>
    %c0_i32_43 = arith.constant 0 : i32
    %109 = vector.broadcast %c0_i32_43 : i32 to vector<16x128xi32>
    %110 = arith.cmpi sge, %108, %109 : vector<16x128xi32>
    %c-4_i32_44 = arith.constant -4 : i32
    %111 = vector.broadcast %c-4_i32_44 : i32 to vector<16x128xi32>
    %112 = arith.addi %2, %111 : vector<16x128xi32>
    %c8_i32_45 = arith.constant 8 : i32
    %113 = vector.broadcast %c8_i32_45 : i32 to vector<16x128xi32>
    %114 = arith.cmpi slt, %112, %113 : vector<16x128xi32>
    %115 = arith.andi %110, %114 : vector<16x128xi1>
    %cst_46 = arith.constant 0.000000e+00 : f32
    %116 = vector.broadcast %cst_46 : f32 to vector<16x128xf32>
    %117 = arith.select %115, %106, %116 : vector<16x128xi1>, vector<16x128xf32>
    %c2_i32_47 = arith.constant 2 : i32
    %118 = tpu.dynamic_rotate %105 by %c2_i32_47 dim 1 : vector<16x128xf32>, i32 -> vector<16x128xf32>
    %c-2_i32_48 = arith.constant -2 : i32
    %119 = vector.broadcast %c-2_i32_48 : i32 to vector<16x128xi32>
    %120 = arith.addi %2, %119 : vector<16x128xi32>
    %c0_i32_49 = arith.constant 0 : i32
    %121 = vector.broadcast %c0_i32_49 : i32 to vector<16x128xi32>
    %122 = arith.cmpi sge, %120, %121 : vector<16x128xi32>
    %c-2_i32_50 = arith.constant -2 : i32
    %123 = vector.broadcast %c-2_i32_50 : i32 to vector<16x128xi32>
    %124 = arith.addi %2, %123 : vector<16x128xi32>
    %c8_i32_51 = arith.constant 8 : i32
    %125 = vector.broadcast %c8_i32_51 : i32 to vector<16x128xi32>
    %126 = arith.cmpi slt, %124, %125 : vector<16x128xi32>
    %127 = arith.andi %122, %126 : vector<16x128xi1>
    %cst_52 = arith.constant 0.000000e+00 : f32
    %128 = vector.broadcast %cst_52 : f32 to vector<16x128xf32>
    %129 = arith.select %127, %118, %128 : vector<16x128xi1>, vector<16x128xf32>
    %c126_i32_53 = arith.constant 126 : i32
    %130 = tpu.dynamic_rotate %105 by %c126_i32_53 dim 1 : vector<16x128xf32>, i32 -> vector<16x128xf32>
    %c2_i32_54 = arith.constant 2 : i32
    %131 = vector.broadcast %c2_i32_54 : i32 to vector<16x128xi32>
    %132 = arith.addi %2, %131 : vector<16x128xi32>
    %c0_i32_55 = arith.constant 0 : i32
    %133 = vector.broadcast %c0_i32_55 : i32 to vector<16x128xi32>
    %134 = arith.cmpi sge, %132, %133 : vector<16x128xi32>
    %c2_i32_56 = arith.constant 2 : i32
    %135 = vector.broadcast %c2_i32_56 : i32 to vector<16x128xi32>
    %136 = arith.addi %2, %135 : vector<16x128xi32>
    %c8_i32_57 = arith.constant 8 : i32
    %137 = vector.broadcast %c8_i32_57 : i32 to vector<16x128xi32>
    %138 = arith.cmpi slt, %136, %137 : vector<16x128xi32>
    %139 = arith.andi %134, %138 : vector<16x128xi1>
    %cst_58 = arith.constant 0.000000e+00 : f32
    %140 = vector.broadcast %cst_58 : f32 to vector<16x128xf32>
    %141 = arith.select %139, %130, %140 : vector<16x128xi1>, vector<16x128xf32>
    %c124_i32_59 = arith.constant 124 : i32
    %142 = tpu.dynamic_rotate %105 by %c124_i32_59 dim 1 : vector<16x128xf32>, i32 -> vector<16x128xf32>
    %c4_i32_60 = arith.constant 4 : i32
    %143 = vector.broadcast %c4_i32_60 : i32 to vector<16x128xi32>
    %144 = arith.addi %2, %143 : vector<16x128xi32>
    %c0_i32_61 = arith.constant 0 : i32
    %145 = vector.broadcast %c0_i32_61 : i32 to vector<16x128xi32>
    %146 = arith.cmpi sge, %144, %145 : vector<16x128xi32>
    %c4_i32_62 = arith.constant 4 : i32
    %147 = vector.broadcast %c4_i32_62 : i32 to vector<16x128xi32>
    %148 = arith.addi %2, %147 : vector<16x128xi32>
    %c8_i32_63 = arith.constant 8 : i32
    %149 = vector.broadcast %c8_i32_63 : i32 to vector<16x128xi32>
    %150 = arith.cmpi slt, %148, %149 : vector<16x128xi32>
    %151 = arith.andi %146, %150 : vector<16x128xi1>
    %cst_64 = arith.constant 0.000000e+00 : f32
    %152 = vector.broadcast %cst_64 : f32 to vector<16x128xf32>
    %153 = arith.select %151, %142, %152 : vector<16x128xi1>, vector<16x128xf32>
    %154 = tpu.concatenate %117, %129, %105, %141, %153 in 0 : vector<16x128xf32>, vector<16x128xf32>, vector<16x128xf32>, vector<16x128xf32>, vector<16x128xf32> -> vector<80x128xf32>
    %155 = arith.truncf %154 : vector<80x128xf32> to vector<80x128xbf16>
    %156 = tpu.concatenate %155, %11 in 0 : vector<80x128xbf16>, vector<48x128xbf16> -> vector<128x128xbf16>
    %c1 = arith.constant 1 : index
    %c0_65 = arith.constant 0 : index
    %c0_66 = arith.constant 0 : index
    %157 = vector.load %arg5[%c1, %c0_65, %c0_66] : memref<3x128x128xbf16, #tpu.memory_space<vmem>>, vector<1x128x128xbf16>
    %158 = vector.shape_cast %157 : vector<1x128x128xbf16> to vector<128x128xbf16>
    %cst_67 = arith.constant dense<0.000000e+00> : vector<128x128xf32>
    %159 = tpu.matmul %158, %156, %cst_67 {dimension_numbers = #tpu.dot_dimension_numbers<[1], [0], [0], [1], [0, 0, 1, 1], [], []>} : vector<128x128xbf16>, vector<128x128xbf16>, vector<128x128xf32> -> vector<128x128xf32>
    %c1_68 = arith.constant 1 : index
    %c0_69 = arith.constant 0 : index
    %c0_70 = arith.constant 0 : index
    %160 = vector.load %arg6[%c1_68, %c0_69, %c0_70] : memref<3x128x1xf32, #tpu.memory_space<vmem>>, vector<1x128x1xf32>
    %161 = vector.shape_cast %160 : vector<1x128x1xf32> to vector<128x1xf32>
    %162 = vector.broadcast %161 : vector<128x1xf32> to vector<128x128xf32>
    %163 = arith.addf %159, %162 : vector<128x128xf32>
    %164 = vector.extract_strided_slice %163 {offsets = [0, 0], sizes = [64, 128], strides = [1, 1]} : vector<128x128xf32> to vector<64x128xf32>
    %165 = math.tanh %164 : vector<64x128xf32>
    %166 = vector.extract_strided_slice %163 {offsets = [64, 0], sizes = [64, 128], strides = [1, 1]} : vector<128x128xf32> to vector<64x128xf32>
    %167 = arith.negf %166 : vector<64x128xf32>
    %168 = math.exp %167 : vector<64x128xf32>
    %cst_71 = arith.constant 1.000000e+00 : f32
    %169 = vector.broadcast %cst_71 : f32 to vector<64x128xf32>
    %170 = arith.addf %169, %168 : vector<64x128xf32>
    %171 = arith.divf %169, %170 : vector<64x128xf32>
    %172 = arith.mulf %165, %171 : vector<64x128xf32>
    %173 = vector.extract_strided_slice %172 {offsets = [0, 0], sizes = [16, 128], strides = [1, 1]} : vector<64x128xf32> to vector<16x128xf32>
    %174 = vector.extract_strided_slice %172 {offsets = [16, 0], sizes = [16, 128], strides = [1, 1]} : vector<64x128xf32> to vector<16x128xf32>
    %175 = arith.addf %173, %174 : vector<16x128xf32>
    %176 = vector.extract_strided_slice %172 {offsets = [32, 0], sizes = [16, 128], strides = [1, 1]} : vector<64x128xf32> to vector<16x128xf32>
    %177 = arith.addf %175, %176 : vector<16x128xf32>
    %178 = vector.extract_strided_slice %172 {offsets = [48, 0], sizes = [16, 128], strides = [1, 1]} : vector<64x128xf32> to vector<16x128xf32>
    %179 = arith.addf %177, %178 : vector<16x128xf32>
    %cst_72 = arith.constant 2.500000e-01 : f32
    %180 = vector.broadcast %cst_72 : f32 to vector<16x128xf32>
    %181 = arith.mulf %179, %180 : vector<16x128xf32>
    %182 = arith.truncf %181 : vector<16x128xf32> to vector<16x128xbf16>
    %cst_73 = arith.constant dense<0.000000e+00> : vector<16x256xf32>
    %183 = tpu.matmul %182, %10, %cst_73 {dimension_numbers = #tpu.dot_dimension_numbers<[1], [0], [0], [1], [0, 0, 1, 1], [], []>} : vector<16x128xbf16>, vector<128x256xbf16>, vector<16x256xf32> -> vector<16x256xf32>
    %184 = vector.extract_strided_slice %183 {offsets = [0, 0], sizes = [16, 128], strides = [1, 1]} : vector<16x256xf32> to vector<16x128xf32>
    %185 = arith.truncf %184 : vector<16x128xf32> to vector<16x128xbf16>
    %186 = vector.extract_strided_slice %183 {offsets = [0, 128], sizes = [16, 128], strides = [1, 1]} : vector<16x256xf32> to vector<16x128xf32>
    %187 = arith.truncf %186 : vector<16x128xf32> to vector<16x128xbf16>
    %188 = tpu.concatenate %182, %185, %187 in 0 : vector<16x128xbf16>, vector<16x128xbf16>, vector<16x128xbf16> -> vector<48x128xbf16>
    %c1_74 = arith.constant 1 : index
    %c0_75 = arith.constant 0 : index
    %c0_76 = arith.constant 0 : index
    %189 = vector.load %arg7[%c1_74, %c0_75, %c0_76] : memref<3x32x48xbf16, #tpu.memory_space<vmem>>, vector<1x32x48xbf16>
    %190 = vector.shape_cast %189 : vector<1x32x48xbf16> to vector<32x48xbf16>
    %cst_77 = arith.constant dense<0.000000e+00> : vector<32x128xf32>
    %191 = tpu.matmul %190, %188, %cst_77 {dimension_numbers = #tpu.dot_dimension_numbers<[1], [0], [0], [1], [0, 0, 1, 1], [], []>} : vector<32x48xbf16>, vector<48x128xbf16>, vector<32x128xf32> -> vector<32x128xf32>
    %c1_78 = arith.constant 1 : index
    %c0_79 = arith.constant 0 : index
    %c0_80 = arith.constant 0 : index
    %192 = vector.load %arg8[%c1_78, %c0_79, %c0_80] : memref<3x32x1xf32, #tpu.memory_space<vmem>>, vector<1x32x1xf32>
    %193 = vector.shape_cast %192 : vector<1x32x1xf32> to vector<32x1xf32>
    %194 = vector.broadcast %193 : vector<32x1xf32> to vector<32x128xf32>
    %195 = arith.addf %191, %194 : vector<32x128xf32>
    %196 = vector.extract_strided_slice %195 {offsets = [0, 0], sizes = [16, 128], strides = [1, 1]} : vector<32x128xf32> to vector<16x128xf32>
    %197 = arith.truncf %196 : vector<16x128xf32> to vector<16x128xbf16>
    %198 = vector.extract_strided_slice %195 {offsets = [16, 0], sizes = [16, 128], strides = [1, 1]} : vector<32x128xf32> to vector<16x128xf32>
    %199 = arith.addf %198, %105 : vector<16x128xf32>
    %c4_i32_81 = arith.constant 4 : i32
    %200 = tpu.dynamic_rotate %199 by %c4_i32_81 dim 1 : vector<16x128xf32>, i32 -> vector<16x128xf32>
    %c-4_i32_82 = arith.constant -4 : i32
    %201 = vector.broadcast %c-4_i32_82 : i32 to vector<16x128xi32>
    %202 = arith.addi %2, %201 : vector<16x128xi32>
    %c0_i32_83 = arith.constant 0 : i32
    %203 = vector.broadcast %c0_i32_83 : i32 to vector<16x128xi32>
    %204 = arith.cmpi sge, %202, %203 : vector<16x128xi32>
    %c-4_i32_84 = arith.constant -4 : i32
    %205 = vector.broadcast %c-4_i32_84 : i32 to vector<16x128xi32>
    %206 = arith.addi %2, %205 : vector<16x128xi32>
    %c8_i32_85 = arith.constant 8 : i32
    %207 = vector.broadcast %c8_i32_85 : i32 to vector<16x128xi32>
    %208 = arith.cmpi slt, %206, %207 : vector<16x128xi32>
    %209 = arith.andi %204, %208 : vector<16x128xi1>
    %cst_86 = arith.constant 0.000000e+00 : f32
    %210 = vector.broadcast %cst_86 : f32 to vector<16x128xf32>
    %211 = arith.select %209, %200, %210 : vector<16x128xi1>, vector<16x128xf32>
    %c2_i32_87 = arith.constant 2 : i32
    %212 = tpu.dynamic_rotate %199 by %c2_i32_87 dim 1 : vector<16x128xf32>, i32 -> vector<16x128xf32>
    %c-2_i32_88 = arith.constant -2 : i32
    %213 = vector.broadcast %c-2_i32_88 : i32 to vector<16x128xi32>
    %214 = arith.addi %2, %213 : vector<16x128xi32>
    %c0_i32_89 = arith.constant 0 : i32
    %215 = vector.broadcast %c0_i32_89 : i32 to vector<16x128xi32>
    %216 = arith.cmpi sge, %214, %215 : vector<16x128xi32>
    %c-2_i32_90 = arith.constant -2 : i32
    %217 = vector.broadcast %c-2_i32_90 : i32 to vector<16x128xi32>
    %218 = arith.addi %2, %217 : vector<16x128xi32>
    %c8_i32_91 = arith.constant 8 : i32
    %219 = vector.broadcast %c8_i32_91 : i32 to vector<16x128xi32>
    %220 = arith.cmpi slt, %218, %219 : vector<16x128xi32>
    %221 = arith.andi %216, %220 : vector<16x128xi1>
    %cst_92 = arith.constant 0.000000e+00 : f32
    %222 = vector.broadcast %cst_92 : f32 to vector<16x128xf32>
    %223 = arith.select %221, %212, %222 : vector<16x128xi1>, vector<16x128xf32>
    %c126_i32_93 = arith.constant 126 : i32
    %224 = tpu.dynamic_rotate %199 by %c126_i32_93 dim 1 : vector<16x128xf32>, i32 -> vector<16x128xf32>
    %c2_i32_94 = arith.constant 2 : i32
    %225 = vector.broadcast %c2_i32_94 : i32 to vector<16x128xi32>
    %226 = arith.addi %2, %225 : vector<16x128xi32>
    %c0_i32_95 = arith.constant 0 : i32
    %227 = vector.broadcast %c0_i32_95 : i32 to vector<16x128xi32>
    %228 = arith.cmpi sge, %226, %227 : vector<16x128xi32>
    %c2_i32_96 = arith.constant 2 : i32
    %229 = vector.broadcast %c2_i32_96 : i32 to vector<16x128xi32>
    %230 = arith.addi %2, %229 : vector<16x128xi32>
    %c8_i32_97 = arith.constant 8 : i32
    %231 = vector.broadcast %c8_i32_97 : i32 to vector<16x128xi32>
    %232 = arith.cmpi slt, %230, %231 : vector<16x128xi32>
    %233 = arith.andi %228, %232 : vector<16x128xi1>
    %cst_98 = arith.constant 0.000000e+00 : f32
    %234 = vector.broadcast %cst_98 : f32 to vector<16x128xf32>
    %235 = arith.select %233, %224, %234 : vector<16x128xi1>, vector<16x128xf32>
    %c124_i32_99 = arith.constant 124 : i32
    %236 = tpu.dynamic_rotate %199 by %c124_i32_99 dim 1 : vector<16x128xf32>, i32 -> vector<16x128xf32>
    %c4_i32_100 = arith.constant 4 : i32
    %237 = vector.broadcast %c4_i32_100 : i32 to vector<16x128xi32>
    %238 = arith.addi %2, %237 : vector<16x128xi32>
    %c0_i32_101 = arith.constant 0 : i32
    %239 = vector.broadcast %c0_i32_101 : i32 to vector<16x128xi32>
    %240 = arith.cmpi sge, %238, %239 : vector<16x128xi32>
    %c4_i32_102 = arith.constant 4 : i32
    %241 = vector.broadcast %c4_i32_102 : i32 to vector<16x128xi32>
    %242 = arith.addi %2, %241 : vector<16x128xi32>
    %c8_i32_103 = arith.constant 8 : i32
    %243 = vector.broadcast %c8_i32_103 : i32 to vector<16x128xi32>
    %244 = arith.cmpi slt, %242, %243 : vector<16x128xi32>
    %245 = arith.andi %240, %244 : vector<16x128xi1>
    %cst_104 = arith.constant 0.000000e+00 : f32
    %246 = vector.broadcast %cst_104 : f32 to vector<16x128xf32>
    %247 = arith.select %245, %236, %246 : vector<16x128xi1>, vector<16x128xf32>
    %248 = tpu.concatenate %211, %223, %199, %235, %247 in 0 : vector<16x128xf32>, vector<16x128xf32>, vector<16x128xf32>, vector<16x128xf32>, vector<16x128xf32> -> vector<80x128xf32>
    %249 = arith.truncf %248 : vector<80x128xf32> to vector<80x128xbf16>
    %250 = tpu.concatenate %249, %11 in 0 : vector<80x128xbf16>, vector<48x128xbf16> -> vector<128x128xbf16>
    %c2 = arith.constant 2 : index
    %c0_105 = arith.constant 0 : index
    %c0_106 = arith.constant 0 : index
    %251 = vector.load %arg5[%c2, %c0_105, %c0_106] : memref<3x128x128xbf16, #tpu.memory_space<vmem>>, vector<1x128x128xbf16>
    %252 = vector.shape_cast %251 : vector<1x128x128xbf16> to vector<128x128xbf16>
    %cst_107 = arith.constant dense<0.000000e+00> : vector<128x128xf32>
    %253 = tpu.matmul %252, %250, %cst_107 {dimension_numbers = #tpu.dot_dimension_numbers<[1], [0], [0], [1], [0, 0, 1, 1], [], []>} : vector<128x128xbf16>, vector<128x128xbf16>, vector<128x128xf32> -> vector<128x128xf32>
    %c2_108 = arith.constant 2 : index
    %c0_109 = arith.constant 0 : index
    %c0_110 = arith.constant 0 : index
    %254 = vector.load %arg6[%c2_108, %c0_109, %c0_110] : memref<3x128x1xf32, #tpu.memory_space<vmem>>, vector<1x128x1xf32>
    %255 = vector.shape_cast %254 : vector<1x128x1xf32> to vector<128x1xf32>
    %256 = vector.broadcast %255 : vector<128x1xf32> to vector<128x128xf32>
    %257 = arith.addf %253, %256 : vector<128x128xf32>
    %258 = vector.extract_strided_slice %257 {offsets = [0, 0], sizes = [64, 128], strides = [1, 1]} : vector<128x128xf32> to vector<64x128xf32>
    %259 = math.tanh %258 : vector<64x128xf32>
    %260 = vector.extract_strided_slice %257 {offsets = [64, 0], sizes = [64, 128], strides = [1, 1]} : vector<128x128xf32> to vector<64x128xf32>
    %261 = arith.negf %260 : vector<64x128xf32>
    %262 = math.exp %261 : vector<64x128xf32>
    %cst_111 = arith.constant 1.000000e+00 : f32
    %263 = vector.broadcast %cst_111 : f32 to vector<64x128xf32>
    %264 = arith.addf %263, %262 : vector<64x128xf32>
    %265 = arith.divf %263, %264 : vector<64x128xf32>
    %266 = arith.mulf %259, %265 : vector<64x128xf32>
    %267 = vector.extract_strided_slice %266 {offsets = [0, 0], sizes = [16, 128], strides = [1, 1]} : vector<64x128xf32> to vector<16x128xf32>
    %268 = vector.extract_strided_slice %266 {offsets = [16, 0], sizes = [16, 128], strides = [1, 1]} : vector<64x128xf32> to vector<16x128xf32>
    %269 = arith.addf %267, %268 : vector<16x128xf32>
    %270 = vector.extract_strided_slice %266 {offsets = [32, 0], sizes = [16, 128], strides = [1, 1]} : vector<64x128xf32> to vector<16x128xf32>
    %271 = arith.addf %269, %270 : vector<16x128xf32>
    %272 = vector.extract_strided_slice %266 {offsets = [48, 0], sizes = [16, 128], strides = [1, 1]} : vector<64x128xf32> to vector<16x128xf32>
    %273 = arith.addf %271, %272 : vector<16x128xf32>
    %cst_112 = arith.constant 2.500000e-01 : f32
    %274 = vector.broadcast %cst_112 : f32 to vector<16x128xf32>
    %275 = arith.mulf %273, %274 : vector<16x128xf32>
    %276 = arith.truncf %275 : vector<16x128xf32> to vector<16x128xbf16>
    %cst_113 = arith.constant dense<0.000000e+00> : vector<16x256xf32>
    %277 = tpu.matmul %276, %10, %cst_113 {dimension_numbers = #tpu.dot_dimension_numbers<[1], [0], [0], [1], [0, 0, 1, 1], [], []>} : vector<16x128xbf16>, vector<128x256xbf16>, vector<16x256xf32> -> vector<16x256xf32>
    %278 = vector.extract_strided_slice %277 {offsets = [0, 0], sizes = [16, 128], strides = [1, 1]} : vector<16x256xf32> to vector<16x128xf32>
    %279 = arith.truncf %278 : vector<16x128xf32> to vector<16x128xbf16>
    %280 = vector.extract_strided_slice %277 {offsets = [0, 128], sizes = [16, 128], strides = [1, 1]} : vector<16x256xf32> to vector<16x128xf32>
    %281 = arith.truncf %280 : vector<16x128xf32> to vector<16x128xbf16>
    %282 = tpu.concatenate %276, %279, %281 in 0 : vector<16x128xbf16>, vector<16x128xbf16>, vector<16x128xbf16> -> vector<48x128xbf16>
    %c2_114 = arith.constant 2 : index
    %c0_115 = arith.constant 0 : index
    %c0_116 = arith.constant 0 : index
    %283 = vector.load %arg7[%c2_114, %c0_115, %c0_116] : memref<3x32x48xbf16, #tpu.memory_space<vmem>>, vector<1x32x48xbf16>
    %284 = vector.shape_cast %283 : vector<1x32x48xbf16> to vector<32x48xbf16>
    %cst_117 = arith.constant dense<0.000000e+00> : vector<32x128xf32>
    %285 = tpu.matmul %284, %282, %cst_117 {dimension_numbers = #tpu.dot_dimension_numbers<[1], [0], [0], [1], [0, 0, 1, 1], [], []>} : vector<32x48xbf16>, vector<48x128xbf16>, vector<32x128xf32> -> vector<32x128xf32>
    %c2_118 = arith.constant 2 : index
    %c0_119 = arith.constant 0 : index
    %c0_120 = arith.constant 0 : index
    %286 = vector.load %arg8[%c2_118, %c0_119, %c0_120] : memref<3x32x1xf32, #tpu.memory_space<vmem>>, vector<1x32x1xf32>
    %287 = vector.shape_cast %286 : vector<1x32x1xf32> to vector<32x1xf32>
    %288 = vector.broadcast %287 : vector<32x1xf32> to vector<32x128xf32>
    %289 = arith.addf %285, %288 : vector<32x128xf32>
    %290 = vector.extract_strided_slice %289 {offsets = [0, 0], sizes = [16, 128], strides = [1, 1]} : vector<32x128xf32> to vector<16x128xf32>
    %291 = arith.truncf %290 : vector<16x128xf32> to vector<16x128xbf16>
    %292 = tpu.concatenate %103, %197, %291 in 0 : vector<16x128xbf16>, vector<16x128xbf16>, vector<16x128xbf16> -> vector<48x128xbf16>
    %c0_121 = arith.constant 0 : index
    %c0_122 = arith.constant 0 : index
    %293 = vector.load %arg9[%c0_121, %c0_122] : memref<16x48xbf16, #tpu.memory_space<vmem>>, vector<16x48xbf16>
    %cst_123 = arith.constant dense<0.000000e+00> : vector<16x128xf32>
    %294 = tpu.matmul %293, %292, %cst_123 {dimension_numbers = #tpu.dot_dimension_numbers<[1], [0], [0], [1], [0, 0, 1, 1], [], []>} : vector<16x48xbf16>, vector<48x128xbf16>, vector<16x128xf32> -> vector<16x128xf32>
    %c0_124 = arith.constant 0 : index
    %c0_125 = arith.constant 0 : index
    %295 = vector.load %arg10[%c0_124, %c0_125] : memref<16x1xf32, #tpu.memory_space<vmem>>, vector<16x1xf32>
    %296 = vector.broadcast %295 : vector<16x1xf32> to vector<16x128xf32>
    %297 = arith.addf %294, %296 : vector<16x128xf32>
    %cst_126 = arith.constant 0.000000e+00 : f32
    %298 = vector.broadcast %cst_126 : f32 to vector<16x128xf32>
    %299 = arith.maximumf %297, %298 : vector<16x128xf32>
    %c0_127 = arith.constant 0 : index
    %c0_128 = arith.constant 0 : index
    %300 = vector.load %arg11[%c0_127, %c0_128] : memref<16x16xbf16, #tpu.memory_space<vmem>>, vector<16x16xbf16>
    %301 = arith.truncf %299 : vector<16x128xf32> to vector<16x128xbf16>
    %cst_129 = arith.constant dense<0.000000e+00> : vector<16x128xf32>
    %302 = tpu.matmul %300, %301, %cst_129 {dimension_numbers = #tpu.dot_dimension_numbers<[1], [0], [0], [1], [0, 0, 1, 1], [], []>} : vector<16x16xbf16>, vector<16x128xbf16>, vector<16x128xf32> -> vector<16x128xf32>
    %c0_130 = arith.constant 0 : index
    %c0_131 = arith.constant 0 : index
    %303 = vector.load %arg12[%c0_130, %c0_131] : memref<16x1xf32, #tpu.memory_space<vmem>>, vector<16x1xf32>
    %304 = vector.broadcast %303 : vector<16x1xf32> to vector<16x128xf32>
    %305 = arith.addf %302, %304 : vector<16x128xf32>
    %cst_132 = arith.constant 0.000000e+00 : f32
    %306 = vector.broadcast %cst_132 : f32 to vector<16x128xf32>
    %307 = arith.maximumf %305, %306 : vector<16x128xf32>
    %c0_133 = arith.constant 0 : index
    %c0_134 = arith.constant 0 : index
    %308 = vector.load %arg13[%c0_133, %c0_134] : memref<16x16xbf16, #tpu.memory_space<vmem>>, vector<16x16xbf16>
    %309 = arith.truncf %307 : vector<16x128xf32> to vector<16x128xbf16>
    %cst_135 = arith.constant dense<0.000000e+00> : vector<16x128xf32>
    %310 = tpu.matmul %308, %309, %cst_135 {dimension_numbers = #tpu.dot_dimension_numbers<[1], [0], [0], [1], [0, 0, 1, 1], [], []>} : vector<16x16xbf16>, vector<16x128xbf16>, vector<16x128xf32> -> vector<16x128xf32>
    %c0_136 = arith.constant 0 : index
    %c0_137 = arith.constant 0 : index
    %311 = vector.load %arg14[%c0_136, %c0_137] : memref<16x1xf32, #tpu.memory_space<vmem>>, vector<16x1xf32>
    %312 = vector.broadcast %311 : vector<16x1xf32> to vector<16x128xf32>
    %313 = arith.addf %310, %312 : vector<16x128xf32>
    %c0_138 = arith.constant 0 : index
    %c0_139 = arith.constant 0 : index
    %314 = vector.load %arg15[%c0_138, %c0_139] : memref<2x16xbf16, #tpu.memory_space<vmem>>, vector<2x16xbf16>
    %315 = arith.truncf %313 : vector<16x128xf32> to vector<16x128xbf16>
    %cst_140 = arith.constant dense<0.000000e+00> : vector<2x128xf32>
    %316 = tpu.matmul %314, %315, %cst_140 {dimension_numbers = #tpu.dot_dimension_numbers<[1], [0], [0], [1], [0, 0, 1, 1], [], []>} : vector<2x16xbf16>, vector<16x128xbf16>, vector<2x128xf32> -> vector<2x128xf32>
    %c0_141 = arith.constant 0 : index
    %c0_142 = arith.constant 0 : index
    %317 = vector.load %arg16[%c0_141, %c0_142] : memref<2x1xf32, #tpu.memory_space<vmem>>, vector<2x1xf32>
    %318 = vector.broadcast %317 : vector<2x1xf32> to vector<2x128xf32>
    %319 = arith.addf %316, %318 : vector<2x128xf32>
    %320 = vector.extract_strided_slice %319 {offsets = [0, 0], sizes = [1, 128], strides = [1, 1]} : vector<2x128xf32> to vector<1x128xf32>
    %321 = vector.extract_strided_slice %319 {offsets = [1, 0], sizes = [1, 128], strides = [1, 1]} : vector<2x128xf32> to vector<1x128xf32>
    %cst_143 = arith.constant 0.000000e+00 : f32
    %322 = vector.broadcast %cst_143 : f32 to vector<1x128xf32>
    %323 = arith.maximumf %321, %322 : vector<1x128xf32>
    %324 = vector.broadcast %cst_143 : f32 to vector<1x128xf32>
    %325 = arith.subf %321, %324 : vector<1x128xf32>
    %326 = arith.cmpf one, %325, %325 : vector<1x128xf32>
    %327 = vector.broadcast %cst_143 : f32 to vector<1x128xf32>
    %328 = arith.addf %321, %327 : vector<1x128xf32>
    %329 = math.absf %325 : vector<1x128xf32>
    %cst_144 = arith.constant 0.000000e+00 : f32
    %330 = vector.broadcast %cst_144 : f32 to vector<1x128xf32>
    %331 = arith.subf %330, %329 : vector<1x128xf32>
    %332 = math.exp %331 : vector<1x128xf32>
    %333 = math.log1p %332 : vector<1x128xf32>
    %334 = arith.addf %323, %333 : vector<1x128xf32>
    %335 = arith.select %326, %328, %334 : vector<1x128xi1>, vector<1x128xf32>
    %336 = tpu.concatenate %320, %335 in 0 : vector<1x128xf32>, vector<1x128xf32> -> vector<2x128xf32>
    %c0_145 = arith.constant 0 : index
    %c0_146 = arith.constant 0 : index
    %337 = vector.load %arg17[%c0_145, %c0_146] : memref<2x128xf32, #tpu.memory_space<vmem>>, vector<2x128xf32>
    tpu.vector_store %arg17[%c0_145, %c0_146], %336 {strides = array<i32>} : memref<2x128xf32, #tpu.memory_space<vmem>>, vector<2x128xf32>,
    return
  }
  func.func @transform_0(%arg0: i32) -> (i32, i32) {
    %c0_i32 = arith.constant 0 : i32
    %c0_i32_0 = arith.constant 0 : i32
    return %c0_i32, %arg0 : i32, i32
  }
  func.func @transform_1(%arg0: i32) -> (i32, i32) {
    %c0_i32 = arith.constant 0 : i32
    %c0_i32_0 = arith.constant 0 : i32
    %c0_i32_1 = arith.constant 0 : i32
    return %c0_i32, %c0_i32_0 : i32, i32
  }
  func.func @transform_2(%arg0: i32) -> (i32, i32) {
    %c0_i32 = arith.constant 0 : i32
    %c0_i32_0 = arith.constant 0 : i32
    %c0_i32_1 = arith.constant 0 : i32
    return %c0_i32, %c0_i32_0 : i32, i32
  }
  func.func @transform_3(%arg0: i32) -> (i32, i32) {
    %c0_i32 = arith.constant 0 : i32
    %c0_i32_0 = arith.constant 0 : i32
    %c0_i32_1 = arith.constant 0 : i32
    return %c0_i32, %c0_i32_0 : i32, i32
  }
  func.func @transform_4(%arg0: i32) -> (i32, i32, i32) {
    %c0_i32 = arith.constant 0 : i32
    %c0_i32_0 = arith.constant 0 : i32
    %c0_i32_1 = arith.constant 0 : i32
    %c0_i32_2 = arith.constant 0 : i32
    return %c0_i32, %c0_i32_0, %c0_i32_1 : i32, i32, i32
  }
  func.func @transform_5(%arg0: i32) -> (i32, i32, i32) {
    %c0_i32 = arith.constant 0 : i32
    %c0_i32_0 = arith.constant 0 : i32
    %c0_i32_1 = arith.constant 0 : i32
    %c0_i32_2 = arith.constant 0 : i32
    return %c0_i32, %c0_i32_0, %c0_i32_1 : i32, i32, i32
  }
  func.func @transform_6(%arg0: i32) -> (i32, i32, i32) {
    %c0_i32 = arith.constant 0 : i32
    %c0_i32_0 = arith.constant 0 : i32
    %c0_i32_1 = arith.constant 0 : i32
    %c0_i32_2 = arith.constant 0 : i32
    return %c0_i32, %c0_i32_0, %c0_i32_1 : i32, i32, i32
  }
  func.func @transform_7(%arg0: i32) -> (i32, i32, i32) {
    %c0_i32 = arith.constant 0 : i32
    %c0_i32_0 = arith.constant 0 : i32
    %c0_i32_1 = arith.constant 0 : i32
    %c0_i32_2 = arith.constant 0 : i32
    return %c0_i32, %c0_i32_0, %c0_i32_1 : i32, i32, i32
  }
  func.func @transform_8(%arg0: i32) -> (i32, i32) {
    %c0_i32 = arith.constant 0 : i32
    %c0_i32_0 = arith.constant 0 : i32
    %c0_i32_1 = arith.constant 0 : i32
    return %c0_i32, %c0_i32_0 : i32, i32
  }
  func.func @transform_9(%arg0: i32) -> (i32, i32) {
    %c0_i32 = arith.constant 0 : i32
    %c0_i32_0 = arith.constant 0 : i32
    %c0_i32_1 = arith.constant 0 : i32
    return %c0_i32, %c0_i32_0 : i32, i32
  }
  func.func @transform_10(%arg0: i32) -> (i32, i32) {
    %c0_i32 = arith.constant 0 : i32
    %c0_i32_0 = arith.constant 0 : i32
    %c0_i32_1 = arith.constant 0 : i32
    return %c0_i32, %c0_i32_0 : i32, i32
  }
  func.func @transform_11(%arg0: i32) -> (i32, i32) {
    %c0_i32 = arith.constant 0 : i32
    %c0_i32_0 = arith.constant 0 : i32
    %c0_i32_1 = arith.constant 0 : i32
    return %c0_i32, %c0_i32_0 : i32, i32
  }
  func.func @transform_12(%arg0: i32) -> (i32, i32) {
    %c0_i32 = arith.constant 0 : i32
    %c0_i32_0 = arith.constant 0 : i32
    %c0_i32_1 = arith.constant 0 : i32
    return %c0_i32, %c0_i32_0 : i32, i32
  }
  func.func @transform_13(%arg0: i32) -> (i32, i32) {
    %c0_i32 = arith.constant 0 : i32
    %c0_i32_0 = arith.constant 0 : i32
    %c0_i32_1 = arith.constant 0 : i32
    return %c0_i32, %c0_i32_0 : i32, i32
  }
  func.func @transform_14(%arg0: i32) -> (i32, i32) {
    %c0_i32 = arith.constant 0 : i32
    %c0_i32_0 = arith.constant 0 : i32
    %c0_i32_1 = arith.constant 0 : i32
    return %c0_i32, %c0_i32_0 : i32, i32
  }
  func.func @transform_15(%arg0: i32) -> (i32, i32) {
    %c0_i32 = arith.constant 0 : i32
    %c0_i32_0 = arith.constant 0 : i32
    %c0_i32_1 = arith.constant 0 : i32
    return %c0_i32, %c0_i32_0 : i32, i32
  }
  func.func @transform_16(%arg0: i32) -> (i32, i32) {
    %c0_i32 = arith.constant 0 : i32
    %c0_i32_0 = arith.constant 0 : i32
    return %c0_i32, %arg0 : i32, i32
  }
}

</mosaic_0001>

<llo_original>
// kernel: forward.1
$region0: #{forward.1}
  #allocation0 [shape = 'u32[]', space=smem, size = 0x4, offset = 0x4, fixed_abs, tag = 'smem constant byte address 0x4 - core index']
  #allocation1 [shape = 'u32[144,128]{1,0:T(1,128)}', space=vmem, size = 0x12000, scoped, tag = 'internal scratch']
  %s0 = inlined_call_operand.vmem [shape: f32[24,256], index: 0, kind: input, shape index: {}]
  %s1 = inlined_call_operand.vmem [shape: bf16[128,256], index: 1, kind: input, shape index: {}]
  %s2 = inlined_call_operand.vmem [shape: bf16[16,24], index: 2, kind: input, shape index: {}]
  %s3 = inlined_call_operand.vmem [shape: f32[16,1], index: 3, kind: input, shape index: {}]
  %s4 = inlined_call_operand.vmem [shape: bf16[3,128,128], index: 4, kind: input, shape index: {}]
  %s5 = inlined_call_operand.vmem [shape: f32[3,128,1], index: 5, kind: input, shape index: {}]
  %s6 = inlined_call_operand.vmem [shape: bf16[3,32,48], index: 6, kind: input, shape index: {}]
  %s7 = inlined_call_operand.vmem [shape: f32[3,32,1], index: 7, kind: input, shape index: {}]
  %s8 = inlined_call_operand.vmem [shape: bf16[16,48], index: 8, kind: input, shape index: {}]
  %s9 = inlined_call_operand.vmem [shape: f32[16,1], index: 9, kind: input, shape index: {}]
  %s10 = inlined_call_operand.vmem [shape: bf16[16,16], index: 10, kind: input, shape index: {}]
  %s11 = inlined_call_operand.vmem [shape: f32[16,1], index: 11, kind: input, shape index: {}]
  %s12 = inlined_call_operand.vmem [shape: bf16[16,16], index: 12, kind: input, shape index: {}]
  %s13 = inlined_call_operand.vmem [shape: f32[16,1], index: 13, kind: input, shape index: {}]
  %s14 = inlined_call_operand.vmem [shape: bf16[2,16], index: 14, kind: input, shape index: {}]
  %s15 = inlined_call_operand.vmem [shape: f32[2,1], index: 15, kind: input, shape index: {}]
  %s16 = inlined_call_operand.vmem [shape: f32[2,256], index: 16, kind: output, shape index: {}]
  %s17 = sld [smem:[#allocation0]]
  $region135: #{forward.1} parent=0
    _
  %s19 = ssub.s32 1, %s17
  %s20 = scalar_select 0, %s19, %s17
  $region1: #{forward.1} parent=0
    #allocation2 [shape = 'u8[24576]{0}', space=vmem, size = 0x6000, scoped, tag = 'input window, operand 0']
    loop: start=0, step=1, limit=4
    $region2: #{forward.1} parent=1 // loop_pre_header
      _
    $region3: #{forward.1} parent=1 // loop_header
      %s22 = sphi 0, %s26
      %p23 = scmp.ge.s32.totalorder %s22, 4
      %s32 = sphi 0, %s34
      %s35 = sphi 0, %s32
      %s36 = sphi 0, %s35
      %s52 = sphi 0, %s36
      %s56 = sphi 0, %s56
      %s58 = sphi 0, %s56
      %s59 = sphi 0, %s58
      %s73 = sphi 0, %s59
      %s77 = sphi 0, %s77
      %s79 = sphi 0, %s77
      %s80 = sphi 0, %s79
      %s94 = sphi 0, %s80
      %s98 = sphi 0, %s98
      %s100 = sphi 0, %s98
      %s101 = sphi 0, %s100
      %s115 = sphi 0, %s101
      %s119 = sphi 0, %s119
      %s121 = sphi 0, %s119
      %s122 = sphi 0, %s121
      %s136 = sphi 0, %s122
      %s140 = sphi 0, %s140
      %s142 = sphi 0, %s140
      %s143 = sphi 0, %s142
      %s157 = sphi 0, %s143
      %s161 = sphi 0, %s161
      %s163 = sphi 0, %s161
      %s164 = sphi 0, %s163
      %s178 = sphi 0, %s164
      %s182 = sphi 0, %s182
      %s184 = sphi 0, %s182
      %s185 = sphi 0, %s184
      %s199 = sphi 0, %s185
      %s203 = sphi 0, %s203
      %s205 = sphi 0, %s203
      %s206 = sphi 0, %s205
      %s220 = sphi 0, %s206
      %s224 = sphi 0, %s224
      %s226 = sphi 0, %s224
      %s227 = sphi 0, %s226
      %s241 = sphi 0, %s227
      %s245 = sphi 0, %s245
      %s247 = sphi 0, %s245
      %s248 = sphi 0, %s247
      %s262 = sphi 0, %s248
      %s266 = sphi 0, %s266
      %s268 = sphi 0, %s266
      %s269 = sphi 0, %s268
      %s283 = sphi 0, %s269
      %s287 = sphi 0, %s287
      %s289 = sphi 0, %s287
      %s290 = sphi 0, %s289
      %s304 = sphi 0, %s290
      %s308 = sphi 0, %s308
      %s310 = sphi 0, %s308
      %s311 = sphi 0, %s310
      %s325 = sphi 0, %s311
      %s329 = sphi 0, %s329
      %s331 = sphi 0, %s329
      %s332 = sphi 0, %s331
      %s346 = sphi 0, %s332
      %s350 = sphi 0, %s350
      %s352 = sphi 0, %s350
      %s353 = sphi 0, %s352
      %s367 = sphi 0, %s353
      %s373 = sphi 0, %s375
      %s376 = sphi 0, %s373
      %s377 = sphi 0, %s376
      %s393 = sphi 0, %s377
    $region4: #{forward.1} parent=1 // loop_header_branch
      %25 = sbr.rel (%p23) target = $region8
    $region5: #{forward.1} parent=1 // loop_body
      %s27 = ssub.s32 %s22, 1
      %s28 = ssub.s32 %s22, 2
      %s29 = sadd.s32 %s22, 1
      %s30 = ssub.s32 %s22, %s29
      %p31 = scmp.eq.s32.totalorder %s30, 0
      %s33 = sadd.s32 %s32, 1
      %s34 = scalar_select %p31, %s32, %s33
      %p37 = pneg %p31
      %p38 = scmp.eq.s32.totalorder %s22, 1
      %p39 = por %p37, %p38
      %p40 = scmp.ne.s32.totalorder %s32, %s35
      %p41 = scmp.eq.s32.totalorder %s22, 0
      %p42 = por %p40, %p41
      %p43 = scmp.ne.s32.totalorder %s32, %s35
      %p44 = scmp.eq.s32.totalorder %s27, 1
      %p45 = por %p43, %p44
      %p46 = scmp.ne.s32.totalorder %s35, %s36
      %p47 = scmp.eq.s32.totalorder %s27, 0
      %p48 = por %p46, %p47
      %p49 = scmp.ne.s32.totalorder %s35, %s36
      %p50 = scmp.eq.s32.totalorder %s28, 1
      %p51 = por %p49, %p50
      %p53 = scmp.ne.s32.totalorder %s36, %s52
      %p54 = scmp.eq.s32.totalorder %s28, 0
      %p55 = por %p53, %p54
      %s57 = sadd.s32 %s56, 1
      %p60 = scmp.eq.s32.totalorder %s22, 1
      %p61 = scmp.ne.s32.totalorder %s56, %s58
      %p62 = scmp.eq.s32.totalorder %s22, 0
      %p63 = por %p61, %p62
      %p64 = scmp.ne.s32.totalorder %s56, %s58
      %p65 = scmp.eq.s32.totalorder %s27, 1
      %p66 = por %p64, %p65
      %p67 = scmp.ne.s32.totalorder %s58, %s59
      %p68 = scmp.eq.s32.totalorder %s27, 0
      %p69 = por %p67, %p68
      %p70 = scmp.ne.s32.totalorder %s58, %s59
      %p71 = scmp.eq.s32.totalorder %s28, 1
      %p72 = por %p70, %p71
      %p74 = scmp.ne.s32.totalorder %s59, %s73
      %p75 = scmp.eq.s32.totalorder %s28, 0
      %p76 = por %p74, %p75
      %s78 = sadd.s32 %s77, 1
      %p81 = scmp.eq.s32.totalorder %s22, 1
      %p82 = scmp.ne.s32.totalorder %s77, %s79
      %p83 = scmp.eq.s32.totalorder %s22, 0
      %p84 = por %p82, %p83
      %p85 = scmp.ne.s32.totalorder %s77, %s79
      %p86 = scmp.eq.s32.totalorder %s27, 1
      %p87 = por %p85, %p86
      %p88 = scmp.ne.s32.totalorder %s79, %s80
      %p89 = scmp.eq.s32.totalorder %s27, 0
      %p90 = por %p88, %p89
      %p91 = scmp.ne.s32.totalorder %s79, %s80
      %p92 = scmp.eq.s32.totalorder %s28, 1
      %p93 = por %p91, %p92
      %p95 = scmp.ne.s32.totalorder %s80, %s94
      %p96 = scmp.eq.s32.totalorder %s28, 0
      %p97 = por %p95, %p96
      %s99 = sadd.s32 %s98, 1
      %p102 = scmp.eq.s32.totalorder %s22, 1
      %p103 = scmp.ne.s32.totalorder %s98, %s100
      %p104 = scmp.eq.s32.totalorder %s22, 0
      %p105 = por %p103, %p104
      %p106 = scmp.ne.s32.totalorder %s98, %s100
      %p107 = scmp.eq.s32.totalorder %s27, 1
      %p108 = por %p106, %p107
      %p109 = scmp.ne.s32.totalorder %s100, %s101
      %p110 = scmp.eq.s32.totalorder %s27, 0
      %p111 = por %p109, %p110
      %p112 = scmp.ne.s32.totalorder %s100, %s101
      %p113 = scmp.eq.s32.totalorder %s28, 1
      %p114 = por %p112, %p113
      %p116 = scmp.ne.s32.totalorder %s101, %s115
      %p117 = scmp.eq.s32.totalorder %s28, 0
      %p118 = por %p116, %p117
      %s120 = sadd.s32 %s119, 1
      %p123 = scmp.eq.s32.totalorder %s22, 1
      %p124 = scmp.ne.s32.totalorder %s119, %s121
      %p125 = scmp.eq.s32.totalorder %s22, 0
      %p126 = por %p124, %p125
      %p127 = scmp.ne.s32.totalorder %s119, %s121
      %p128 = scmp.eq.s32.totalorder %s27, 1
      %p129 = por %p127, %p128
      %p130 = scmp.ne.s32.totalorder %s121, %s122
      %p131 = scmp.eq.s32.totalorder %s27, 0
      %p132 = por %p130, %p131
      %p133 = scmp.ne.s32.totalorder %s121, %s122
      %p134 = scmp.eq.s32.totalorder %s28, 1
      %p135 = por %p133, %p134
      %p137 = scmp.ne.s32.totalorder %s122, %s136
      %p138 = scmp.eq.s32.totalorder %s28, 0
      %p139 = por %p137, %p138
      %s141 = sadd.s32 %s140, 1
      %p144 = scmp.eq.s32.totalorder %s22, 1
      %p145 = scmp.ne.s32.totalorder %s140, %s142
      %p146 = scmp.eq.s32.totalorder %s22, 0
      %p147 = por %p145, %p146
      %p148 = scmp.ne.s32.totalorder %s140, %s142
      %p149 = scmp.eq.s32.totalorder %s27, 1
      %p150 = por %p148, %p149
      %p151 = scmp.ne.s32.totalorder %s142, %s143
      %p152 = scmp.eq.s32.totalorder %s27, 0
      %p153 = por %p151, %p152
      %p154 = scmp.ne.s32.totalorder %s142, %s143
      %p155 = scmp.eq.s32.totalorder %s28, 1
      %p156 = por %p154, %p155
      %p158 = scmp.ne.s32.totalorder %s143, %s157
      %p159 = scmp.eq.s32.totalorder %s28, 0
      %p160 = por %p158, %p159
      %s162 = sadd.s32 %s161, 1
      %p165 = scmp.eq.s32.totalorder %s22, 1
      %p166 = scmp.ne.s32.totalorder %s161, %s163
      %p167 = scmp.eq.s32.totalorder %s22, 0
      %p168 = por %p166, %p167
      %p169 = scmp.ne.s32.totalorder %s161, %s163
      %p170 = scmp.eq.s32.totalorder %s27, 1
      %p171 = por %p169, %p170
      %p172 = scmp.ne.s32.totalorder %s163, %s164
      %p173 = scmp.eq.s32.totalorder %s27, 0
      %p174 = por %p172, %p173
      %p175 = scmp.ne.s32.totalorder %s163, %s164
      %p176 = scmp.eq.s32.totalorder %s28, 1
      %p177 = por %p175, %p176
      %p179 = scmp.ne.s32.totalorder %s164, %s178
      %p180 = scmp.eq.s32.totalorder %s28, 0
      %p181 = por %p179, %p180
      %s183 = sadd.s32 %s182, 1
      %p186 = scmp.eq.s32.totalorder %s22, 1
      %p187 = scmp.ne.s32.totalorder %s182, %s184
      %p188 = scmp.eq.s32.totalorder %s22, 0
      %p189 = por %p187, %p188
      %p190 = scmp.ne.s32.totalorder %s182, %s184
      %p191 = scmp.eq.s32.totalorder %s27, 1
      %p192 = por %p190, %p191
      %p193 = scmp.ne.s32.totalorder %s184, %s185
      %p194 = scmp.eq.s32.totalorder %s27, 0
      %p195 = por %p193, %p194
      %p196 = scmp.ne.s32.totalorder %s184, %s185
      %p197 = scmp.eq.s32.totalorder %s28, 1
      %p198 = por %p196, %p197
      %p200 = scmp.ne.s32.totalorder %s185, %s199
      %p201 = scmp.eq.s32.totalorder %s28, 0
      %p202 = por %p200, %p201
      %s204 = sadd.s32 %s203, 1
      %p207 = scmp.eq.s32.totalorder %s22, 1
      %p208 = scmp.ne.s32.totalorder %s203, %s205
      %p209 = scmp.eq.s32.totalorder %s22, 0
      %p210 = por %p208, %p209
      %p211 = scmp.ne.s32.totalorder %s203, %s205
      %p212 = scmp.eq.s32.totalorder %s27, 1
      %p213 = por %p211, %p212
      %p214 = scmp.ne.s32.totalorder %s205, %s206
      %p215 = scmp.eq.s32.totalorder %s27, 0
      %p216 = por %p214, %p215
      %p217 = scmp.ne.s32.totalorder %s205, %s206
      %p218 = scmp.eq.s32.totalorder %s28, 1
      %p219 = por %p217, %p218
      %p221 = scmp.ne.s32.totalorder %s206, %s220
      %p222 = scmp.eq.s32.totalorder %s28, 0
      %p223 = por %p221, %p222
      %s225 = sadd.s32 %s224, 1
      %p228 = scmp.eq.s32.totalorder %s22, 1
      %p229 = scmp.ne.s32.totalorder %s224, %s226
      %p230 = scmp.eq.s32.totalorder %s22, 0
      %p231 = por %p229, %p230
      %p232 = scmp.ne.s32.totalorder %s224, %s226
      %p233 = scmp.eq.s32.totalorder %s27, 1
      %p234 = por %p232, %p233
      %p235 = scmp.ne.s32.totalorder %s226, %s227
      %p236 = scmp.eq.s32.totalorder %s27, 0
      %p237 = por %p235, %p236
      %p238 = scmp.ne.s32.totalorder %s226, %s227
      %p239 = scmp.eq.s32.totalorder %s28, 1
      %p240 = por %p238, %p239
      %p242 = scmp.ne.s32.totalorder %s227, %s241
      %p243 = scmp.eq.s32.totalorder %s28, 0
      %p244 = por %p242, %p243
      %s246 = sadd.s32 %s245, 1
      %p249 = scmp.eq.s32.totalorder %s22, 1
      %p250 = scmp.ne.s32.totalorder %s245, %s247
      %p251 = scmp.eq.s32.totalorder %s22, 0
      %p252 = por %p250, %p251
      %p253 = scmp.ne.s32.totalorder %s245, %s247
      %p254 = scmp.eq.s32.totalorder %s27, 1
      %p255 = por %p253, %p254
      %p256 = scmp.ne.s32.totalorder %s247, %s248
      %p257 = scmp.eq.s32.totalorder %s27, 0
      %p258 = por %p256, %p257
      %p259 = scmp.ne.s32.totalorder %s247, %s248
      %p260 = scmp.eq.s32.totalorder %s28, 1
      %p261 = por %p259, %p260
      %p263 = scmp.ne.s32.totalorder %s248, %s262
      %p264 = scmp.eq.s32.totalorder %s28, 0
      %p265 = por %p263, %p264
      %s267 = sadd.s32 %s266, 1
      %p270 = scmp.eq.s32.totalorder %s22, 1
      %p271 = scmp.ne.s32.totalorder %s266, %s268
      %p272 = scmp.eq.s32.totalorder %s22, 0
      %p273 = por %p271, %p272
      %p274 = scmp.ne.s32.totalorder %s266, %s268
      %p275 = scmp.eq.s32.totalorder %s27, 1
      %p276 = por %p274, %p275
      %p277 = scmp.ne.s32.totalorder %s268, %s269
      %p278 = scmp.eq.s32.totalorder %s27, 0
      %p279 = por %p277, %p278
      %p280 = scmp.ne.s32.totalorder %s268, %s269
      %p281 = scmp.eq.s32.totalorder %s28, 1
      %p282 = por %p280, %p281
      %p284 = scmp.ne.s32.totalorder %s269, %s283
      %p285 = scmp.eq.s32.totalorder %s28, 0
      %p286 = por %p284, %p285
      %s288 = sadd.s32 %s287, 1
      %p291 = scmp.eq.s32.totalorder %s22, 1
      %p292 = scmp.ne.s32.totalorder %s287, %s289
      %p293 = scmp.eq.s32.totalorder %s22, 0
      %p294 = por %p292, %p293
      %p295 = scmp.ne.s32.totalorder %s287, %s289
      %p296 = scmp.eq.s32.totalorder %s27, 1
      %p297 = por %p295, %p296
      %p298 = scmp.ne.s32.totalorder %s289, %s290
      %p299 = scmp.eq.s32.totalorder %s27, 0
      %p300 = por %p298, %p299
      %p301 = scmp.ne.s32.totalorder %s289, %s290
      %p302 = scmp.eq.s32.totalorder %s28, 1
      %p303 = por %p301, %p302
      %p305 = scmp.ne.s32.totalorder %s290, %s304
      %p306 = scmp.eq.s32.totalorder %s28, 0
      %p307 = por %p305, %p306
      %s309 = sadd.s32 %s308, 1
      %p312 = scmp.eq.s32.totalorder %s22, 1
      %p313 = scmp.ne.s32.totalorder %s308, %s310
      %p314 = scmp.eq.s32.totalorder %s22, 0
      %p315 = por %p313, %p314
      %p316 = scmp.ne.s32.totalorder %s308, %s310
      %p317 = scmp.eq.s32.totalorder %s27, 1
      %p318 = por %p316, %p317
      %p319 = scmp.ne.s32.totalorder %s310, %s311
      %p320 = scmp.eq.s32.totalorder %s27, 0
      %p321 = por %p319, %p320
      %p322 = scmp.ne.s32.totalorder %s310, %s311
      %p323 = scmp.eq.s32.totalorder %s28, 1
      %p324 = por %p322, %p323
      %p326 = scmp.ne.s32.totalorder %s311, %s325
      %p327 = scmp.eq.s32.totalorder %s28, 0
      %p328 = por %p326, %p327
      %s330 = sadd.s32 %s329, 1
      %p333 = scmp.eq.s32.totalorder %s22, 1
      %p334 = scmp.ne.s32.totalorder %s329, %s331
      %p335 = scmp.eq.s32.totalorder %s22, 0
      %p336 = por %p334, %p335
      %p337 = scmp.ne.s32.totalorder %s329, %s331
      %p338 = scmp.eq.s32.totalorder %s27, 1
      %p339 = por %p337, %p338
      %p340 = scmp.ne.s32.totalorder %s331, %s332
      %p341 = scmp.eq.s32.totalorder %s27, 0
      %p342 = por %p340, %p341
      %p343 = scmp.ne.s32.totalorder %s331, %s332
      %p344 = scmp.eq.s32.totalorder %s28, 1
      %p345 = por %p343, %p344
      %p347 = scmp.ne.s32.totalorder %s332, %s346
      %p348 = scmp.eq.s32.totalorder %s28, 0
      %p349 = por %p347, %p348
      %s351 = sadd.s32 %s350, 1
      %p354 = scmp.eq.s32.totalorder %s22, 1
      %p355 = scmp.ne.s32.totalorder %s350, %s352
      %p356 = scmp.eq.s32.totalorder %s22, 0
      %p357 = por %p355, %p356
      %p358 = scmp.ne.s32.totalorder %s350, %s352
      %p359 = scmp.eq.s32.totalorder %s27, 1
      %p360 = por %p358, %p359
      %p361 = scmp.ne.s32.totalorder %s352, %s353
      %p362 = scmp.eq.s32.totalorder %s27, 0
      %p363 = por %p361, %p362
      %p364 = scmp.ne.s32.totalorder %s352, %s353
      %p365 = scmp.eq.s32.totalorder %s28, 1
      %p366 = por %p364, %p365
      %p368 = scmp.ne.s32.totalorder %s353, %s367
      %p369 = scmp.eq.s32.totalorder %s28, 0
      %p370 = por %p368, %p369
      %s371 = ssub.s32 %s22, %s29
      %p372 = scmp.eq.s32.totalorder %s371, 0
      %s374 = sadd.s32 %s373, 1
      %s375 = scalar_select %p372, %s373, %s374
      %p378 = pneg %p372
      %p379 = scmp.eq.s32.totalorder %s22, 1
      %p380 = por %p378, %p379
      %p381 = scmp.ne.s32.totalorder %s373, %s376
      %p382 = scmp.eq.s32.totalorder %s22, 0
      %p383 = por %p381, %p382
      %p384 = scmp.ne.s32.totalorder %s373, %s376
      %p385 = scmp.eq.s32.totalorder %s27, 1
      %p386 = por %p384, %p385
      %p387 = scmp.ne.s32.totalorder %s376, %s377
      %p388 = scmp.eq.s32.totalorder %s27, 0
      %p389 = por %p387, %p388
      %p390 = scmp.ne.s32.totalorder %s376, %s377
      %p391 = scmp.eq.s32.totalorder %s28, 1
      %p392 = por %p390, %p391
      %p394 = scmp.ne.s32.totalorder %s377, %s393
      %p395 = scmp.eq.s32.totalorder %s28, 0
      %p396 = por %p394, %p395
      %p397 = scmp.le.s32.totalorder 1, %s22
      %p398 = scmp.lt.s32.totalorder %s22, 3
      %p399 = pnand %p397, %p398
      %p400 = pneg %p399
      // Predicated region
      $region9: #{forward.1} parent=5 // pred_check
        _
      $region10: #{forward.1} parent=5 // pred_check_branch
        %402 = sbr.rel (%p399) target = $region12
      $region11: #{forward.1} parent=5 // pred_region
        %s403 = ssub.s32 %s22, 1
        // Predicated region
        $region13: #{forward.1} parent=11 // pred_check
          %p404 = pneg %p69
        $region14: #{forward.1} parent=11 // pred_check_branch
          %406 = sbr.rel (%p404) target = $region16
        $region15: #{forward.1} parent=11 // pred_region
          _
        $region16: #{forward.1} parent=11 // pred_fallthru
          _
        // Predicated region
        $region17: #{forward.1} parent=11 // pred_check
          %p407 = pneg %p90
        $region18: #{forward.1} parent=11 // pred_check_branch
          %409 = sbr.rel (%p407) target = $region20
        $region19: #{forward.1} parent=11 // pred_region
          _
        $region20: #{forward.1} parent=11 // pred_fallthru
          _
        // Predicated region
        $region21: #{forward.1} parent=11 // pred_check
          %p410 = pneg %p111
        $region22: #{forward.1} parent=11 // pred_check_branch
          %412 = sbr.rel (%p410) target = $region24
        $region23: #{forward.1} parent=11 // pred_region
          _
        $region24: #{forward.1} parent=11 // pred_fallthru
          _
        // Predicated region
        $region25: #{forward.1} parent=11 // pred_check
          %p413 = pneg %p132
        $region26: #{forward.1} parent=11 // pred_check_branch
          %415 = sbr.rel (%p413) target = $region28
        $region27: #{forward.1} parent=11 // pred_region
          _
        $region28: #{forward.1} parent=11 // pred_fallthru
          _
        // Predicated region
        $region29: #{forward.1} parent=11 // pred_check
          %p416 = pneg %p153
        $region30: #{forward.1} parent=11 // pred_check_branch
          %418 = sbr.rel (%p416) target = $region32
        $region31: #{forward.1} parent=11 // pred_region
          _
        $region32: #{forward.1} parent=11 // pred_fallthru
          _
        // Predicated region
        $region33: #{forward.1} parent=11 // pred_check
          %p419 = pneg %p174
        $region34: #{forward.1} parent=11 // pred_check_branch
          %421 = sbr.rel (%p419) target = $region36
        $region35: #{forward.1} parent=11 // pred_region
          _
        $region36: #{forward.1} parent=11 // pred_fallthru
          _
        // Predicated region
        $region37: #{forward.1} parent=11 // pred_check
          %p422 = pneg %p195
        $region38: #{forward.1} parent=11 // pred_check_branch
          %424 = sbr.rel (%p422) target = $region40
        $region39: #{forward.1} parent=11 // pred_region
          _
        $region40: #{forward.1} parent=11 // pred_fallthru
          _
        // Predicated region
        $region41: #{forward.1} parent=11 // pred_check
          %p425 = pneg %p216
        $region42: #{forward.1} parent=11 // pred_check_branch
          %427 = sbr.rel (%p425) target = $region44
        $region43: #{forward.1} parent=11 // pred_region
          _
        $region44: #{forward.1} parent=11 // pred_fallthru
          _
        // Predicated region
        $region45: #{forward.1} parent=11 // pred_check
          %p428 = pneg %p237
        $region46: #{forward.1} parent=11 // pred_check_branch
          %430 = sbr.rel (%p428) target = $region48
        $region47: #{forward.1} parent=11 // pred_region
          _
        $region48: #{forward.1} parent=11 // pred_fallthru
          _
        // Predicated region
        $region49: #{forward.1} parent=11 // pred_check
          %p431 = pneg %p258
        $region50: #{forward.1} parent=11 // pred_check_branch
          %433 = sbr.rel (%p431) target = $region52
        $region51: #{forward.1} parent=11 // pred_region
          _
        $region52: #{forward.1} parent=11 // pred_fallthru
          _
        // Predicated region
        $region53: #{forward.1} parent=11 // pred_check
          %p434 = pneg %p279
        $region54: #{forward.1} parent=11 // pred_check_branch
          %436 = sbr.rel (%p434) target = $region56
        $region55: #{forward.1} parent=11 // pred_region
          _
        $region56: #{forward.1} parent=11 // pred_fallthru
          _
        // Predicated region
        $region57: #{forward.1} parent=11 // pred_check
          %p437 = pneg %p300
        $region58: #{forward.1} parent=11 // pred_check_branch
          %439 = sbr.rel (%p437) target = $region60
        $region59: #{forward.1} parent=11 // pred_region
          _
        $region60: #{forward.1} parent=11 // pred_fallthru
          _
        // Predicated region
        $region61: #{forward.1} parent=11 // pred_check
          %p440 = pneg %p321
        $region62: #{forward.1} parent=11 // pred_check_branch
          %442 = sbr.rel (%p440) target = $region64
        $region63: #{forward.1} parent=11 // pred_region
          _
        $region64: #{forward.1} parent=11 // pred_fallthru
          _
        // Predicated region
        $region65: #{forward.1} parent=11 // pred_check
          %p443 = pneg %p342
        $region66: #{forward.1} parent=11 // pred_check_branch
          %445 = sbr.rel (%p443) target = $region68
        $region67: #{forward.1} parent=11 // pred_region
          _
        $region68: #{forward.1} parent=11 // pred_fallthru
          _
        // Predicated region
        $region69: #{forward.1} parent=11 // pred_check
          %p446 = pneg %p363
        $region70: #{forward.1} parent=11 // pred_check_branch
          %448 = sbr.rel (%p446) target = $region72
        $region71: #{forward.1} parent=11 // pred_region
          _
        $region72: #{forward.1} parent=11 // pred_fallthru
          _
      $region12: #{forward.1} parent=5 // pred_fallthru
        _
      %p449 = scmp.lt.s32.totalorder %s22, 2
      // Predicated region
      $region73: #{forward.1} parent=5 // pred_check
        %p450 = pneg %p449
      $region74: #{forward.1} parent=5 // pred_check_branch
        %452 = sbr.rel (%p450) target = $region76
      $region75: #{forward.1} parent=5 // pred_region
        // Predicated region
        $region77: #{forward.1} parent=75 // pred_check
          %p453 = pneg %p42
        $region78: #{forward.1} parent=75 // pred_check_branch
          %455 = sbr.rel (%p453) target = $region80
        $region79: #{forward.1} parent=75 // pred_region
          %s456 = sand.u32 %s32, 1
          %s457 = sand.u32 %s32, 1
          %s458 = smul.addr %s457, 24
          %s459 = scalar_lea.vmem [#allocation2], %s458
          %s460 = smul.addr %s22, 8
          %s461 = scalar_lea.vmem %s0, %s460
          // Predicated region
          $region81: #{forward.1} parent=79 // pred_check
            _
          $region82: #{forward.1} parent=79 // pred_check_branch
            %463 = sbr.rel (0) target = $region84
          $region83: #{forward.1} parent=79 // pred_region
            // Predicated region
            $region85: #{forward.1} parent=83 // pred_check
              _
            $region86: #{forward.1} parent=83 // pred_check_branch
              %465 = sbr.rel (0) target = $region88
            $region87: #{forward.1} parent=83 // pred_region
              // Predicated region
              $region100: #{forward.1} parent=87 // pred_check
                _
              $region101: #{forward.1} parent=87 // pred_check_branch
                %484 = sbr.rel (0) target = $region103
              $region102: #{forward.1} parent=87 // pred_region
                loop: start=0, step=1, limit=1
                $region104: #{forward.1} parent=102 // loop_pre_header
                  _
                $region105: #{forward.1} parent=102 // loop_header
                  %s486 = sphi 0, %s490
                  %p487 = scmp.ge.s32.totalorder %s486, 1
                  %s491 = sphi %s461, %s461
                  %s492 = sphi %s459, %s459
                $region106: #{forward.1} parent=102 // loop_header_branch
                  %489 = sbr.rel (%p487) target = $region110
                $region107: #{forward.1} parent=102 // loop_body
                  %v493 = vld [vmem:[%s491] sm:$0xff]
                  %494 = vst [vmem:[%s492] sm:$0xff] %v493
                  %v495 = vld [vmem:[%s491 + $0x10] sm:$0xff]
                  %496 = vst [vmem:[%s492 + $0x8] sm:$0xff] %v495
                  %v497 = vld [vmem:[%s491 + $0x20] sm:$0xff]
                  %498 = vst [vmem:[%s492 + $0x10] sm:$0xff] %v497
                $region108: #{forward.1} parent=102 // loop_footer
                  %s490 = sadd.s32 1, %s486
                $region109: #{forward.1} parent=102 // loop_footer_branch
                  %485 = sbr.rel target = $region105
                $region110: #{forward.1} parent=102 // loop_exit
                  _
              $region103: #{forward.1} parent=87 // pred_fallthru
                _
              // Predicated region
              $region111: #{forward.1} parent=87 // pred_check
                _
              $region112: #{forward.1} parent=87 // pred_check_branch
                %500 = sbr.rel target = $region114
              $region113: #{forward.1} parent=87 // pred_region
                _
              $region114: #{forward.1} parent=87 // pred_fallthru
                _
            $region88: #{forward.1} parent=83 // pred_fallthru
              _
            // Predicated region
            $region89: #{forward.1} parent=83 // pred_check
              _
            $region90: #{forward.1} parent=83 // pred_check_branch
              %467 = sbr.rel target = $region92
            $region91: #{forward.1} parent=83 // pred_region
              loop: start=0, step=1, limit=1
              $region93: #{forward.1} parent=91 // loop_pre_header
                _
              $region94: #{forward.1} parent=91 // loop_header
                %s470 = sphi 0, %s474
                %p471 = scmp.ge.s32.totalorder %s470, 1
                %s475 = sphi %s461, %s461
                %s476 = sphi %s459, %s459
              $region95: #{forward.1} parent=91 // loop_header_branch
                %473 = sbr.rel (%p471) target = $region99
              $region96: #{forward.1} parent=91 // loop_body
                %v477 = vld [vmem:[%s475] sm:$0xff]
                %478 = vst [vmem:[%s476] sm:$0xff] %v477
                %v479 = vld [vmem:[%s475 + $0x10] sm:$0xff]
                %480 = vst [vmem:[%s476 + $0x8] sm:$0xff] %v479
                %v481 = vld [vmem:[%s475 + $0x20] sm:$0xff]
                %482 = vst [vmem:[%s476 + $0x10] sm:$0xff] %v481
              $region97: #{forward.1} parent=91 // loop_footer
                %s474 = sadd.s32 1, %s470
              $region98: #{forward.1} parent=91 // loop_footer_branch
                %469 = sbr.rel target = $region94
              $region99: #{forward.1} parent=91 // loop_exit
                _
            $region92: #{forward.1} parent=83 // pred_fallthru
              _
          $region84: #{forward.1} parent=79 // pred_fallthru
            _
          %501 = vnop
        $region80: #{forward.1} parent=75 // pred_fallthru
          _
      $region76: #{forward.1} parent=5 // pred_fallthru
        _
      %p502 = scmp.le.s32.totalorder 1, %s22
      %p503 = scmp.lt.s32.totalorder %s22, 3
      %p504 = pnand %p502, %p503
      %p505 = pneg %p504
      // Predicated region
      $region115: #{forward.1} parent=5 // pred_check
        _
      $region116: #{forward.1} parent=5 // pred_check_branch
        %507 = sbr.rel (%p504) target = $region118
      $region117: #{forward.1} parent=5 // pred_region
        %s508 = ssub.s32 %s22, 1
        %s509 = sand.u32 %s35, 1
        %s510 = sand.u32 %s35, 1
        %s511 = smul.addr %s510, 24
        %s512 = scalar_lea.vmem [#allocation2], %s511
        // Predicated region
        $region119: #{forward.1} parent=117 // pred_check
          %p513 = pneg %p48
        $region120: #{forward.1} parent=117 // pred_check_branch
          %515 = sbr.rel (%p513) target = $region122
        $region121: #{forward.1} parent=117 // pred_region
          _
        $region122: #{forward.1} parent=117 // pred_fallthru
          _
        %s516 = sand.u32 %s35, 1
        %s517 = sand.u32 %s35, 1
        %s518 = smul.addr %s517, 24
        %s519 = scalar_lea.vmem [#allocation2], %s518
        %p520 = pneg %p48
        %p521 = pneg %p45
        %p522 = pneg %p69
        %p523 = pneg %p66
        %p524 = pneg %p90
        %p525 = pneg %p87
        %p526 = pneg %p111
        %p527 = pneg %p108
        %p528 = pneg %p132
        %p529 = pneg %p129
        %p530 = pneg %p153
        %p531 = pneg %p150
        %p532 = pneg %p174
        %p533 = pneg %p171
        %p534 = pneg %p195
        %p535 = pneg %p192
        %p536 = pneg %p216
        %p537 = pneg %p213
        %p538 = pneg %p237
        %p539 = pneg %p234
        %p540 = pneg %p258
        %p541 = pneg %p255
        %p542 = pneg %p279
        %p543 = pneg %p276
        %p544 = pneg %p300
        %p545 = pneg %p297
        %p546 = pneg %p321
        %p547 = pneg %p318
        %p548 = pneg %p342
        %p549 = pneg %p339
        %p550 = pneg %p363
        %p551 = pneg %p360
        %p552 = pneg %p389
        %p553 = pneg %p386
        %p554 = scmp.lt.s32.totalorder %s27, 1
        %s555 = scalar_select %p554, %s27, 1
        %s556 = smul.addr %s555, 2
        %s557 = scalar_lea.vmem %s16, %s556
        %p558 = scmp.lt.s32.totalorder %s27, 1
        %s559 = scalar_select %p558, %s27, 1
        %s560 = smul.addr %s559, 2
        %s561 = scalar_lea.vmem %s16, %s560
        %v563 = vlaneseq
        %v564 = vand.u32 %v563, 127
        %v565 = vand.u32 %v564, 7
        %v566 = vld [vmem:[%s512] sm:$0xff]
        %v567 = vld [vmem:[%s512 + $0x8] sm:$0xff]
        %v568 = vld [vmem:[%s512 + $0x10] sm:$0xff]
        %v569 = vpack.c.bf16 %v567, %v566
        %v570 = vpack.c.bf16 %v568, %v568
        %v571 = vld [vmem:[%s2] sm:$0xf]
        %v572 = vld [vmem:[%s2 + $0x4] sm:$0xf]
        %v573 = vld [vmem:[%s3] sm:$0xff]
        %v574 = vld [vmem:[%s3 + $0x8] sm:$0xff]
        %576 = vset.pattern.permute.xlu0 0
        %577 = vperm.xlu0 %576, %v573
        %v578 = vpop.permute.xlu0 %577
        %581 = vset.pattern.permute.xlu0 0
        %582 = vperm.xlu0 %581, %v574
        %v583 = vpop.permute.xlu0 %582
        %v587 = vunpack.c.l.b16 %v571
        %v588 = vunpack.c.l.b16 %v572
        %v589 = vpack.c.b16 %v588, %v587
        %vm590 = vcmask 195584
        %v592 = vsel %vm590, %v589, 0
        %vm594 = vcmask 1043456
        %v596 = vsel %vm594, %v570, 0
        %598 = vmatprep.subr.bf16.mxu0 0
        %599 = vmatpush1.bf16.msra.mxu0 %v569
        %600 = vmatprep.subr.bf16.mxu0 0
        %601 = vmatpush1.bf16.msra.mxu0 %v596
        %602 = vmatprep.subr.bf16.mxu0 0
        %603 = vmatpush1.bf16.msra.mxu0 0
        %604 = vmatprep.subr.bf16.mxu0 0
        %605 = vmatpush1.bf16.msra.mxu0 0
        %606 = vmatprep.subr.bf16.mxu0 0
        %607 = vmatpush1.bf16.msra.mxu0 0
        %608 = vmatprep.subr.bf16.mxu0 0
        %609 = vmatpush1.bf16.msra.mxu0 0
        %610 = vmatprep.subr.bf16.mxu0 0
        %611 = vmatpush1.bf16.msra.mxu0 0
        %612 = vmatprep.subr.bf16.mxu0 0
        %613 = vmatpush1.bf16.msra.mxu0 0
        %614 = vmatprep.subr.bf16.mxu0 0
        %615 = vmatpush1.bf16.msra.mxu0 0
        %616 = vmatprep.subr.bf16.mxu0 0
        %617 = vmatpush1.bf16.msra.mxu0 0
        %618 = vmatprep.subr.bf16.mxu0 0
        %619 = vmatpush1.bf16.msra.mxu0 0
        %620 = vmatprep.subr.bf16.mxu0 0
        %621 = vmatpush1.bf16.msra.mxu0 0
        %622 = vmatprep.subr.bf16.mxu0 0
        %623 = vmatpush1.bf16.msra.mxu0 0
        %624 = vmatprep.subr.bf16.mxu0 0
        %625 = vmatpush1.bf16.msra.mxu0 0
        %626 = vmatprep.subr.bf16.mxu0 0
        %627 = vmatpush1.bf16.msra.mxu0 0
        %628 = vmatprep.subr.bf16.mxu0 0
        %629 = vmatpush1.bf16.msra.mxu0 0
        %630 = vmatprep.mubr.bf16.mxu0 0
        %631 = vmatmul.mubr.bf16.gmra.mrb[0].mxu0 %v592
        %v632 = vpop.f32.mrb[0].mxu0
        %v633 = vadd.f32 %v578, %v632
        %v634 = vpop.f32.mrb[0].mxu0
        %v635 = vpop.f32.mrb[0].mxu0
        %v636 = vadd.f32 %v583, %v635
        %v637 = vpop.f32.mrb[0].mxu0
        %638 = vdwg.mxu0
        %v639 = vld [vmem:[%s1] sm:$0xff]
        %v640 = vld [vmem:[%s1 + $0x8] sm:$0xff]
        %v641 = vld [vmem:[%s1 + $0x10] sm:$0xff]
        %v642 = vld [vmem:[%s1 + $0x18] sm:$0xff]
        %v643 = vld [vmem:[%s1 + $0x20] sm:$0xff]
        %v644 = vld [vmem:[%s1 + $0x28] sm:$0xff]
        %v645 = vld [vmem:[%s1 + $0x30] sm:$0xff]
        %v646 = vld [vmem:[%s1 + $0x38] sm:$0xff]
        %v647 = vld [vmem:[%s1 + $0x40] sm:$0xff]
        %v648 = vld [vmem:[%s1 + $0x48] sm:$0xff]
        %v649 = vld [vmem:[%s1 + $0x50] sm:$0xff]
        %v650 = vld [vmem:[%s1 + $0x58] sm:$0xff]
        %v651 = vld [vmem:[%s1 + $0x60] sm:$0xff]
        %v652 = vld [vmem:[%s1 + $0x68] sm:$0xff]
        %v653 = vld [vmem:[%s1 + $0x70] sm:$0xff]
        %v654 = vld [vmem:[%s1 + $0x78] sm:$0xff]
        %655 = vrot.lane.b32.xlu0 %v633, 4
        %v656 = vpop.permute.xlu0 %655
        %657 = vrot.lane.b32.xlu0 %v636, 4
        %v658 = vpop.permute.xlu0 %657
        %v659 = vadd.s32 %v565, 4294967292
        %vm660 = vcmp.ge.s32.totalorder %v659, 0
        %vm661 = vcmp.lt.s32.totalorder %v659, 8
        %vm662 = vmand %vm660, %vm661
        %v663 = vsel %vm662, %v656, 0.0
        %v664 = vsel %vm662, %v658, 0.0
        %665 = vrot.lane.b32.xlu0 %v633, 2
        %v666 = vpop.permute.xlu0 %665
        %667 = vrot.lane.b32.xlu0 %v636, 2
        %v668 = vpop.permute.xlu0 %667
        %v669 = vadd.s32 %v565, 4294967294
        %vm670 = vcmp.ge.s32.totalorder %v669, 0
        %vm671 = vcmp.lt.s32.totalorder %v669, 8
        %vm672 = vmand %vm670, %vm671
        %v673 = vsel %vm672, %v666, 0.0
        %v674 = vsel %vm672, %v668, 0.0
        %675 = vrot.lane.b32.xlu0 %v633, 126
        %v676 = vpop.permute.xlu0 %675
        %677 = vrot.lane.b32.xlu0 %v636, 126
        %v678 = vpop.permute.xlu0 %677
        %v679 = vadd.s32 %v565, 2
        %vm680 = vcmp.ge.s32.totalorder %v679, 0
        %vm681 = vcmp.lt.s32.totalorder %v679, 8
        %vm682 = vmand %vm680, %vm681
        %v683 = vsel %vm682, %v676, 0.0
        %v684 = vsel %vm682, %v678, 0.0
        %685 = vrot.lane.b32.xlu0 %v633, 124
        %v686 = vpop.permute.xlu0 %685
        %687 = vrot.lane.b32.xlu0 %v636, 124
        %v688 = vpop.permute.xlu0 %687
        %v689 = vadd.s32 %v565, 4
        %vm690 = vcmp.ge.s32.totalorder %v689, 0
        %vm691 = vcmp.lt.s32.totalorder %v689, 8
        %vm692 = vmand %vm690, %vm691
        %v693 = vsel %vm692, %v686, 0.0
        %v694 = vsel %vm692, %v688, 0.0
        %v695 = vpack.c.bf16 %v664, %v663
        %v696 = vpack.c.bf16 %v674, %v673
        %v697 = vpack.c.bf16 %v636, %v633
        %v698 = vpack.c.bf16 %v684, %v683
        %v699 = vpack.c.bf16 %v694, %v693
        %v700 = vld [vmem:[%s4] sm:$0xf]
        %v701 = vld [vmem:[%s4 + $0x4] sm:$0xf]
        %v702 = vld [vmem:[%s4 + $0x8] sm:$0xf]
        %v703 = vld [vmem:[%s4 + $0xc] sm:$0xf]
        %v704 = vld [vmem:[%s4 + $0x10] sm:$0xf]
        %v705 = vld [vmem:[%s4 + $0x14] sm:$0xf]
        %v706 = vld [vmem:[%s4 + $0x18] sm:$0xf]
        %v707 = vld [vmem:[%s4 + $0x1c] sm:$0xf]
        %v708 = vld [vmem:[%s4 + $0x20] sm:$0xf]
        %v709 = vld [vmem:[%s4 + $0x24] sm:$0xf]
        %v710 = vld [vmem:[%s4 + $0x28] sm:$0xf]
        %v711 = vld [vmem:[%s4 + $0x2c] sm:$0xf]
        %v712 = vld [vmem:[%s4 + $0x30] sm:$0xf]
        %v713 = vld [vmem:[%s4 + $0x34] sm:$0xf]
        %v714 = vld [vmem:[%s4 + $0x38] sm:$0xf]
        %v715 = vld [vmem:[%s4 + $0x3c] sm:$0xf]
        %v716 = vld [vmem:[%s5] sm:$0xff]
        %v717 = vld [vmem:[%s5 + $0x8] sm:$0xff]
        %v718 = vld [vmem:[%s5 + $0x10] sm:$0xff]
        %v719 = vld [vmem:[%s5 + $0x18] sm:$0xff]
        %v720 = vld [vmem:[%s5 + $0x20] sm:$0xff]
        %v721 = vld [vmem:[%s5 + $0x28] sm:$0xff]
        %v722 = vld [vmem:[%s5 + $0x30] sm:$0xff]
        %v723 = vld [vmem:[%s5 + $0x38] sm:$0xff]
        %v724 = vld [vmem:[%s5 + $0x40] sm:$0xff]
        %v725 = vld [vmem:[%s5 + $0x48] sm:$0xff]
        %v726 = vld [vmem:[%s5 + $0x50] sm:$0xff]
        %v727 = vld [vmem:[%s5 + $0x58] sm:$0xff]
        %v728 = vld [vmem:[%s5 + $0x60] sm:$0xff]
        %v729 = vld [vmem:[%s5 + $0x68] sm:$0xff]
        %v730 = vld [vmem:[%s5 + $0x70] sm:$0xff]
        %v731 = vld [vmem:[%s5 + $0x78] sm:$0xff]
        %733 = vset.pattern.permute.xlu0 0
        %734 = vperm.xlu0 %733, %v716
        %v735 = vpop.permute.xlu0 %734
        %738 = vset.pattern.permute.xlu0 0
        %739 = vperm.xlu0 %738, %v717
        %v740 = vpop.permute.xlu0 %739
        %743 = vset.pattern.permute.xlu0 0
        %744 = vperm.xlu0 %743, %v718
        %v745 = vpop.permute.xlu0 %744
        %748 = vset.pattern.permute.xlu0 0
        %749 = vperm.xlu0 %748, %v719
        %v750 = vpop.permute.xlu0 %749
        %753 = vset.pattern.permute.xlu0 0
        %754 = vperm.xlu0 %753, %v720
        %v755 = vpop.permute.xlu0 %754
        %758 = vset.pattern.permute.xlu0 0
        %759 = vperm.xlu0 %758, %v721
        %v760 = vpop.permute.xlu0 %759
        %763 = vset.pattern.permute.xlu0 0
        %764 = vperm.xlu0 %763, %v722
        %v765 = vpop.permute.xlu0 %764
        %768 = vset.pattern.permute.xlu0 0
        %769 = vperm.xlu0 %768, %v723
        %v770 = vpop.permute.xlu0 %769
        %773 = vset.pattern.permute.xlu0 0
        %774 = vperm.xlu0 %773, %v724
        %v775 = vpop.permute.xlu0 %774
        %778 = vset.pattern.permute.xlu0 0
        %779 = vperm.xlu0 %778, %v725
        %v780 = vpop.permute.xlu0 %779
        %783 = vset.pattern.permute.xlu0 0
        %784 = vperm.xlu0 %783, %v726
        %v785 = vpop.permute.xlu0 %784
        %788 = vset.pattern.permute.xlu0 0
        %789 = vperm.xlu0 %788, %v727
        %v790 = vpop.permute.xlu0 %789
        %793 = vset.pattern.permute.xlu0 0
        %794 = vperm.xlu0 %793, %v728
        %v795 = vpop.permute.xlu0 %794
        %798 = vset.pattern.permute.xlu0 0
        %799 = vperm.xlu0 %798, %v729
        %v800 = vpop.permute.xlu0 %799
        %803 = vset.pattern.permute.xlu0 0
        %804 = vperm.xlu0 %803, %v730
        %v805 = vpop.permute.xlu0 %804
        %808 = vset.pattern.permute.xlu0 0
        %809 = vperm.xlu0 %808, %v731
        %v810 = vpop.permute.xlu0 %809
        %v828 = vunpack.c.l.b16 %v700
        %v829 = vunpack.c.l.b16 %v701
        %v830 = vunpack.c.l.b16 %v702
        %v831 = vunpack.c.l.b16 %v703
        %v832 = vunpack.c.l.b16 %v704
        %v833 = vunpack.c.l.b16 %v705
        %v834 = vunpack.c.l.b16 %v706
        %v835 = vunpack.c.l.b16 %v707
        %v836 = vunpack.c.l.b16 %v708
        %v837 = vunpack.c.l.b16 %v709
        %v838 = vunpack.c.l.b16 %v710
        %v839 = vunpack.c.l.b16 %v711
        %v840 = vunpack.c.l.b16 %v712
        %v841 = vunpack.c.l.b16 %v713
        %v842 = vunpack.c.l.b16 %v714
        %v843 = vunpack.c.l.b16 %v715
        %v844 = vpack.c.b16 %v829, %v828
        %v845 = vpack.c.b16 %v831, %v830
        %v846 = vpack.c.b16 %v833, %v832
        %v847 = vpack.c.b16 %v835, %v834
        %v848 = vpack.c.b16 %v837, %v836
        %v849 = vpack.c.b16 %v839, %v838
        %v850 = vpack.c.b16 %v841, %v840
        %v851 = vpack.c.b16 %v843, %v842
        %860 = vmatprep.subr.bf16.mxu0 0
        %861 = vmatpush1.bf16.msra.mxu0 %v695
        %862 = vmatprep.subr.bf16.mxu0 0
        %863 = vmatpush1.bf16.msra.mxu0 %v696
        %864 = vmatprep.subr.bf16.mxu0 0
        %865 = vmatpush1.bf16.msra.mxu0 %v697
        %866 = vmatprep.subr.bf16.mxu0 0
        %867 = vmatpush1.bf16.msra.mxu0 %v698
        %868 = vmatprep.subr.bf16.mxu0 0
        %869 = vmatpush1.bf16.msra.mxu0 %v699
        %870 = vmatprep.subr.bf16.mxu0 0
        %871 = vmatpush1.bf16.msra.mxu0 0
        %872 = vmatprep.subr.bf16.mxu0 0
        %873 = vmatpush1.bf16.msra.mxu0 0
        %874 = vmatprep.subr.bf16.mxu0 0
        %875 = vmatpush1.bf16.msra.mxu0 0
        %876 = vmatprep.subr.bf16.mxu0 0
        %877 = vmatpush1.bf16.msra.mxu0 0
        %878 = vmatprep.subr.bf16.mxu0 0
        %879 = vmatpush1.bf16.msra.mxu0 0
        %880 = vmatprep.subr.bf16.mxu0 0
        %881 = vmatpush1.bf16.msra.mxu0 0
        %882 = vmatprep.subr.bf16.mxu0 0
        %883 = vmatpush1.bf16.msra.mxu0 0
        %884 = vmatprep.subr.bf16.mxu0 0
        %885 = vmatpush1.bf16.msra.mxu0 0
        %886 = vmatprep.subr.bf16.mxu0 0
        %887 = vmatpush1.bf16.msra.mxu0 0
        %888 = vmatprep.subr.bf16.mxu0 0
        %889 = vmatpush1.bf16.msra.mxu0 0
        %890 = vmatprep.subr.bf16.mxu0 0
        %891 = vmatpush1.bf16.msra.mxu0 0
        %892 = vmatprep.mubr.bf16.mxu0 0
        %893 = vmatmul.mubr.bf16.gmra.mrb[0].mxu0 %v844
        %v894 = vpop.f32.mrb[0].mxu0
        %v895 = vadd.f32 %v735, %v894
        %v896 = vpop.f32.mrb[0].mxu0
        %v897 = vpop.f32.mrb[0].mxu0
        %v898 = vadd.f32 %v740, %v897
        %v899 = vpop.f32.mrb[0].mxu0
        %900 = vmatprep.mubr.bf16.mxu0 0
        %901 = vmatmul.mubr.bf16.gmra.mrb[0].mxu0 %v845
        %v902 = vpop.f32.mrb[0].mxu0
        %v903 = vadd.f32 %v745, %v902
        %v904 = vpop.f32.mrb[0].mxu0
        %v905 = vpop.f32.mrb[0].mxu0
        %v906 = vadd.f32 %v750, %v905
        %v907 = vpop.f32.mrb[0].mxu0
        %908 = vmatprep.mubr.bf16.mxu0 0
        %909 = vmatmul.mubr.bf16.gmra.mrb[0].mxu0 %v846
        %v910 = vpop.f32.mrb[0].mxu0
        %v911 = vadd.f32 %v755, %v910
        %v912 = vpop.f32.mrb[0].mxu0
        %v913 = vpop.f32.mrb[0].mxu0
        %v914 = vadd.f32 %v760, %v913
        %v915 = vpop.f32.mrb[0].mxu0
        %916 = vmatprep.mubr.bf16.mxu0 0
        %917 = vmatmul.mubr.bf16.gmra.mrb[0].mxu0 %v847
        %v918 = vpop.f32.mrb[0].mxu0
        %v919 = vadd.f32 %v765, %v918
        %v920 = vpop.f32.mrb[0].mxu0
        %v921 = vpop.f32.mrb[0].mxu0
        %v922 = vadd.f32 %v770, %v921
        %v923 = vpop.f32.mrb[0].mxu0
        %924 = vmatprep.mubr.bf16.mxu0 0
        %925 = vmatmul.mubr.bf16.gmra.mrb[0].mxu0 %v848
        %v926 = vpop.f32.mrb[0].mxu0
        %v927 = vadd.f32 %v775, %v926
        %v928 = vpop.f32.mrb[0].mxu0
        %v929 = vpop.f32.mrb[0].mxu0
        %v930 = vadd.f32 %v780, %v929
        %v931 = vpop.f32.mrb[0].mxu0
        %932 = vmatprep.mubr.bf16.mxu0 0
        %933 = vmatmul.mubr.bf16.gmra.mrb[0].mxu0 %v849
        %v934 = vpop.f32.mrb[0].mxu0
        %v935 = vadd.f32 %v785, %v934
        %v936 = vpop.f32.mrb[0].mxu0
        %v937 = vpop.f32.mrb[0].mxu0
        %v938 = vadd.f32 %v790, %v937
        %v939 = vpop.f32.mrb[0].mxu0
        %940 = vmatprep.mubr.bf16.mxu0 0
        %941 = vmatmul.mubr.bf16.gmra.mrb[0].mxu0 %v850
        %v942 = vpop.f32.mrb[0].mxu0
        %v943 = vadd.f32 %v795, %v942
        %v944 = vpop.f32.mrb[0].mxu0
        %v945 = vpop.f32.mrb[0].mxu0
        %v946 = vadd.f32 %v800, %v945
        %v947 = vpop.f32.mrb[0].mxu0
        %948 = vmatprep.mubr.bf16.mxu0 0
        %949 = vmatmul.mubr.bf16.gmra.mrb[0].mxu0 %v851
        %v950 = vpop.f32.mrb[0].mxu0
        %v951 = vadd.f32 %v805, %v950
        %v952 = vpop.f32.mrb[0].mxu0
        %v953 = vpop.f32.mrb[0].mxu0
        %v954 = vadd.f32 %v810, %v953
        %v955 = vpop.f32.mrb[0].mxu0
        %956 = vdwg.mxu0
        %v957 = vtanh.pop %v895
        %v958 = vtanh.pop %v898
        %v959 = vtanh.pop %v903
        %v960 = vtanh.pop %v906
        %v961 = vtanh.pop %v911
        %v962 = vtanh.pop %v914
        %v963 = vtanh.pop %v919
        %v964 = vtanh.pop %v922
        %v965 = vxor.u32 %v927, 2147483648
        %v966 = vxor.u32 %v930, 2147483648
        %v967 = vxor.u32 %v935, 2147483648
        %v968 = vxor.u32 %v938, 2147483648
        %v969 = vxor.u32 %v943, 2147483648
        %v970 = vxor.u32 %v946, 2147483648
        %v971 = vxor.u32 %v951, 2147483648
        %v972 = vxor.u32 %v954, 2147483648
        %v973 = vmul.f32 %v965, 1.442695
        %v974 = vpow.pop %v973
        %v975 = vmul.f32 %v966, 1.442695
        %v976 = vpow.pop %v975
        %v977 = vmul.f32 %v967, 1.442695
        %v978 = vpow.pop %v977
        %v979 = vmul.f32 %v968, 1.442695
        %v980 = vpow.pop %v979
        %v981 = vmul.f32 %v969, 1.442695
        %v982 = vpow.pop %v981
        %v983 = vmul.f32 %v970, 1.442695
        %v984 = vpow.pop %v983
        %v985 = vmul.f32 %v971, 1.442695
        %v986 = vpow.pop %v985
        %v987 = vmul.f32 %v972, 1.442695
        %v988 = vpow.pop %v987
        %v989 = vadd.f32 %v974, 1.0
        %v990 = vadd.f32 %v976, 1.0
        %v991 = vadd.f32 %v978, 1.0
        %v992 = vadd.f32 %v980, 1.0
        %v993 = vadd.f32 %v982, 1.0
        %v994 = vadd.f32 %v984, 1.0
        %v995 = vadd.f32 %v986, 1.0
        %v996 = vadd.f32 %v988, 1.0
        %v997 = vrcp.pop %v989
        %v998 = vmul.f32 1.0, %v997
        %v999 = vrcp.pop %v990
        %v1000 = vmul.f32 1.0, %v999
        %v1001 = vrcp.pop %v991
        %v1002 = vmul.f32 1.0, %v1001
        %v1003 = vrcp.pop %v992
        %v1004 = vmul.f32 1.0, %v1003
        %v1005 = vrcp.pop %v993
        %v1006 = vmul.f32 1.0, %v1005
        %v1007 = vrcp.pop %v994
        %v1008 = vmul.f32 1.0, %v1007
        %v1009 = vrcp.pop %v995
        %v1010 = vmul.f32 1.0, %v1009
        %v1011 = vrcp.pop %v996
        %v1012 = vmul.f32 1.0, %v1011
        %v1013 = vmul.f32 %v957, %v998
        %v1014 = vmul.f32 %v958, %v1000
        %v1015 = vmul.f32 %v959, %v1002
        %v1016 = vmul.f32 %v960, %v1004
        %v1017 = vmul.f32 %v961, %v1006
        %v1018 = vmul.f32 %v962, %v1008
        %v1019 = vmul.f32 %v963, %v1010
        %v1020 = vmul.f32 %v964, %v1012
        %v1021 = vadd.f32 %v1013, %v1015
        %v1022 = vadd.f32 %v1014, %v1016
        %v1023 = vadd.f32 %v1021, %v1017
        %v1024 = vadd.f32 %v1022, %v1018
        %v1025 = vadd.f32 %v1023, %v1019
        %v1026 = vadd.f32 %v1024, %v1020
        %v1027 = vmul.f32 %v1025, 0.25
        %v1028 = vmul.f32 %v1026, 0.25
        %v1029 = vpack.c.bf16 %v1028, %v1027
        %v1046 = vunpack.c.l.b16 %v639
        %v1047 = vunpack.c.h.b16 %v639
        %v1048 = vunpack.c.l.b16 %v640
        %v1049 = vunpack.c.h.b16 %v640
        %v1050 = vunpack.c.l.b16 %v641
        %v1051 = vunpack.c.h.b16 %v641
        %v1052 = vunpack.c.l.b16 %v642
        %v1053 = vunpack.c.h.b16 %v642
        %v1054 = vunpack.c.l.b16 %v643
        %v1055 = vunpack.c.h.b16 %v643
        %v1056 = vunpack.c.l.b16 %v644
        %v1057 = vunpack.c.h.b16 %v644
        %v1058 = vunpack.c.l.b16 %v645
        %v1059 = vunpack.c.h.b16 %v645
        %v1060 = vunpack.c.l.b16 %v646
        %v1061 = vunpack.c.h.b16 %v646
        %v1062 = vunpack.c.l.b16 %v647
        %v1063 = vunpack.c.h.b16 %v647
        %v1064 = vunpack.c.l.b16 %v648
        %v1065 = vunpack.c.h.b16 %v648
        %v1066 = vunpack.c.l.b16 %v649
        %v1067 = vunpack.c.h.b16 %v649
        %v1068 = vunpack.c.l.b16 %v650
        %v1069 = vunpack.c.h.b16 %v650
        %v1070 = vunpack.c.l.b16 %v651
        %v1071 = vunpack.c.h.b16 %v651
        %v1072 = vunpack.c.l.b16 %v652
        %v1073 = vunpack.c.h.b16 %v652
        %v1074 = vunpack.c.l.b16 %v653
        %v1075 = vunpack.c.h.b16 %v653
        %v1076 = vunpack.c.l.b16 %v654
        %v1077 = vunpack.c.h.b16 %v654
        %v1078 = vpack.c.b16 %v1048, %v1046
        %v1079 = vpack.c.b16 %v1049, %v1047
        %v1080 = vpack.c.b16 %v1052, %v1050
        %v1081 = vpack.c.b16 %v1053, %v1051
        %v1082 = vpack.c.b16 %v1056, %v1054
        %v1083 = vpack.c.b16 %v1057, %v1055
        %v1084 = vpack.c.b16 %v1060, %v1058
        %v1085 = vpack.c.b16 %v1061, %v1059
        %v1086 = vpack.c.b16 %v1064, %v1062
        %v1087 = vpack.c.b16 %v1065, %v1063
        %v1088 = vpack.c.b16 %v1068, %v1066
        %v1089 = vpack.c.b16 %v1069, %v1067
        %v1090 = vpack.c.b16 %v1072, %v1070
        %v1091 = vpack.c.b16 %v1073, %v1071
        %v1092 = vpack.c.b16 %v1076, %v1074
        %v1093 = vpack.c.b16 %v1077, %v1075
        %1110 = vmatprep.subr.bf16.mxu0 %v1079
        %1111 = vmatpush1.bf16.msra.mxu0 %v1078
        %1112 = vmatprep.subr.bf16.mxu0 %v1081
        %1113 = vmatpush1.bf16.msra.mxu0 %v1080
        %1114 = vmatprep.subr.bf16.mxu0 %v1083
        %1115 = vmatpush1.bf16.msra.mxu0 %v1082
        %1116 = vmatprep.subr.bf16.mxu0 %v1085
        %1117 = vmatpush1.bf16.msra.mxu0 %v1084
        %1118 = vmatprep.subr.bf16.mxu0 %v1087
        %1119 = vmatpush1.bf16.msra.mxu0 %v1086
        %1120 = vmatprep.subr.bf16.mxu0 %v1089
        %1121 = vmatpush1.bf16.msra.mxu0 %v1088
        %1122 = vmatprep.subr.bf16.mxu0 %v1091
        %1123 = vmatpush1.bf16.msra.mxu0 %v1090
        %1124 = vmatprep.subr.bf16.mxu0 %v1093
        %1125 = vmatpush1.bf16.msra.mxu0 %v1092
        %1126 = vmatprep.subr.bf16.mxu0 0
        %1127 = vmatpush1.bf16.msra.mxu0 0
        %1128 = vmatprep.subr.bf16.mxu0 0
        %1129 = vmatpush1.bf16.msra.mxu0 0
        %1130 = vmatprep.subr.bf16.mxu0 0
        %1131 = vmatpush1.bf16.msra.mxu0 0
        %1132 = vmatprep.subr.bf16.mxu0 0
        %1133 = vmatpush1.bf16.msra.mxu0 0
        %1134 = vmatprep.subr.bf16.mxu0 0
        %1135 = vmatpush1.bf16.msra.mxu0 0
        %1136 = vmatprep.subr.bf16.mxu0 0
        %1137 = vmatpush1.bf16.msra.mxu0 0
        %1138 = vmatprep.subr.bf16.mxu0 0
        %1139 = vmatpush1.bf16.msra.mxu0 0
        %1140 = vmatprep.subr.bf16.mxu0 0
        %1141 = vmatpush1.bf16.msra.mxu0 0
        %1142 = vmatprep.mubr.bf16.mxu0 0
        %1143 = vmatmul.mubr.bf16.gmra.mrb[0].mxu0 %v1029
        %v1144 = vpop.f32.mrb[0].mxu0
        %v1145 = vadd.f32 0.0, %v1144
        %v1146 = vpop.f32.mrb[0].mxu0
        %v1147 = vadd.f32 0.0, %v1146
        %v1148 = vpop.f32.mrb[0].mxu0
        %v1149 = vadd.f32 0.0, %v1148
        %v1150 = vpop.f32.mrb[0].mxu0
        %v1151 = vadd.f32 0.0, %v1150
        %1152 = vdwg.mxu0
        %v1153 = vpack.c.bf16 %v1149, %v1145
        %v1154 = vpack.c.bf16 %v1151, %v1147
        %v1155 = vld [vmem:[%s6] sm:$0xf]
        %v1156 = vld [vmem:[%s6 + $0x4] sm:$0xf]
        %v1157 = vld [vmem:[%s6 + $0x8] sm:$0xf]
        %v1158 = vld [vmem:[%s6 + $0xc] sm:$0xf]
        %v1159 = vld [vmem:[%s7] sm:$0xff]
        %v1160 = vld [vmem:[%s7 + $0x8] sm:$0xff]
        %v1161 = vld [vmem:[%s7 + $0x10] sm:$0xff]
        %v1162 = vld [vmem:[%s7 + $0x18] sm:$0xff]
        %1164 = vset.pattern.permute.xlu0 0
        %1165 = vperm.xlu0 %1164, %v1159
        %v1166 = vpop.permute.xlu0 %1165
        %1169 = vset.pattern.permute.xlu0 0
        %1170 = vperm.xlu0 %1169, %v1160
        %v1171 = vpop.permute.xlu0 %1170
        %1174 = vset.pattern.permute.xlu0 0
        %1175 = vperm.xlu0 %1174, %v1161
        %v1176 = vpop.permute.xlu0 %1175
        %1179 = vset.pattern.permute.xlu0 0
        %1180 = vperm.xlu0 %1179, %v1162
        %v1181 = vpop.permute.xlu0 %1180
        %v1187 = vunpack.c.l.b16 %v1155
        %v1188 = vunpack.c.l.b16 %v1156
        %v1189 = vunpack.c.l.b16 %v1157
        %v1190 = vunpack.c.l.b16 %v1158
        %v1191 = vpack.c.b16 %v1188, %v1187
        %v1192 = vpack.c.b16 %v1190, %v1189
        %vm1193 = vcmask 392192
        %v1195 = vsel %vm1193, %v1191, 0
        %v1198 = vsel %vm1193, %v1192, 0
        %1200 = vmatprep.subr.bf16.mxu0 0
        %1201 = vmatpush1.bf16.msra.mxu0 %v1029
        %1202 = vmatprep.subr.bf16.mxu0 0
        %1203 = vmatpush1.bf16.msra.mxu0 %v1153
        %1204 = vmatprep.subr.bf16.mxu0 0
        %1205 = vmatpush1.bf16.msra.mxu0 %v1154
        %1206 = vmatprep.subr.bf16.mxu0 0
        %1207 = vmatpush1.bf16.msra.mxu0 0
        %1208 = vmatprep.subr.bf16.mxu0 0
        %1209 = vmatpush1.bf16.msra.mxu0 0
        %1210 = vmatprep.subr.bf16.mxu0 0
        %1211 = vmatpush1.bf16.msra.mxu0 0
        %1212 = vmatprep.subr.bf16.mxu0 0
        %1213 = vmatpush1.bf16.msra.mxu0 0
        %1214 = vmatprep.subr.bf16.mxu0 0
        %1215 = vmatpush1.bf16.msra.mxu0 0
        %1216 = vmatprep.subr.bf16.mxu0 0
        %1217 = vmatpush1.bf16.msra.mxu0 0
        %1218 = vmatprep.subr.bf16.mxu0 0
        %1219 = vmatpush1.bf16.msra.mxu0 0
        %1220 = vmatprep.subr.bf16.mxu0 0
        %1221 = vmatpush1.bf16.msra.mxu0 0
        %1222 = vmatprep.subr.bf16.mxu0 0
        %1223 = vmatpush1.bf16.msra.mxu0 0
        %1224 = vmatprep.subr.bf16.mxu0 0
        %1225 = vmatpush1.bf16.msra.mxu0 0
        %1226 = vmatprep.subr.bf16.mxu0 0
        %1227 = vmatpush1.bf16.msra.mxu0 0
        %1228 = vmatprep.subr.bf16.mxu0 0
        %1229 = vmatpush1.bf16.msra.mxu0 0
        %1230 = vmatprep.subr.bf16.mxu0 0
        %1231 = vmatpush1.bf16.msra.mxu0 0
        %1232 = vmatprep.mubr.bf16.mxu0 0
        %1233 = vmatmul.mubr.bf16.gmra.mrb[0].mxu0 %v1195
        %v1234 = vpop.f32.mrb[0].mxu0
        %v1235 = vadd.f32 %v1166, %v1234
        %v1236 = vpop.f32.mrb[0].mxu0
        %v1237 = vpop.f32.mrb[0].mxu0
        %v1238 = vadd.f32 %v1171, %v1237
        %v1239 = vpop.f32.mrb[0].mxu0
        %1240 = vmatprep.mubr.bf16.mxu0 0
        %1241 = vmatmul.mubr.bf16.gmra.mrb[0].mxu0 %v1198
        %v1242 = vpop.f32.mrb[0].mxu0
        %v1243 = vadd.f32 %v1176, %v1242
        %v1244 = vpop.f32.mrb[0].mxu0
        %v1245 = vpop.f32.mrb[0].mxu0
        %v1246 = vadd.f32 %v1181, %v1245
        %v1247 = vpop.f32.mrb[0].mxu0
        %1248 = vdwg.mxu0
        %v1249 = vpack.c.bf16 %v1238, %v1235
        %v1250 = vadd.f32 %v1243, %v633
        %v1251 = vadd.f32 %v1246, %v636
        %1252 = vrot.lane.b32.xlu0 %v1250, 4
        %v1253 = vpop.permute.xlu0 %1252
        %1254 = vrot.lane.b32.xlu0 %v1251, 4
        %v1255 = vpop.permute.xlu0 %1254
        %v1256 = vsel %vm662, %v1253, 0.0
        %v1257 = vsel %vm662, %v1255, 0.0
        %1258 = vrot.lane.b32.xlu0 %v1250, 2
        %v1259 = vpop.permute.xlu0 %1258
        %1260 = vrot.lane.b32.xlu0 %v1251, 2
        %v1261 = vpop.permute.xlu0 %1260
        %v1262 = vsel %vm672, %v1259, 0.0
        %v1263 = vsel %vm672, %v1261, 0.0
        %1264 = vrot.lane.b32.xlu0 %v1250, 126
        %v1265 = vpop.permute.xlu0 %1264
        %1266 = vrot.lane.b32.xlu0 %v1251, 126
        %v1267 = vpop.permute.xlu0 %1266
        %v1268 = vsel %vm682, %v1265, 0.0
        %v1269 = vsel %vm682, %v1267, 0.0
        %1270 = vrot.lane.b32.xlu0 %v1250, 124
        %v1271 = vpop.permute.xlu0 %1270
        %1272 = vrot.lane.b32.xlu0 %v1251, 124
        %v1273 = vpop.permute.xlu0 %1272
        %v1274 = vsel %vm692, %v1271, 0.0
        %v1275 = vsel %vm692, %v1273, 0.0
        %v1276 = vpack.c.bf16 %v1257, %v1256
        %v1277 = vpack.c.bf16 %v1263, %v1262
        %v1278 = vpack.c.bf16 %v1251, %v1250
        %v1279 = vpack.c.bf16 %v1269, %v1268
        %v1280 = vpack.c.bf16 %v1275, %v1274
        %s1281 = scalar_lea.vmem %s4, 64
        %v1282 = vld [vmem:[%s1281] sm:$0xf]
        %v1283 = vld [vmem:[%s1281 + $0x4] sm:$0xf]
        %v1284 = vld [vmem:[%s1281 + $0x8] sm:$0xf]
        %v1285 = vld [vmem:[%s1281 + $0xc] sm:$0xf]
        %v1286 = vld [vmem:[%s1281 + $0x10] sm:$0xf]
        %v1287 = vld [vmem:[%s1281 + $0x14] sm:$0xf]
        %v1288 = vld [vmem:[%s1281 + $0x18] sm:$0xf]
        %v1289 = vld [vmem:[%s1281 + $0x1c] sm:$0xf]
        %v1290 = vld [vmem:[%s1281 + $0x20] sm:$0xf]
        %v1291 = vld [vmem:[%s1281 + $0x24] sm:$0xf]
        %v1292 = vld [vmem:[%s1281 + $0x28] sm:$0xf]
        %v1293 = vld [vmem:[%s1281 + $0x2c] sm:$0xf]
        %v1294 = vld [vmem:[%s1281 + $0x30] sm:$0xf]
        %v1295 = vld [vmem:[%s1281 + $0x34] sm:$0xf]
        %v1296 = vld [vmem:[%s1281 + $0x38] sm:$0xf]
        %v1297 = vld [vmem:[%s1281 + $0x3c] sm:$0xf]
        %s1298 = scalar_lea.vmem %s5, 128
        %v1299 = vld [vmem:[%s1298] sm:$0xff]
        %v1300 = vld [vmem:[%s1298 + $0x8] sm:$0xff]
        %v1301 = vld [vmem:[%s1298 + $0x10] sm:$0xff]
        %v1302 = vld [vmem:[%s1298 + $0x18] sm:$0xff]
        %v1303 = vld [vmem:[%s1298 + $0x20] sm:$0xff]
        %v1304 = vld [vmem:[%s1298 + $0x28] sm:$0xff]
        %v1305 = vld [vmem:[%s1298 + $0x30] sm:$0xff]
        %v1306 = vld [vmem:[%s1298 + $0x38] sm:$0xff]
        %v1307 = vld [vmem:[%s1298 + $0x40] sm:$0xff]
        %v1308 = vld [vmem:[%s1298 + $0x48] sm:$0xff]
        %v1309 = vld [vmem:[%s1298 + $0x50] sm:$0xff]
        %v1310 = vld [vmem:[%s1298 + $0x58] sm:$0xff]
        %v1311 = vld [vmem:[%s1298 + $0x60] sm:$0xff]
        %v1312 = vld [vmem:[%s1298 + $0x68] sm:$0xff]
        %v1313 = vld [vmem:[%s1298 + $0x70] sm:$0xff]
        %v1314 = vld [vmem:[%s1298 + $0x78] sm:$0xff]
        %1316 = vset.pattern.permute.xlu0 0
        %1317 = vperm.xlu0 %1316, %v1299
        %v1318 = vpop.permute.xlu0 %1317
        %1321 = vset.pattern.permute.xlu0 0
        %1322 = vperm.xlu0 %1321, %v1300
        %v1323 = vpop.permute.xlu0 %1322
        %1326 = vset.pattern.permute.xlu0 0
        %1327 = vperm.xlu0 %1326, %v1301
        %v1328 = vpop.permute.xlu0 %1327
        %1331 = vset.pattern.permute.xlu0 0
        %1332 = vperm.xlu0 %1331, %v1302
        %v1333 = vpop.permute.xlu0 %1332
        %1336 = vset.pattern.permute.xlu0 0
        %1337 = vperm.xlu0 %1336, %v1303
        %v1338 = vpop.permute.xlu0 %1337
        %1341 = vset.pattern.permute.xlu0 0
        %1342 = vperm.xlu0 %1341, %v1304
        %v1343 = vpop.permute.xlu0 %1342
        %1346 = vset.pattern.permute.xlu0 0
        %1347 = vperm.xlu0 %1346, %v1305
        %v1348 = vpop.permute.xlu0 %1347
        %1351 = vset.pattern.permute.xlu0 0
        %1352 = vperm.xlu0 %1351, %v1306
        %v1353 = vpop.permute.xlu0 %1352
        %1356 = vset.pattern.permute.xlu0 0
        %1357 = vperm.xlu0 %1356, %v1307
        %v1358 = vpop.permute.xlu0 %1357
        %1361 = vset.pattern.permute.xlu0 0
        %1362 = vperm.xlu0 %1361, %v1308
        %v1363 = vpop.permute.xlu0 %1362
        %1366 = vset.pattern.permute.xlu0 0
        %1367 = vperm.xlu0 %1366, %v1309
        %v1368 = vpop.permute.xlu0 %1367
        %1371 = vset.pattern.permute.xlu0 0
        %1372 = vperm.xlu0 %1371, %v1310
        %v1373 = vpop.permute.xlu0 %1372
        %1376 = vset.pattern.permute.xlu0 0
        %1377 = vperm.xlu0 %1376, %v1311
        %v1378 = vpop.permute.xlu0 %1377
        %1381 = vset.pattern.permute.xlu0 0
        %1382 = vperm.xlu0 %1381, %v1312
        %v1383 = vpop.permute.xlu0 %1382
        %1386 = vset.pattern.permute.xlu0 0
        %1387 = vperm.xlu0 %1386, %v1313
        %v1388 = vpop.permute.xlu0 %1387
        %1391 = vset.pattern.permute.xlu0 0
        %1392 = vperm.xlu0 %1391, %v1314
        %v1393 = vpop.permute.xlu0 %1392
        %v1411 = vunpack.c.l.b16 %v1282
        %v1412 = vunpack.c.l.b16 %v1283
        %v1413 = vunpack.c.l.b16 %v1284
        %v1414 = vunpack.c.l.b16 %v1285
        %v1415 = vunpack.c.l.b16 %v1286
        %v1416 = vunpack.c.l.b16 %v1287
        %v1417 = vunpack.c.l.b16 %v1288
        %v1418 = vunpack.c.l.b16 %v1289
        %v1419 = vunpack.c.l.b16 %v1290
        %v1420 = vunpack.c.l.b16 %v1291
        %v1421 = vunpack.c.l.b16 %v1292
        %v1422 = vunpack.c.l.b16 %v1293
        %v1423 = vunpack.c.l.b16 %v1294
        %v1424 = vunpack.c.l.b16 %v1295
        %v1425 = vunpack.c.l.b16 %v1296
        %v1426 = vunpack.c.l.b16 %v1297
        %v1427 = vpack.c.b16 %v1412, %v1411
        %v1428 = vpack.c.b16 %v1414, %v1413
        %v1429 = vpack.c.b16 %v1416, %v1415
        %v1430 = vpack.c.b16 %v1418, %v1417
        %v1431 = vpack.c.b16 %v1420, %v1419
        %v1432 = vpack.c.b16 %v1422, %v1421
        %v1433 = vpack.c.b16 %v1424, %v1423
        %v1434 = vpack.c.b16 %v1426, %v1425
        %1443 = vmatprep.subr.bf16.mxu0 0
        %1444 = vmatpush1.bf16.msra.mxu0 %v1276
        %1445 = vmatprep.subr.bf16.mxu0 0
        %1446 = vmatpush1.bf16.msra.mxu0 %v1277
        %1447 = vmatprep.subr.bf16.mxu0 0
        %1448 = vmatpush1.bf16.msra.mxu0 %v1278
        %1449 = vmatprep.subr.bf16.mxu0 0
        %1450 = vmatpush1.bf16.msra.mxu0 %v1279
        %1451 = vmatprep.subr.bf16.mxu0 0
        %1452 = vmatpush1.bf16.msra.mxu0 %v1280
        %1453 = vmatprep.subr.bf16.mxu0 0
        %1454 = vmatpush1.bf16.msra.mxu0 0
        %1455 = vmatprep.subr.bf16.mxu0 0
        %1456 = vmatpush1.bf16.msra.mxu0 0
        %1457 = vmatprep.subr.bf16.mxu0 0
        %1458 = vmatpush1.bf16.msra.mxu0 0
        %1459 = vmatprep.subr.bf16.mxu0 0
        %1460 = vmatpush1.bf16.msra.mxu0 0
        %1461 = vmatprep.subr.bf16.mxu0 0
        %1462 = vmatpush1.bf16.msra.mxu0 0
        %1463 = vmatprep.subr.bf16.mxu0 0
        %1464 = vmatpush1.bf16.msra.mxu0 0
        %1465 = vmatprep.subr.bf16.mxu0 0
        %1466 = vmatpush1.bf16.msra.mxu0 0
        %1467 = vmatprep.subr.bf16.mxu0 0
        %1468 = vmatpush1.bf16.msra.mxu0 0
        %1469 = vmatprep.subr.bf16.mxu0 0
        %1470 = vmatpush1.bf16.msra.mxu0 0
        %1471 = vmatprep.subr.bf16.mxu0 0
        %1472 = vmatpush1.bf16.msra.mxu0 0
        %1473 = vmatprep.subr.bf16.mxu0 0
        %1474 = vmatpush1.bf16.msra.mxu0 0
        %1475 = vmatprep.mubr.bf16.mxu0 0
        %1476 = vmatmul.mubr.bf16.gmra.mrb[0].mxu0 %v1427
        %v1477 = vpop.f32.mrb[0].mxu0
        %v1478 = vadd.f32 %v1318, %v1477
        %v1479 = vpop.f32.mrb[0].mxu0
        %v1480 = vpop.f32.mrb[0].mxu0
        %v1481 = vadd.f32 %v1323, %v1480
        %v1482 = vpop.f32.mrb[0].mxu0
        %1483 = vmatprep.mubr.bf16.mxu0 0
        %1484 = vmatmul.mubr.bf16.gmra.mrb[0].mxu0 %v1428
        %v1485 = vpop.f32.mrb[0].mxu0
        %v1486 = vadd.f32 %v1328, %v1485
        %v1487 = vpop.f32.mrb[0].mxu0
        %v1488 = vpop.f32.mrb[0].mxu0
        %v1489 = vadd.f32 %v1333, %v1488
        %v1490 = vpop.f32.mrb[0].mxu0
        %1491 = vmatprep.mubr.bf16.mxu0 0
        %1492 = vmatmul.mubr.bf16.gmra.mrb[0].mxu0 %v1429
        %v1493 = vpop.f32.mrb[0].mxu0
        %v1494 = vadd.f32 %v1338, %v1493
        %v1495 = vpop.f32.mrb[0].mxu0
        %v1496 = vpop.f32.mrb[0].mxu0
        %v1497 = vadd.f32 %v1343, %v1496
        %v1498 = vpop.f32.mrb[0].mxu0
        %1499 = vmatprep.mubr.bf16.mxu0 0
        %1500 = vmatmul.mubr.bf16.gmra.mrb[0].mxu0 %v1430
        %v1501 = vpop.f32.mrb[0].mxu0
        %v1502 = vadd.f32 %v1348, %v1501
        %v1503 = vpop.f32.mrb[0].mxu0
        %v1504 = vpop.f32.mrb[0].mxu0
        %v1505 = vadd.f32 %v1353, %v1504
        %v1506 = vpop.f32.mrb[0].mxu0
        %1507 = vmatprep.mubr.bf16.mxu0 0
        %1508 = vmatmul.mubr.bf16.gmra.mrb[0].mxu0 %v1431
        %v1509 = vpop.f32.mrb[0].mxu0
        %v1510 = vadd.f32 %v1358, %v1509
        %v1511 = vpop.f32.mrb[0].mxu0
        %v1512 = vpop.f32.mrb[0].mxu0
        %v1513 = vadd.f32 %v1363, %v1512
        %v1514 = vpop.f32.mrb[0].mxu0
        %1515 = vmatprep.mubr.bf16.mxu0 0
        %1516 = vmatmul.mubr.bf16.gmra.mrb[0].mxu0 %v1432
        %v1517 = vpop.f32.mrb[0].mxu0
        %v1518 = vadd.f32 %v1368, %v1517
        %v1519 = vpop.f32.mrb[0].mxu0
        %v1520 = vpop.f32.mrb[0].mxu0
        %v1521 = vadd.f32 %v1373, %v1520
        %v1522 = vpop.f32.mrb[0].mxu0
        %1523 = vmatprep.mubr.bf16.mxu0 0
        %1524 = vmatmul.mubr.bf16.gmra.mrb[0].mxu0 %v1433
        %v1525 = vpop.f32.mrb[0].mxu0
        %v1526 = vadd.f32 %v1378, %v1525
        %v1527 = vpop.f32.mrb[0].mxu0
        %v1528 = vpop.f32.mrb[0].mxu0
        %v1529 = vadd.f32 %v1383, %v1528
        %v1530 = vpop.f32.mrb[0].mxu0
        %1531 = vmatprep.mubr.bf16.mxu0 0
        %1532 = vmatmul.mubr.bf16.gmra.mrb[0].mxu0 %v1434
        %v1533 = vpop.f32.mrb[0].mxu0
        %v1534 = vadd.f32 %v1388, %v1533
        %v1535 = vpop.f32.mrb[0].mxu0
        %v1536 = vpop.f32.mrb[0].mxu0
        %v1537 = vadd.f32 %v1393, %v1536
        %v1538 = vpop.f32.mrb[0].mxu0
        %1539 = vdwg.mxu0
        %v1540 = vtanh.pop %v1478
        %v1541 = vtanh.pop %v1481
        %v1542 = vtanh.pop %v1486
        %v1543 = vtanh.pop %v1489
        %v1544 = vtanh.pop %v1494
        %v1545 = vtanh.pop %v1497
        %v1546 = vtanh.pop %v1502
        %v1547 = vtanh.pop %v1505
        %v1548 = vxor.u32 %v1510, 2147483648
        %v1549 = vxor.u32 %v1513, 2147483648
        %v1550 = vxor.u32 %v1518, 2147483648
        %v1551 = vxor.u32 %v1521, 2147483648
        %v1552 = vxor.u32 %v1526, 2147483648
        %v1553 = vxor.u32 %v1529, 2147483648
        %v1554 = vxor.u32 %v1534, 2147483648
        %v1555 = vxor.u32 %v1537, 2147483648
        %v1556 = vmul.f32 %v1548, 1.442695
        %v1557 = vpow.pop %v1556
        %v1558 = vmul.f32 %v1549, 1.442695
        %v1559 = vpow.pop %v1558
        %v1560 = vmul.f32 %v1550, 1.442695
        %v1561 = vpow.pop %v1560
        %v1562 = vmul.f32 %v1551, 1.442695
        %v1563 = vpow.pop %v1562
        %v1564 = vmul.f32 %v1552, 1.442695
        %v1565 = vpow.pop %v1564
        %v1566 = vmul.f32 %v1553, 1.442695
        %v1567 = vpow.pop %v1566
        %v1568 = vmul.f32 %v1554, 1.442695
        %v1569 = vpow.pop %v1568
        %v1570 = vmul.f32 %v1555, 1.442695
        %v1571 = vpow.pop %v1570
        %v1572 = vadd.f32 %v1557, 1.0
        %v1573 = vadd.f32 %v1559, 1.0
        %v1574 = vadd.f32 %v1561, 1.0
        %v1575 = vadd.f32 %v1563, 1.0
        %v1576 = vadd.f32 %v1565, 1.0
        %v1577 = vadd.f32 %v1567, 1.0
        %v1578 = vadd.f32 %v1569, 1.0
        %v1579 = vadd.f32 %v1571, 1.0
        %v1580 = vrcp.pop %v1572
        %v1581 = vmul.f32 1.0, %v1580
        %v1582 = vrcp.pop %v1573
        %v1583 = vmul.f32 1.0, %v1582
        %v1584 = vrcp.pop %v1574
        %v1585 = vmul.f32 1.0, %v1584
        %v1586 = vrcp.pop %v1575
        %v1587 = vmul.f32 1.0, %v1586
        %v1588 = vrcp.pop %v1576
        %v1589 = vmul.f32 1.0, %v1588
        %v1590 = vrcp.pop %v1577
        %v1591 = vmul.f32 1.0, %v1590
        %v1592 = vrcp.pop %v1578
        %v1593 = vmul.f32 1.0, %v1592
        %v1594 = vrcp.pop %v1579
        %v1595 = vmul.f32 1.0, %v1594
        %v1596 = vmul.f32 %v1540, %v1581
        %v1597 = vmul.f32 %v1541, %v1583
        %v1598 = vmul.f32 %v1542, %v1585
        %v1599 = vmul.f32 %v1543, %v1587
        %v1600 = vmul.f32 %v1544, %v1589
        %v1601 = vmul.f32 %v1545, %v1591
        %v1602 = vmul.f32 %v1546, %v1593
        %v1603 = vmul.f32 %v1547, %v1595
        %v1604 = vadd.f32 %v1596, %v1598
        %v1605 = vadd.f32 %v1597, %v1599
        %v1606 = vadd.f32 %v1604, %v1600
        %v1607 = vadd.f32 %v1605, %v1601
        %v1608 = vadd.f32 %v1606, %v1602
        %v1609 = vadd.f32 %v1607, %v1603
        %v1610 = vmul.f32 %v1608, 0.25
        %v1611 = vmul.f32 %v1609, 0.25
        %v1612 = vpack.c.bf16 %v1611, %v1610
        %1613 = vmatprep.subr.bf16.mxu0 %v1079
        %1614 = vmatpush1.bf16.msra.mxu0 %v1078
        %1615 = vmatprep.subr.bf16.mxu0 %v1081
        %1616 = vmatpush1.bf16.msra.mxu0 %v1080
        %1617 = vmatprep.subr.bf16.mxu0 %v1083
        %1618 = vmatpush1.bf16.msra.mxu0 %v1082
        %1619 = vmatprep.subr.bf16.mxu0 %v1085
        %1620 = vmatpush1.bf16.msra.mxu0 %v1084
        %1621 = vmatprep.subr.bf16.mxu0 %v1087
        %1622 = vmatpush1.bf16.msra.mxu0 %v1086
        %1623 = vmatprep.subr.bf16.mxu0 %v1089
        %1624 = vmatpush1.bf16.msra.mxu0 %v1088
        %1625 = vmatprep.subr.bf16.mxu0 %v1091
        %1626 = vmatpush1.bf16.msra.mxu0 %v1090
        %1627 = vmatprep.subr.bf16.mxu0 %v1093
        %1628 = vmatpush1.bf16.msra.mxu0 %v1092
        %1629 = vmatprep.subr.bf16.mxu0 0
        %1630 = vmatpush1.bf16.msra.mxu0 0
        %1631 = vmatprep.subr.bf16.mxu0 0
        %1632 = vmatpush1.bf16.msra.mxu0 0
        %1633 = vmatprep.subr.bf16.mxu0 0
        %1634 = vmatpush1.bf16.msra.mxu0 0
        %1635 = vmatprep.subr.bf16.mxu0 0
        %1636 = vmatpush1.bf16.msra.mxu0 0
        %1637 = vmatprep.subr.bf16.mxu0 0
        %1638 = vmatpush1.bf16.msra.mxu0 0
        %1639 = vmatprep.subr.bf16.mxu0 0
        %1640 = vmatpush1.bf16.msra.mxu0 0
        %1641 = vmatprep.subr.bf16.mxu0 0
        %1642 = vmatpush1.bf16.msra.mxu0 0
        %1643 = vmatprep.subr.bf16.mxu0 0
        %1644 = vmatpush1.bf16.msra.mxu0 0
        %1645 = vmatprep.mubr.bf16.mxu0 0
        %1646 = vmatmul.mubr.bf16.gmra.mrb[0].mxu0 %v1612
        %v1647 = vpop.f32.mrb[0].mxu0
        %v1648 = vadd.f32 0.0, %v1647
        %v1649 = vpop.f32.mrb[0].mxu0
        %v1650 = vadd.f32 0.0, %v1649
        %v1651 = vpop.f32.mrb[0].mxu0
        %v1652 = vadd.f32 0.0, %v1651
        %v1653 = vpop.f32.mrb[0].mxu0
        %v1654 = vadd.f32 0.0, %v1653
        %1655 = vdwg.mxu0
        %v1656 = vpack.c.bf16 %v1652, %v1648
        %v1657 = vpack.c.bf16 %v1654, %v1650
        %s1658 = scalar_lea.vmem %s6, 16
        %v1659 = vld [vmem:[%s1658] sm:$0xf]
        %v1660 = vld [vmem:[%s1658 + $0x4] sm:$0xf]
        %v1661 = vld [vmem:[%s1658 + $0x8] sm:$0xf]
        %v1662 = vld [vmem:[%s1658 + $0xc] sm:$0xf]
        %s1663 = scalar_lea.vmem %s7, 32
        %v1664 = vld [vmem:[%s1663] sm:$0xff]
        %v1665 = vld [vmem:[%s1663 + $0x8] sm:$0xff]
        %v1666 = vld [vmem:[%s1663 + $0x10] sm:$0xff]
        %v1667 = vld [vmem:[%s1663 + $0x18] sm:$0xff]
        %1669 = vset.pattern.permute.xlu0 0
        %1670 = vperm.xlu0 %1669, %v1664
        %v1671 = vpop.permute.xlu0 %1670
        %1674 = vset.pattern.permute.xlu0 0
        %1675 = vperm.xlu0 %1674, %v1665
        %v1676 = vpop.permute.xlu0 %1675
        %1679 = vset.pattern.permute.xlu0 0
        %1680 = vperm.xlu0 %1679, %v1666
        %v1681 = vpop.permute.xlu0 %1680
        %1684 = vset.pattern.permute.xlu0 0
        %1685 = vperm.xlu0 %1684, %v1667
        %v1686 = vpop.permute.xlu0 %1685
        %v1692 = vunpack.c.l.b16 %v1659
        %v1693 = vunpack.c.l.b16 %v1660
        %v1694 = vunpack.c.l.b16 %v1661
        %v1695 = vunpack.c.l.b16 %v1662
        %v1696 = vpack.c.b16 %v1693, %v1692
        %v1697 = vpack.c.b16 %v1695, %v1694
        %v1699 = vsel %vm1193, %v1696, 0
        %v1702 = vsel %vm1193, %v1697, 0
        %1704 = vmatprep.subr.bf16.mxu0 0
        %1705 = vmatpush1.bf16.msra.mxu0 %v1612
        %1706 = vmatprep.subr.bf16.mxu0 0
        %1707 = vmatpush1.bf16.msra.mxu0 %v1656
        %1708 = vmatprep.subr.bf16.mxu0 0
        %1709 = vmatpush1.bf16.msra.mxu0 %v1657
        %1710 = vmatprep.subr.bf16.mxu0 0
        %1711 = vmatpush1.bf16.msra.mxu0 0
        %1712 = vmatprep.subr.bf16.mxu0 0
        %1713 = vmatpush1.bf16.msra.mxu0 0
        %1714 = vmatprep.subr.bf16.mxu0 0
        %1715 = vmatpush1.bf16.msra.mxu0 0
        %1716 = vmatprep.subr.bf16.mxu0 0
        %1717 = vmatpush1.bf16.msra.mxu0 0
        %1718 = vmatprep.subr.bf16.mxu0 0
        %1719 = vmatpush1.bf16.msra.mxu0 0
        %1720 = vmatprep.subr.bf16.mxu0 0
        %1721 = vmatpush1.bf16.msra.mxu0 0
        %1722 = vmatprep.subr.bf16.mxu0 0
        %1723 = vmatpush1.bf16.msra.mxu0 0
        %1724 = vmatprep.subr.bf16.mxu0 0
        %1725 = vmatpush1.bf16.msra.mxu0 0
        %1726 = vmatprep.subr.bf16.mxu0 0
        %1727 = vmatpush1.bf16.msra.mxu0 0
        %1728 = vmatprep.subr.bf16.mxu0 0
        %1729 = vmatpush1.bf16.msra.mxu0 0
        %1730 = vmatprep.subr.bf16.mxu0 0
        %1731 = vmatpush1.bf16.msra.mxu0 0
        %1732 = vmatprep.subr.bf16.mxu0 0
        %1733 = vmatpush1.bf16.msra.mxu0 0
        %1734 = vmatprep.subr.bf16.mxu0 0
        %1735 = vmatpush1.bf16.msra.mxu0 0
        %1736 = vmatprep.mubr.bf16.mxu0 0
        %1737 = vmatmul.mubr.bf16.gmra.mrb[0].mxu0 %v1699
        %v1738 = vpop.f32.mrb[0].mxu0
        %v1739 = vadd.f32 %v1671, %v1738
        %v1740 = vpop.f32.mrb[0].mxu0
        %v1741 = vpop.f32.mrb[0].mxu0
        %v1742 = vadd.f32 %v1676, %v1741
        %v1743 = vpop.f32.mrb[0].mxu0
        %1744 = vmatprep.mubr.bf16.mxu0 0
        %1745 = vmatmul.mubr.bf16.gmra.mrb[0].mxu0 %v1702
        %v1746 = vpop.f32.mrb[0].mxu0
        %v1747 = vadd.f32 %v1681, %v1746
        %v1748 = vpop.f32.mrb[0].mxu0
        %v1749 = vpop.f32.mrb[0].mxu0
        %v1750 = vadd.f32 %v1686, %v1749
        %v1751 = vpop.f32.mrb[0].mxu0
        %1752 = vdwg.mxu0
        %v1753 = vpack.c.bf16 %v1742, %v1739
        %v1754 = vadd.f32 %v1747, %v1250
        %v1755 = vadd.f32 %v1750, %v1251
        %1756 = vrot.lane.b32.xlu0 %v1754, 4
        %v1757 = vpop.permute.xlu0 %1756
        %1758 = vrot.lane.b32.xlu0 %v1755, 4
        %v1759 = vpop.permute.xlu0 %1758
        %v1760 = vsel %vm662, %v1757, 0.0
        %v1761 = vsel %vm662, %v1759, 0.0
        %1762 = vrot.lane.b32.xlu0 %v1754, 2
        %v1763 = vpop.permute.xlu0 %1762
        %1764 = vrot.lane.b32.xlu0 %v1755, 2
        %v1765 = vpop.permute.xlu0 %1764
        %v1766 = vsel %vm672, %v1763, 0.0
        %v1767 = vsel %vm672, %v1765, 0.0
        %1768 = vrot.lane.b32.xlu0 %v1754, 126
        %v1769 = vpop.permute.xlu0 %1768
        %1770 = vrot.lane.b32.xlu0 %v1755, 126
        %v1771 = vpop.permute.xlu0 %1770
        %v1772 = vsel %vm682, %v1769, 0.0
        %v1773 = vsel %vm682, %v1771, 0.0
        %1774 = vrot.lane.b32.xlu0 %v1754, 124
        %v1775 = vpop.permute.xlu0 %1774
        %1776 = vrot.lane.b32.xlu0 %v1755, 124
        %v1777 = vpop.permute.xlu0 %1776
        %v1778 = vsel %vm692, %v1775, 0.0
        %v1779 = vsel %vm692, %v1777, 0.0
        %v1780 = vpack.c.bf16 %v1761, %v1760
        %v1781 = vpack.c.bf16 %v1767, %v1766
        %v1782 = vpack.c.bf16 %v1755, %v1754
        %v1783 = vpack.c.bf16 %v1773, %v1772
        %v1784 = vpack.c.bf16 %v1779, %v1778
        %s1785 = scalar_lea.vmem %s4, 128
        %v1786 = vld [vmem:[%s1785] sm:$0xf]
        %v1787 = vld [vmem:[%s1785 + $0x4] sm:$0xf]
        %v1788 = vld [vmem:[%s1785 + $0x8] sm:$0xf]
        %v1789 = vld [vmem:[%s1785 + $0xc] sm:$0xf]
        %v1790 = vld [vmem:[%s1785 + $0x10] sm:$0xf]
        %v1791 = vld [vmem:[%s1785 + $0x14] sm:$0xf]
        %v1792 = vld [vmem:[%s1785 + $0x18] sm:$0xf]
        %v1793 = vld [vmem:[%s1785 + $0x1c] sm:$0xf]
        %v1794 = vld [vmem:[%s1785 + $0x20] sm:$0xf]
        %v1795 = vld [vmem:[%s1785 + $0x24] sm:$0xf]
        %v1796 = vld [vmem:[%s1785 + $0x28] sm:$0xf]
        %v1797 = vld [vmem:[%s1785 + $0x2c] sm:$0xf]
        %v1798 = vld [vmem:[%s1785 + $0x30] sm:$0xf]
        %v1799 = vld [vmem:[%s1785 + $0x34] sm:$0xf]
        %v1800 = vld [vmem:[%s1785 + $0x38] sm:$0xf]
        %v1801 = vld [vmem:[%s1785 + $0x3c] sm:$0xf]
        %s1802 = scalar_lea.vmem %s5, 256
        %v1803 = vld [vmem:[%s1802] sm:$0xff]
        %v1804 = vld [vmem:[%s1802 + $0x8] sm:$0xff]
        %v1805 = vld [vmem:[%s1802 + $0x10] sm:$0xff]
        %v1806 = vld [vmem:[%s1802 + $0x18] sm:$0xff]
        %v1807 = vld [vmem:[%s1802 + $0x20] sm:$0xff]
        %v1808 = vld [vmem:[%s1802 + $0x28] sm:$0xff]
        %v1809 = vld [vmem:[%s1802 + $0x30] sm:$0xff]
        %v1810 = vld [vmem:[%s1802 + $0x38] sm:$0xff]
        %v1811 = vld [vmem:[%s1802 + $0x40] sm:$0xff]
        %v1812 = vld [vmem:[%s1802 + $0x48] sm:$0xff]
        %v1813 = vld [vmem:[%s1802 + $0x50] sm:$0xff]
        %v1814 = vld [vmem:[%s1802 + $0x58] sm:$0xff]
        %v1815 = vld [vmem:[%s1802 + $0x60] sm:$0xff]
        %v1816 = vld [vmem:[%s1802 + $0x68] sm:$0xff]
        %v1817 = vld [vmem:[%s1802 + $0x70] sm:$0xff]
        %v1818 = vld [vmem:[%s1802 + $0x78] sm:$0xff]
        %1820 = vset.pattern.permute.xlu0 0
        %1821 = vperm.xlu0 %1820, %v1803
        %v1822 = vpop.permute.xlu0 %1821
        %1825 = vset.pattern.permute.xlu0 0
        %1826 = vperm.xlu0 %1825, %v1804
        %v1827 = vpop.permute.xlu0 %1826
        %1830 = vset.pattern.permute.xlu0 0
        %1831 = vperm.xlu0 %1830, %v1805
        %v1832 = vpop.permute.xlu0 %1831
        %1835 = vset.pattern.permute.xlu0 0
        %1836 = vperm.xlu0 %1835, %v1806
        %v1837 = vpop.permute.xlu0 %1836
        %1840 = vset.pattern.permute.xlu0 0
        %1841 = vperm.xlu0 %1840, %v1807
        %v1842 = vpop.permute.xlu0 %1841
        %1845 = vset.pattern.permute.xlu0 0
        %1846 = vperm.xlu0 %1845, %v1808
        %v1847 = vpop.permute.xlu0 %1846
        %1850 = vset.pattern.permute.xlu0 0
        %1851 = vperm.xlu0 %1850, %v1809
        %v1852 = vpop.permute.xlu0 %1851
        %1855 = vset.pattern.permute.xlu0 0
        %1856 = vperm.xlu0 %1855, %v1810
        %v1857 = vpop.permute.xlu0 %1856
        %1860 = vset.pattern.permute.xlu0 0
        %1861 = vperm.xlu0 %1860, %v1811
        %v1862 = vpop.permute.xlu0 %1861
        %1865 = vset.pattern.permute.xlu0 0
        %1866 = vperm.xlu0 %1865, %v1812
        %v1867 = vpop.permute.xlu0 %1866
        %1870 = vset.pattern.permute.xlu0 0
        %1871 = vperm.xlu0 %1870, %v1813
        %v1872 = vpop.permute.xlu0 %1871
        %1875 = vset.pattern.permute.xlu0 0
        %1876 = vperm.xlu0 %1875, %v1814
        %v1877 = vpop.permute.xlu0 %1876
        %1880 = vset.pattern.permute.xlu0 0
        %1881 = vperm.xlu0 %1880, %v1815
        %v1882 = vpop.permute.xlu0 %1881
        %1885 = vset.pattern.permute.xlu0 0
        %1886 = vperm.xlu0 %1885, %v1816
        %v1887 = vpop.permute.xlu0 %1886
        %1890 = vset.pattern.permute.xlu0 0
        %1891 = vperm.xlu0 %1890, %v1817
        %v1892 = vpop.permute.xlu0 %1891
        %1895 = vset.pattern.permute.xlu0 0
        %1896 = vperm.xlu0 %1895, %v1818
        %v1897 = vpop.permute.xlu0 %1896
        %v1915 = vunpack.c.l.b16 %v1786
        %v1916 = vunpack.c.l.b16 %v1787
        %v1917 = vunpack.c.l.b16 %v1788
        %v1918 = vunpack.c.l.b16 %v1789
        %v1919 = vunpack.c.l.b16 %v1790
        %v1920 = vunpack.c.l.b16 %v1791
        %v1921 = vunpack.c.l.b16 %v1792
        %v1922 = vunpack.c.l.b16 %v1793
        %v1923 = vunpack.c.l.b16 %v1794
        %v1924 = vunpack.c.l.b16 %v1795
        %v1925 = vunpack.c.l.b16 %v1796
        %v1926 = vunpack.c.l.b16 %v1797
        %v1927 = vunpack.c.l.b16 %v1798
        %v1928 = vunpack.c.l.b16 %v1799
        %v1929 = vunpack.c.l.b16 %v1800
        %v1930 = vunpack.c.l.b16 %v1801
        %v1931 = vpack.c.b16 %v1916, %v1915
        %v1932 = vpack.c.b16 %v1918, %v1917
        %v1933 = vpack.c.b16 %v1920, %v1919
        %v1934 = vpack.c.b16 %v1922, %v1921
        %v1935 = vpack.c.b16 %v1924, %v1923
        %v1936 = vpack.c.b16 %v1926, %v1925
        %v1937 = vpack.c.b16 %v1928, %v1927
        %v1938 = vpack.c.b16 %v1930, %v1929
        %1947 = vmatprep.subr.bf16.mxu0 0
        %1948 = vmatpush1.bf16.msra.mxu0 %v1780
        %1949 = vmatprep.subr.bf16.mxu0 0
        %1950 = vmatpush1.bf16.msra.mxu0 %v1781
        %1951 = vmatprep.subr.bf16.mxu0 0
        %1952 = vmatpush1.bf16.msra.mxu0 %v1782
        %1953 = vmatprep.subr.bf16.mxu0 0
        %1954 = vmatpush1.bf16.msra.mxu0 %v1783
        %1955 = vmatprep.subr.bf16.mxu0 0
        %1956 = vmatpush1.bf16.msra.mxu0 %v1784
        %1957 = vmatprep.subr.bf16.mxu0 0
        %1958 = vmatpush1.bf16.msra.mxu0 0
        %1959 = vmatprep.subr.bf16.mxu0 0
        %1960 = vmatpush1.bf16.msra.mxu0 0
        %1961 = vmatprep.subr.bf16.mxu0 0
        %1962 = vmatpush1.bf16.msra.mxu0 0
        %1963 = vmatprep.subr.bf16.mxu0 0
        %1964 = vmatpush1.bf16.msra.mxu0 0
        %1965 = vmatprep.subr.bf16.mxu0 0
        %1966 = vmatpush1.bf16.msra.mxu0 0
        %1967 = vmatprep.subr.bf16.mxu0 0
        %1968 = vmatpush1.bf16.msra.mxu0 0
        %1969 = vmatprep.subr.bf16.mxu0 0
        %1970 = vmatpush1.bf16.msra.mxu0 0
        %1971 = vmatprep.subr.bf16.mxu0 0
        %1972 = vmatpush1.bf16.msra.mxu0 0
        %1973 = vmatprep.subr.bf16.mxu0 0
        %1974 = vmatpush1.bf16.msra.mxu0 0
        %1975 = vmatprep.subr.bf16.mxu0 0
        %1976 = vmatpush1.bf16.msra.mxu0 0
        %1977 = vmatprep.subr.bf16.mxu0 0
        %1978 = vmatpush1.bf16.msra.mxu0 0
        %1979 = vmatprep.mubr.bf16.mxu0 0
        %1980 = vmatmul.mubr.bf16.gmra.mrb[0].mxu0 %v1931
        %v1981 = vpop.f32.mrb[0].mxu0
        %v1982 = vadd.f32 %v1822, %v1981
        %v1983 = vpop.f32.mrb[0].mxu0
        %v1984 = vpop.f32.mrb[0].mxu0
        %v1985 = vadd.f32 %v1827, %v1984
        %v1986 = vpop.f32.mrb[0].mxu0
        %1987 = vmatprep.mubr.bf16.mxu0 0
        %1988 = vmatmul.mubr.bf16.gmra.mrb[0].mxu0 %v1932
        %v1989 = vpop.f32.mrb[0].mxu0
        %v1990 = vadd.f32 %v1832, %v1989
        %v1991 = vpop.f32.mrb[0].mxu0
        %v1992 = vpop.f32.mrb[0].mxu0
        %v1993 = vadd.f32 %v1837, %v1992
        %v1994 = vpop.f32.mrb[0].mxu0
        %1995 = vmatprep.mubr.bf16.mxu0 0
        %1996 = vmatmul.mubr.bf16.gmra.mrb[0].mxu0 %v1933
        %v1997 = vpop.f32.mrb[0].mxu0
        %v1998 = vadd.f32 %v1842, %v1997
        %v1999 = vpop.f32.mrb[0].mxu0
        %v2000 = vpop.f32.mrb[0].mxu0
        %v2001 = vadd.f32 %v1847, %v2000
        %v2002 = vpop.f32.mrb[0].mxu0
        %2003 = vmatprep.mubr.bf16.mxu0 0
        %2004 = vmatmul.mubr.bf16.gmra.mrb[0].mxu0 %v1934
        %v2005 = vpop.f32.mrb[0].mxu0
        %v2006 = vadd.f32 %v1852, %v2005
        %v2007 = vpop.f32.mrb[0].mxu0
        %v2008 = vpop.f32.mrb[0].mxu0
        %v2009 = vadd.f32 %v1857, %v2008
        %v2010 = vpop.f32.mrb[0].mxu0
        %2011 = vmatprep.mubr.bf16.mxu0 0
        %2012 = vmatmul.mubr.bf16.gmra.mrb[0].mxu0 %v1935
        %v2013 = vpop.f32.mrb[0].mxu0
        %v2014 = vadd.f32 %v1862, %v2013
        %v2015 = vpop.f32.mrb[0].mxu0
        %v2016 = vpop.f32.mrb[0].mxu0
        %v2017 = vadd.f32 %v1867, %v2016
        %v2018 = vpop.f32.mrb[0].mxu0
        %2019 = vmatprep.mubr.bf16.mxu0 0
        %2020 = vmatmul.mubr.bf16.gmra.mrb[0].mxu0 %v1936
        %v2021 = vpop.f32.mrb[0].mxu0
        %v2022 = vadd.f32 %v1872, %v2021
        %v2023 = vpop.f32.mrb[0].mxu0
        %v2024 = vpop.f32.mrb[0].mxu0
        %v2025 = vadd.f32 %v1877, %v2024
        %v2026 = vpop.f32.mrb[0].mxu0
        %2027 = vmatprep.mubr.bf16.mxu0 0
        %2028 = vmatmul.mubr.bf16.gmra.mrb[0].mxu0 %v1937
        %v2029 = vpop.f32.mrb[0].mxu0
        %v2030 = vadd.f32 %v1882, %v2029
        %v2031 = vpop.f32.mrb[0].mxu0
        %v2032 = vpop.f32.mrb[0].mxu0
        %v2033 = vadd.f32 %v1887, %v2032
        %v2034 = vpop.f32.mrb[0].mxu0
        %2035 = vmatprep.mubr.bf16.mxu0 0
        %2036 = vmatmul.mubr.bf16.gmra.mrb[0].mxu0 %v1938
        %v2037 = vpop.f32.mrb[0].mxu0
        %v2038 = vadd.f32 %v1892, %v2037
        %v2039 = vpop.f32.mrb[0].mxu0
        %v2040 = vpop.f32.mrb[0].mxu0
        %v2041 = vadd.f32 %v1897, %v2040
        %v2042 = vpop.f32.mrb[0].mxu0
        %2043 = vdwg.mxu0
        %v2044 = vtanh.pop %v1982
        %v2045 = vtanh.pop %v1985
        %v2046 = vtanh.pop %v1990
        %v2047 = vtanh.pop %v1993
        %v2048 = vtanh.pop %v1998
        %v2049 = vtanh.pop %v2001
        %v2050 = vtanh.pop %v2006
        %v2051 = vtanh.pop %v2009
        %v2052 = vxor.u32 %v2014, 2147483648
        %v2053 = vxor.u32 %v2017, 2147483648
        %v2054 = vxor.u32 %v2022, 2147483648
        %v2055 = vxor.u32 %v2025, 2147483648
        %v2056 = vxor.u32 %v2030, 2147483648
        %v2057 = vxor.u32 %v2033, 2147483648
        %v2058 = vxor.u32 %v2038, 2147483648
        %v2059 = vxor.u32 %v2041, 2147483648
        %v2060 = vmul.f32 %v2052, 1.442695
        %v2061 = vpow.pop %v2060
        %v2062 = vmul.f32 %v2053, 1.442695
        %v2063 = vpow.pop %v2062
        %v2064 = vmul.f32 %v2054, 1.442695
        %v2065 = vpow.pop %v2064
        %v2066 = vmul.f32 %v2055, 1.442695
        %v2067 = vpow.pop %v2066
        %v2068 = vmul.f32 %v2056, 1.442695
        %v2069 = vpow.pop %v2068
        %v2070 = vmul.f32 %v2057, 1.442695
        %v2071 = vpow.pop %v2070
        %v2072 = vmul.f32 %v2058, 1.442695
        %v2073 = vpow.pop %v2072
        %v2074 = vmul.f32 %v2059, 1.442695
        %v2075 = vpow.pop %v2074
        %v2076 = vadd.f32 %v2061, 1.0
        %v2077 = vadd.f32 %v2063, 1.0
        %v2078 = vadd.f32 %v2065, 1.0
        %v2079 = vadd.f32 %v2067, 1.0
        %v2080 = vadd.f32 %v2069, 1.0
        %v2081 = vadd.f32 %v2071, 1.0
        %v2082 = vadd.f32 %v2073, 1.0
        %v2083 = vadd.f32 %v2075, 1.0
        %v2084 = vrcp.pop %v2076
        %v2085 = vmul.f32 1.0, %v2084
        %v2086 = vrcp.pop %v2077
        %v2087 = vmul.f32 1.0, %v2086
        %v2088 = vrcp.pop %v2078
        %v2089 = vmul.f32 1.0, %v2088
        %v2090 = vrcp.pop %v2079
        %v2091 = vmul.f32 1.0, %v2090
        %v2092 = vrcp.pop %v2080
        %v2093 = vmul.f32 1.0, %v2092
        %v2094 = vrcp.pop %v2081
        %v2095 = vmul.f32 1.0, %v2094
        %v2096 = vrcp.pop %v2082
        %v2097 = vmul.f32 1.0, %v2096
        %v2098 = vrcp.pop %v2083
        %v2099 = vmul.f32 1.0, %v2098
        %v2100 = vmul.f32 %v2044, %v2085
        %v2101 = vmul.f32 %v2045, %v2087
        %v2102 = vmul.f32 %v2046, %v2089
        %v2103 = vmul.f32 %v2047, %v2091
        %v2104 = vmul.f32 %v2048, %v2093
        %v2105 = vmul.f32 %v2049, %v2095
        %v2106 = vmul.f32 %v2050, %v2097
        %v2107 = vmul.f32 %v2051, %v2099
        %v2108 = vadd.f32 %v2100, %v2102
        %v2109 = vadd.f32 %v2101, %v2103
        %v2110 = vadd.f32 %v2108, %v2104
        %v2111 = vadd.f32 %v2109, %v2105
        %v2112 = vadd.f32 %v2110, %v2106
        %v2113 = vadd.f32 %v2111, %v2107
        %v2114 = vmul.f32 %v2112, 0.25
        %v2115 = vmul.f32 %v2113, 0.25
        %v2116 = vpack.c.bf16 %v2115, %v2114
        %2117 = vmatprep.subr.bf16.mxu0 %v1079
        %2118 = vmatpush1.bf16.msra.mxu0 %v1078
        %2119 = vmatprep.subr.bf16.mxu0 %v1081
        %2120 = vmatpush1.bf16.msra.mxu0 %v1080
        %2121 = vmatprep.subr.bf16.mxu0 %v1083
        %2122 = vmatpush1.bf16.msra.mxu0 %v1082
        %2123 = vmatprep.subr.bf16.mxu0 %v1085
        %2124 = vmatpush1.bf16.msra.mxu0 %v1084
        %2125 = vmatprep.subr.bf16.mxu0 %v1087
        %2126 = vmatpush1.bf16.msra.mxu0 %v1086
        %2127 = vmatprep.subr.bf16.mxu0 %v1089
        %2128 = vmatpush1.bf16.msra.mxu0 %v1088
        %2129 = vmatprep.subr.bf16.mxu0 %v1091
        %2130 = vmatpush1.bf16.msra.mxu0 %v1090
        %2131 = vmatprep.subr.bf16.mxu0 %v1093
        %2132 = vmatpush1.bf16.msra.mxu0 %v1092
        %2133 = vmatprep.subr.bf16.mxu0 0
        %2134 = vmatpush1.bf16.msra.mxu0 0
        %2135 = vmatprep.subr.bf16.mxu0 0
        %2136 = vmatpush1.bf16.msra.mxu0 0
        %2137 = vmatprep.subr.bf16.mxu0 0
        %2138 = vmatpush1.bf16.msra.mxu0 0
        %2139 = vmatprep.subr.bf16.mxu0 0
        %2140 = vmatpush1.bf16.msra.mxu0 0
        %2141 = vmatprep.subr.bf16.mxu0 0
        %2142 = vmatpush1.bf16.msra.mxu0 0
        %2143 = vmatprep.subr.bf16.mxu0 0
        %2144 = vmatpush1.bf16.msra.mxu0 0
        %2145 = vmatprep.subr.bf16.mxu0 0
        %2146 = vmatpush1.bf16.msra.mxu0 0
        %2147 = vmatprep.subr.bf16.mxu0 0
        %2148 = vmatpush1.bf16.msra.mxu0 0
        %2149 = vmatprep.mubr.bf16.mxu0 0
        %2150 = vmatmul.mubr.bf16.gmra.mrb[0].mxu0 %v2116
        %v2151 = vpop.f32.mrb[0].mxu0
        %v2152 = vadd.f32 0.0, %v2151
        %v2153 = vpop.f32.mrb[0].mxu0
        %v2154 = vadd.f32 0.0, %v2153
        %v2155 = vpop.f32.mrb[0].mxu0
        %v2156 = vadd.f32 0.0, %v2155
        %v2157 = vpop.f32.mrb[0].mxu0
        %v2158 = vadd.f32 0.0, %v2157
        %2159 = vdwg.mxu0
        %v2160 = vpack.c.bf16 %v2156, %v2152
        %v2161 = vpack.c.bf16 %v2158, %v2154
        %s2162 = scalar_lea.vmem %s6, 32
        %v2163 = vld [vmem:[%s2162] sm:$0xf]
        %v2164 = vld [vmem:[%s2162 + $0x4] sm:$0xf]
        %v2165 = vld [vmem:[%s2162 + $0x8] sm:$0xf]
        %v2166 = vld [vmem:[%s2162 + $0xc] sm:$0xf]
        %s2167 = scalar_lea.vmem %s7, 64
        %v2168 = vld [vmem:[%s2167] sm:$0xff]
        %v2169 = vld [vmem:[%s2167 + $0x8] sm:$0xff]
        %v2170 = vld [vmem:[%s2167 + $0x10] sm:$0xff]
        %v2171 = vld [vmem:[%s2167 + $0x18] sm:$0xff]
        %2173 = vset.pattern.permute.xlu0 0
        %2174 = vperm.xlu0 %2173, %v2168
        %v2175 = vpop.permute.xlu0 %2174
        %2178 = vset.pattern.permute.xlu0 0
        %2179 = vperm.xlu0 %2178, %v2169
        %v2180 = vpop.permute.xlu0 %2179
        %2183 = vset.pattern.permute.xlu0 0
        %2184 = vperm.xlu0 %2183, %v2170
        %v2185 = vpop.permute.xlu0 %2184
        %2187 = vset.pattern.permute.xlu0 0
        %2188 = vperm.xlu0 %2187, %v2171
        %v2189 = vpop.permute.xlu0 %2188
        %v2194 = vunpack.c.l.b16 %v2163
        %v2195 = vunpack.c.l.b16 %v2164
        %v2196 = vunpack.c.l.b16 %v2165
        %v2197 = vunpack.c.l.b16 %v2166
        %v2198 = vpack.c.b16 %v2195, %v2194
        %v2199 = vpack.c.b16 %v2197, %v2196
        %v2201 = vsel %vm1193, %v2198, 0
        %v2204 = vsel %vm1193, %v2199, 0
        %2206 = vmatprep.subr.bf16.mxu0 0
        %2207 = vmatpush1.bf16.msra.mxu0 %v2116
        %2208 = vmatprep.subr.bf16.mxu0 0
        %2209 = vmatpush1.bf16.msra.mxu0 %v2160
        %2210 = vmatprep.subr.bf16.mxu0 0
        %2211 = vmatpush1.bf16.msra.mxu0 %v2161
        %2212 = vmatprep.subr.bf16.mxu0 0
        %2213 = vmatpush1.bf16.msra.mxu0 0
        %2214 = vmatprep.subr.bf16.mxu0 0
        %2215 = vmatpush1.bf16.msra.mxu0 0
        %2216 = vmatprep.subr.bf16.mxu0 0
        %2217 = vmatpush1.bf16.msra.mxu0 0
        %2218 = vmatprep.subr.bf16.mxu0 0
        %2219 = vmatpush1.bf16.msra.mxu0 0
        %2220 = vmatprep.subr.bf16.mxu0 0
        %2221 = vmatpush1.bf16.msra.mxu0 0
        %2222 = vmatprep.subr.bf16.mxu0 0
        %2223 = vmatpush1.bf16.msra.mxu0 0
        %2224 = vmatprep.subr.bf16.mxu0 0
        %2225 = vmatpush1.bf16.msra.mxu0 0
        %2226 = vmatprep.subr.bf16.mxu0 0
        %2227 = vmatpush1.bf16.msra.mxu0 0
        %2228 = vmatprep.subr.bf16.mxu0 0
        %2229 = vmatpush1.bf16.msra.mxu0 0
        %2230 = vmatprep.subr.bf16.mxu0 0
        %2231 = vmatpush1.bf16.msra.mxu0 0
        %2232 = vmatprep.subr.bf16.mxu0 0
        %2233 = vmatpush1.bf16.msra.mxu0 0
        %2234 = vmatprep.subr.bf16.mxu0 0
        %2235 = vmatpush1.bf16.msra.mxu0 0
        %2236 = vmatprep.subr.bf16.mxu0 0
        %2237 = vmatpush1.bf16.msra.mxu0 0
        %2238 = vmatprep.mubr.bf16.mxu0 0
        %2239 = vmatmul.mubr.bf16.gmra.mrb[0].mxu0 %v2201
        %v2240 = vpop.f32.mrb[0].mxu0
        %v2241 = vadd.f32 %v2175, %v2240
        %v2242 = vpop.f32.mrb[0].mxu0
        %v2243 = vpop.f32.mrb[0].mxu0
        %v2244 = vadd.f32 %v2180, %v2243
        %v2245 = vpop.f32.mrb[0].mxu0
        %2246 = vmatprep.mubr.bf16.mxu0 0
        %2247 = vmatmul.mubr.bf16.gmra.mrb[0].mxu0 %v2204
        %v2248 = vpop.f32.mrb[0].mxu0
        %v2249 = vpop.f32.mrb[0].mxu0
        %v2250 = vpop.f32.mrb[0].mxu0
        %v2251 = vpop.f32.mrb[0].mxu0
        %2252 = vdwg.mxu0
        %v2253 = vpack.c.bf16 %v2244, %v2241
        %v2254 = vld [vmem:[%s8] sm:$0xf]
        %v2255 = vld [vmem:[%s8 + $0x4] sm:$0xf]
        %v2256 = vld [vmem:[%s9] sm:$0xff]
        %v2257 = vld [vmem:[%s9 + $0x8] sm:$0xff]
        %2259 = vset.pattern.permute.xlu0 0
        %2260 = vperm.xlu0 %2259, %v2256
        %v2261 = vpop.permute.xlu0 %2260
        %2264 = vset.pattern.permute.xlu0 0
        %2265 = vperm.xlu0 %2264, %v2257
        %v2266 = vpop.permute.xlu0 %2265
        %v2270 = vunpack.c.l.b16 %v2254
        %v2271 = vunpack.c.l.b16 %v2255
        %v2272 = vpack.c.b16 %v2271, %v2270
        %v2274 = vsel %vm1193, %v2272, 0
        %2276 = vmatprep.subr.bf16.mxu0 0
        %2277 = vmatpush1.bf16.msra.mxu0 %v1249
        %2278 = vmatprep.subr.bf16.mxu0 0
        %2279 = vmatpush1.bf16.msra.mxu0 %v1753
        %2280 = vmatprep.subr.bf16.mxu0 0
        %2281 = vmatpush1.bf16.msra.mxu0 %v2253
        %2282 = vmatprep.subr.bf16.mxu0 0
        %2283 = vmatpush1.bf16.msra.mxu0 0
        %2284 = vmatprep.subr.bf16.mxu0 0
        %2285 = vmatpush1.bf16.msra.mxu0 0
        %2286 = vmatprep.subr.bf16.mxu0 0
        %2287 = vmatpush1.bf16.msra.mxu0 0
        %2288 = vmatprep.subr.bf16.mxu0 0
        %2289 = vmatpush1.bf16.msra.mxu0 0
        %2290 = vmatprep.subr.bf16.mxu0 0
        %2291 = vmatpush1.bf16.msra.mxu0 0
        %2292 = vmatprep.subr.bf16.mxu0 0
        %2293 = vmatpush1.bf16.msra.mxu0 0
        %2294 = vmatprep.subr.bf16.mxu0 0
        %2295 = vmatpush1.bf16.msra.mxu0 0
        %2296 = vmatprep.subr.bf16.mxu0 0
        %2297 = vmatpush1.bf16.msra.mxu0 0
        %2298 = vmatprep.subr.bf16.mxu0 0
        %2299 = vmatpush1.bf16.msra.mxu0 0
        %2300 = vmatprep.subr.bf16.mxu0 0
        %2301 = vmatpush1.bf16.msra.mxu0 0
        %2302 = vmatprep.subr.bf16.mxu0 0
        %2303 = vmatpush1.bf16.msra.mxu0 0
        %2304 = vmatprep.subr.bf16.mxu0 0
        %2305 = vmatpush1.bf16.msra.mxu0 0
        %2306 = vmatprep.subr.bf16.mxu0 0
        %2307 = vmatpush1.bf16.msra.mxu0 0
        %2308 = vmatprep.mubr.bf16.mxu0 0
        %2309 = vmatmul.mubr.bf16.gmra.mrb[0].mxu0 %v2274
        %v2310 = vpop.f32.mrb[0].mxu0
        %v2311 = vadd.f32 %v2261, %v2310
        %v2312 = vpop.f32.mrb[0].mxu0
        %v2313 = vpop.f32.mrb[0].mxu0
        %v2314 = vadd.f32 %v2266, %v2313
        %v2315 = vpop.f32.mrb[0].mxu0
        %2316 = vdwg.mxu0
        %v2317 = vmax.f32 %v2311, 0.0
        %v2318 = vmax.f32 %v2314, 0.0
        %v2319 = vld [vmem:[%s10] sm:$0xf]
        %v2320 = vld [vmem:[%s10 + $0x4] sm:$0xf]
        %v2321 = vpack.c.bf16 %v2318, %v2317
        %v2322 = vld [vmem:[%s11] sm:$0xff]
        %v2323 = vld [vmem:[%s11 + $0x8] sm:$0xff]
        %2325 = vset.pattern.permute.xlu0 0
        %2326 = vperm.xlu0 %2325, %v2322
        %v2327 = vpop.permute.xlu0 %2326
        %2330 = vset.pattern.permute.xlu0 0
        %2331 = vperm.xlu0 %2330, %v2323
        %v2332 = vpop.permute.xlu0 %2331
        %v2336 = vunpack.c.l.b16 %v2319
        %v2337 = vunpack.c.l.b16 %v2320
        %v2338 = vpack.c.b16 %v2337, %v2336
        %vm2339 = vcmask 130048
        %v2341 = vsel %vm2339, %v2338, 0
        %2343 = vmatprep.subr.bf16.mxu0 0
        %2344 = vmatpush1.bf16.msra.mxu0 %v2321
        %2345 = vmatprep.subr.bf16.mxu0 0
        %2346 = vmatpush1.bf16.msra.mxu0 0
        %2347 = vmatprep.subr.bf16.mxu0 0
        %2348 = vmatpush1.bf16.msra.mxu0 0
        %2349 = vmatprep.subr.bf16.mxu0 0
        %2350 = vmatpush1.bf16.msra.mxu0 0
        %2351 = vmatprep.subr.bf16.mxu0 0
        %2352 = vmatpush1.bf16.msra.mxu0 0
        %2353 = vmatprep.subr.bf16.mxu0 0
        %2354 = vmatpush1.bf16.msra.mxu0 0
        %2355 = vmatprep.subr.bf16.mxu0 0
        %2356 = vmatpush1.bf16.msra.mxu0 0
        %2357 = vmatprep.subr.bf16.mxu0 0
        %2358 = vmatpush1.bf16.msra.mxu0 0
        %2359 = vmatprep.subr.bf16.mxu0 0
        %2360 = vmatpush1.bf16.msra.mxu0 0
        %2361 = vmatprep.subr.bf16.mxu0 0
        %2362 = vmatpush1.bf16.msra.mxu0 0
        %2363 = vmatprep.subr.bf16.mxu0 0
        %2364 = vmatpush1.bf16.msra.mxu0 0
        %2365 = vmatprep.subr.bf16.mxu0 0
        %2366 = vmatpush1.bf16.msra.mxu0 0
        %2367 = vmatprep.subr.bf16.mxu0 0
        %2368 = vmatpush1.bf16.msra.mxu0 0
        %2369 = vmatprep.subr.bf16.mxu0 0
        %2370 = vmatpush1.bf16.msra.mxu0 0
        %2371 = vmatprep.subr.bf16.mxu0 0
        %2372 = vmatpush1.bf16.msra.mxu0 0
        %2373 = vmatprep.subr.bf16.mxu0 0
        %2374 = vmatpush1.bf16.msra.mxu0 0
        %2375 = vmatprep.mubr.bf16.mxu0 0
        %2376 = vmatmul.mubr.bf16.gmra.mrb[0].mxu0 %v2341
        %v2377 = vpop.f32.mrb[0].mxu0
        %v2378 = vadd.f32 %v2327, %v2377
        %v2379 = vpop.f32.mrb[0].mxu0
        %v2380 = vpop.f32.mrb[0].mxu0
        %v2381 = vadd.f32 %v2332, %v2380
        %v2382 = vpop.f32.mrb[0].mxu0
        %2383 = vdwg.mxu0
        %v2384 = vmax.f32 %v2378, 0.0
        %v2385 = vmax.f32 %v2381, 0.0
        %v2386 = vld [vmem:[%s12] sm:$0xf]
        %v2387 = vld [vmem:[%s12 + $0x4] sm:$0xf]
        %v2388 = vpack.c.bf16 %v2385, %v2384
        %v2389 = vld [vmem:[%s13] sm:$0xff]
        %v2390 = vld [vmem:[%s13 + $0x8] sm:$0xff]
        %2392 = vset.pattern.permute.xlu0 0
        %2393 = vperm.xlu0 %2392, %v2389
        %v2394 = vpop.permute.xlu0 %2393
        %2397 = vset.pattern.permute.xlu0 0
        %2398 = vperm.xlu0 %2397, %v2390
        %v2399 = vpop.permute.xlu0 %2398
        %v2403 = vunpack.c.l.b16 %v2386
        %v2404 = vunpack.c.l.b16 %v2387
        %v2405 = vpack.c.b16 %v2404, %v2403
        %v2407 = vsel %vm2339, %v2405, 0
        %2409 = vmatprep.subr.bf16.mxu0 0
        %2410 = vmatpush1.bf16.msra.mxu0 %v2388
        %2411 = vmatprep.subr.bf16.mxu0 0
        %2412 = vmatpush1.bf16.msra.mxu0 0
        %2413 = vmatprep.subr.bf16.mxu0 0
        %2414 = vmatpush1.bf16.msra.mxu0 0
        %2415 = vmatprep.subr.bf16.mxu0 0
        %2416 = vmatpush1.bf16.msra.mxu0 0
        %2417 = vmatprep.subr.bf16.mxu0 0
        %2418 = vmatpush1.bf16.msra.mxu0 0
        %2419 = vmatprep.subr.bf16.mxu0 0
        %2420 = vmatpush1.bf16.msra.mxu0 0
        %2421 = vmatprep.subr.bf16.mxu0 0
        %2422 = vmatpush1.bf16.msra.mxu0 0
        %2423 = vmatprep.subr.bf16.mxu0 0
        %2424 = vmatpush1.bf16.msra.mxu0 0
        %2425 = vmatprep.subr.bf16.mxu0 0
        %2426 = vmatpush1.bf16.msra.mxu0 0
        %2427 = vmatprep.subr.bf16.mxu0 0
        %2428 = vmatpush1.bf16.msra.mxu0 0
        %2429 = vmatprep.subr.bf16.mxu0 0
        %2430 = vmatpush1.bf16.msra.mxu0 0
        %2431 = vmatprep.subr.bf16.mxu0 0
        %2432 = vmatpush1.bf16.msra.mxu0 0
        %2433 = vmatprep.subr.bf16.mxu0 0
        %2434 = vmatpush1.bf16.msra.mxu0 0
        %2435 = vmatprep.subr.bf16.mxu0 0
        %2436 = vmatpush1.bf16.msra.mxu0 0
        %2437 = vmatprep.subr.bf16.mxu0 0
        %2438 = vmatpush1.bf16.msra.mxu0 0
        %2439 = vmatprep.subr.bf16.mxu0 0
        %2440 = vmatpush1.bf16.msra.mxu0 0
        %2441 = vmatprep.mubr.bf16.mxu0 0
        %2442 = vmatmul.mubr.bf16.gmra.mrb[0].mxu0 %v2407
        %v2443 = vpop.f32.mrb[0].mxu0
        %v2444 = vadd.f32 %v2394, %v2443
        %v2445 = vpop.f32.mrb[0].mxu0
        %v2446 = vpop.f32.mrb[0].mxu0
        %v2447 = vadd.f32 %v2399, %v2446
        %v2448 = vpop.f32.mrb[0].mxu0
        %2449 = vdwg.mxu0
        %v2450 = vld [vmem:[%s14] sm:$0x1]
        %v2451 = vpack.c.bf16 %v2447, %v2444
        %v2452 = vld [vmem:[%s15] sm:$0x3]
        %2454 = vset.pattern.permute.xlu0 0
        %2455 = vperm.xlu0 %2454, %v2452
        %v2456 = vpop.permute.xlu0 %2455
        %v2459 = vsel %vm2339, %v2450, 0
        %2461 = vmatprep.subr.bf16.mxu0 0
        %2462 = vmatpush1.bf16.msra.mxu0 %v2451
        %2463 = vmatprep.subr.bf16.mxu0 0
        %2464 = vmatpush1.bf16.msra.mxu0 0
        %2465 = vmatprep.subr.bf16.mxu0 0
        %2466 = vmatpush1.bf16.msra.mxu0 0
        %2467 = vmatprep.subr.bf16.mxu0 0
        %2468 = vmatpush1.bf16.msra.mxu0 0
        %2469 = vmatprep.subr.bf16.mxu0 0
        %2470 = vmatpush1.bf16.msra.mxu0 0
        %2471 = vmatprep.subr.bf16.mxu0 0
        %2472 = vmatpush1.bf16.msra.mxu0 0
        %2473 = vmatprep.subr.bf16.mxu0 0
        %2474 = vmatpush1.bf16.msra.mxu0 0
        %2475 = vmatprep.subr.bf16.mxu0 0
        %2476 = vmatpush1.bf16.msra.mxu0 0
        %2477 = vmatprep.subr.bf16.mxu0 0
        %2478 = vmatpush1.bf16.msra.mxu0 0
        %2479 = vmatprep.subr.bf16.mxu0 0
        %2480 = vmatpush1.bf16.msra.mxu0 0
        %2481 = vmatprep.subr.bf16.mxu0 0
        %2482 = vmatpush1.bf16.msra.mxu0 0
        %2483 = vmatprep.subr.bf16.mxu0 0
        %2484 = vmatpush1.bf16.msra.mxu0 0
        %2485 = vmatprep.subr.bf16.mxu0 0
        %2486 = vmatpush1.bf16.msra.mxu0 0
        %2487 = vmatprep.subr.bf16.mxu0 0
        %2488 = vmatpush1.bf16.msra.mxu0 0
        %2489 = vmatprep.subr.bf16.mxu0 0
        %2490 = vmatpush1.bf16.msra.mxu0 0
        %2491 = vmatprep.subr.bf16.mxu0 0
        %2492 = vmatpush1.bf16.msra.mxu0 0
        %2493 = vmatprep.mubr.bf16.mxu0 0
        %2494 = vmatmul.mubr.bf16.gmra.mrb[0].mxu0 %v2459
        %v2495 = vpop.f32.mrb[0].mxu0
        %v2496 = vadd.f32 %v2456, %v2495
        %v2497 = vpop.f32.mrb[0].mxu0
        %v2498 = vpop.f32.mrb[0].mxu0
        %v2499 = vpop.f32.mrb[0].mxu0
        %2500 = vdwg.mxu0
        %v2501 = vmax.f32 %v2496, 0.0
        %vm2502 = vcmp.ne.f32.partialorder %v2496, %v2496
        %v2503 = vadd.f32 %v2496, 0.0
        %v2504 = vand.u32 2147483647, %v2496
        %v2505 = vsub.f32 0.0, %v2504
        %v2506 = vmul.f32 %v2505, 1.442695
        %v2507 = vpow.pop %v2506
        %v2508 = vadd.f32 %v2507, 1.0
        %v2509 = vlog2.pop %v2508
        %v2510 = vmul.f32 %v2509, 0.6931472
        %v2511 = vmul.f32 -0.5, %v2507
        %v2512 = vadd.f32 %v2511, 1.0
        %v2513 = vmul.f32 %v2512, %v2507
        %v2514 = vand.u32 2147483647, %v2507
        %vm2515 = vcmp.lt.f32.partialorder %v2514, 0.0004427343
        %v2516 = vsel %vm2515, %v2513, %v2510
        %v2517 = vadd.f32 %v2501, %v2516
        %v2518 = vsel %vm2502, %v2503, %v2517
        %vm2519 = vcmask 1040384
        %v2520 = vsel %vm2519, %v2496, %v2518
        %2521 = vst [vmem:[%s561] sm:$0x3] %v2520
        %p2522 = scmp.lt.s32.totalorder %s27, 1
        %s2523 = scalar_select %p2522, %s27, 1
        %s2524 = smul.addr %s2523, 2
        %s2525 = scalar_lea.vmem %s16, %s2524
        // Predicated region
        $region123: #{forward.1} parent=117 // pred_check
          %p2526 = pneg %p386
        $region124: #{forward.1} parent=117 // pred_check_branch
          %2528 = sbr.rel (%p2526) target = $region126
        $region125: #{forward.1} parent=117 // pred_region
          _
        $region126: #{forward.1} parent=117 // pred_fallthru
          _
      $region118: #{forward.1} parent=5 // pred_fallthru
        _
      %p2529 = scmp.le.s32.totalorder 2, %s22
      // Predicated region
      $region127: #{forward.1} parent=5 // pred_check
        %p2530 = pneg %p2529
      $region128: #{forward.1} parent=5 // pred_check_branch
        %2532 = sbr.rel (%p2530) target = $region130
      $region129: #{forward.1} parent=5 // pred_region
        %s2533 = ssub.s32 %s22, 2
        // Predicated region
        $region131: #{forward.1} parent=129 // pred_check
          %p2534 = pneg %p392
        $region132: #{forward.1} parent=129 // pred_check_branch
          %2536 = sbr.rel (%p2534) target = $region134
        $region133: #{forward.1} parent=129 // pred_region
          %p2537 = scmp.lt.s32.totalorder %s28, 1
          %s2538 = scalar_select %p2537, %s28, 1
          %s2539 = smul.addr %s2538, 2
          %s2540 = scalar_lea.vmem %s16, %s2539
        $region134: #{forward.1} parent=129 // pred_fallthru
          _
      $region130: #{forward.1} parent=5 // pred_fallthru
        _
    $region6: #{forward.1} parent=1 // loop_footer
      %s26 = sadd.s32 1, %s22
    $region7: #{forward.1} parent=1 // loop_footer_branch
      %21 = sbr.rel target = $region3
    $region8: #{forward.1} parent=1 // loop_exit
      _

</llo_original>
